<compile_context>
chip_gen: v6e
topology: v6e:2x2x1
jax: 0.10.0
libtpu: 0.0.40
codegen_flags: <defaults>
</compile_context>

<pallas_src>
import functools

import jax
import jax.numpy as jnp
from jax.experimental import pallas as pl
from jax.experimental.pallas import tpu as pltpu

LANE = 128


def _round_up(x, m):
    return ((x + m - 1) // m) * m


# ----------------------------------------------------------------------------
# Pallas kernel: gate-fused LSTM scan + attention + Conv1d branches + FC
# ----------------------------------------------------------------------------
def _textcnn_attn_kernel(filter_sizes, h_pad, f_pad,
                         emb_ref, wih_ref, whh_ref, b_ref,
                         attn_w_ref, attn_b_ref, *rest):
    # rest = [conv_w_0, conv_b_0, ..., conv_w_n, conv_b_n, fc_w, fc_b, out_ref]
    n_fs = len(filter_sizes)
    conv_refs = rest[:2 * n_fs]
    fc_w_ref, fc_b_ref, out_ref = rest[2 * n_fs:]

    B, S, E = emb_ref.shape
    H = h_pad                                   # lane-padded hidden size

    emb = emb_ref[...]                          # (B, S, E)
    emb2d = emb.reshape(B * S, E)

    # ---- LSTM (gate-fused) -------------------------------------------------
    # After permute(1,0,2) + batch_first=True the LSTM treats S as its batch
    # and the original batch axis B as time; recurrent state is (S, H).
    # Input projection for all timesteps/gates hoisted out of the recurrence.
    xp = (jnp.dot(emb2d, wih_ref[...], preferred_element_type=jnp.float32)
          + b_ref[...]).reshape(B, S, 4 * H)    # packed gates: i, f, o, g
    whh = whh_ref[...]                          # (H, 4H)

    h = jnp.zeros((S, H), jnp.float32)
    c = jnp.zeros((S, H), jnp.float32)
    hs = []
    # TODO(synk): for large B switch to lax.fori_loop carrying (h, c) and a
    # lane-dense VMEM scratch for lstm_out instead of this static unroll.
    for t in range(B):                          # B is tiny; static unroll
        gates = xp[t] + jnp.dot(h, whh, preferred_element_type=jnp.float32)
        sig = jax.nn.sigmoid(gates[:, :3 * H])  # contiguous (S, 3H): i, f, o
        g_g = jnp.tanh(gates[:, 3 * H:])        # (S, H)
        i_g = sig[:, :H]
        f_g = sig[:, H:2 * H]
        o_g = sig[:, 2 * H:3 * H]
        c = f_g * c + i_g * g_g
        h = o_g * jnp.tanh(c)
        hs.append(h)

    # lstm_out[t, s, :] == torch lstm_output[s, t, :]
    lstm_out = jnp.stack(hs, axis=0)            # (B, S, H), stays in vregs

    # ---- Attention (softmax over S == torch dim 0) ---------------------------
    # VPU multiply + lane reduce instead of an N=1 MXU matmul; padded H lanes
    # of attn_w are exact zeros so they contribute nothing.
    attn_row = attn_w_ref[...]                  # (1, H)
    logits = (jnp.sum(lstm_out * attn_row[None, :, :], axis=-1)
              + attn_b_ref[...])                # (B, S); (1,1) bias broadcasts
    m = jnp.max(logits, axis=1, keepdims=True)
    e = jnp.exp(logits - m)
    inv = pl.reciprocal(jnp.sum(e, axis=1, keepdims=True), approx=True)
    w = e * inv                                 # (B, S)
    # TODO(synk): at large S use an MXU einsum('bs,bsh->bh', w, lstm_out).
    context = jnp.sum(w[:, :, None] * lstm_out, axis=1)    # (B, H)

    # ---- Conv1d branches: per-tap matmul accumulation + ReLU + max-pool -----
    feats = []
    for fi, fs in enumerate(filter_sizes):
        cw_ref = conv_refs[2 * fi]              # (fs, E, F_pad)
        cb = conv_refs[2 * fi + 1][...]         # (1, F_pad)
        P = S - fs + 1
        acc = jnp.dot(emb[:, 0:P, :].reshape(B * P, E), cw_ref[0],
                      preferred_element_type=jnp.float32)
        for k in range(1, fs):
            acc = acc + jnp.dot(emb[:, k:k + P, :].reshape(B * P, E),
                                cw_ref[k], preferred_element_type=jnp.float32)
        z = jnp.maximum(acc + cb, 0.0).reshape(B, P, f_pad)
        feats.append(jnp.max(z, axis=1))        # (B, F_pad)

    # ---- concat + dropout + fc -----------------------------------------------
    # TODO(synk): dropout is applied as identity (inference/eval mode).
    feats.append(context)
    cat = jnp.concatenate(feats, axis=-1)       # (B, n_fs*F_pad + H_pad)
    out_ref[...] = (jnp.dot(cat, fc_w_ref[...],
                            preferred_element_type=jnp.float32)
                    + fc_b_ref[...])            # (B, O_pad), lane-dense store


# ----------------------------------------------------------------------------
# Wrapper: re-layout + zero-pad parameters (free XLA plumbing), launch kernel.
# ----------------------------------------------------------------------------
def _prep_params(params, *, filter_sizes, num_filters, hidden_size, output_dim):
    f32 = jnp.float32
    H, F, O = hidden_size, num_filters, output_dim
    Hp, Fp, Op = _round_up(H, LANE), _round_up(F, LANE), _round_up(O, LANE)
    n_fs = len(filter_sizes)

    # torch LSTM layout: (4H, in), gate order (i, f, g, o); repack transposed
    # into (in_pad, 4*Hp) columns ordered (i, f, o, g), zero-padded.
    order = (0, 1, 3, 2)

    def pack_gates(wt, in_dim, in_pad):
        wg = wt.reshape(4, H, in_dim)
        out = jnp.zeros((in_pad, 4 * Hp), f32)
        for j, g in enumerate(order):
            out = out.at[:in_dim, j * Hp:j * Hp + H].set(wg[g].T)
        return out

    E = params["w_ih"].shape[1]
    wih_p = pack_gates(params["w_ih"], E, E)                  # (E, 4*Hp)
    whh_p = pack_gates(params["w_hh"], H, Hp)                 # (Hp, 4*Hp)
    b4 = params["b_lstm"].reshape(4, H)                       # b_ih + b_hh
    b_p = jnp.zeros((1, 4 * Hp), f32)
    for j, g in enumerate(order):
        b_p = b_p.at[0, j * Hp:j * Hp + H].set(b4[g])

    attn_w_p = jnp.zeros((1, Hp), f32).at[0, :H].set(params["attn_w"][0])

    prepped = [wih_p, whh_p, b_p, attn_w_p, params["attn_b"]]
    for fi, fs in enumerate(filter_sizes):
        cw = params[f"conv_w_{fi}"]                           # (fs, E, F)
        prepped.append(jnp.zeros((fs, E, Fp), f32).at[:, :, :F].set(cw))
        prepped.append(jnp.zeros((1, Fp), f32)
                       .at[0, :F].set(params[f"conv_b_{fi}"][0]))

    # FC: remap rows from the dense layout (n_fs*F + H, O) to the padded
    # concat layout (n_fs*Fp + Hp, Op); padded rows/cols are exact zeros.
    fc_w = params["fc_w"]
    fc_w_p = jnp.zeros((n_fs * Fp + Hp, Op), f32)
    for fi in range(n_fs):
        fc_w_p = fc_w_p.at[fi * Fp:fi * Fp + F, :O].set(
            fc_w[fi * F:(fi + 1) * F, :])
    fc_w_p = fc_w_p.at[n_fs * Fp:n_fs * Fp + H, :O].set(fc_w[n_fs * F:, :])
    fc_b_p = jnp.zeros((1, Op), f32).at[0, :O].set(params["fc_b"][0])
    prepped += [fc_w_p, fc_b_p]
    return prepped


def textcnn_with_attention(text, params, *, filter_sizes, num_filters,
                           hidden_size, output_dim):
    B, S, E = text.shape
    Hp = _round_up(hidden_size, LANE)
    Fp = _round_up(num_filters, LANE)
    Op = _round_up(output_dim, LANE)

    inputs = [text] + _prep_params(params, filter_sizes=filter_sizes,
                                   num_filters=num_filters,
                                   hidden_size=hidden_size,
                                   output_dim=output_dim)

    kernel = functools.partial(_textcnn_attn_kernel, tuple(filter_sizes),
                               Hp, Fp)

    # TODO(synk): at production (B,S) add an S-tiled grid + BlockSpecs (conv
    # halo of fs-1 rows, online-softmax accumulators, running max-pool) with
    # pltpu.CompilerParams(vmem_limit_bytes=...), split S tiles across the two
    # v7x TensorCores via dimension_semantics=("parallel", ...), and cast
    # emb / matmul weights to bf16 on v6e/v7x (keep preferred_element_type=f32).
    out_pad = pl.pallas_call(
        kernel,
        out_shape=jax.ShapeDtypeStruct((B, Op), jnp.float32),
        in_specs=[pl.BlockSpec(memory_space=pltpu.MemorySpace.VMEM)
                  for _ in inputs],
        out_specs=pl.BlockSpec(memory_space=pltpu.MemorySpace.VMEM),
    )(*inputs)
    return out_pad[:, :output_dim]


# ----------------------------------------------------------------------------
# Pure-JAX reference (mirrors the PyTorch forward exactly)
# ----------------------------------------------------------------------------
def ref_forward(text, params, *, filter_sizes, num_filters, hidden_size):
    B, S, E = text.shape
    H = hidden_size
    x = jnp.transpose(text, (1, 0, 2))          # (S, B, E): batch=S, time=B
    wih, whh = params["w_ih"], params["w_hh"]
    b = params["b_lstm"][0]
    h = jnp.zeros((S, H), jnp.float32)
    c = jnp.zeros((S, H), jnp.float32)
    outs = []
    for t in range(B):
        gates = x[:, t, :] @ wih.T + h @ whh.T + b
        i = jax.nn.sigmoid(gates[:, :H])
        f = jax.nn.sigmoid(gates[:, H:2 * H])
        g = jnp.tanh(gates[:, 2 * H:3 * H])
        o = jax.nn.sigmoid(gates[:, 3 * H:])
        c = f * c + i * g
        h = o * jnp.tanh(c)
        outs.append(h)
    lstm_output = jnp.stack(outs, axis=1)       # (S, B, H)

    scores = lstm_output @ params["attn_w"].T + params["attn_b"][0, 0]
    aw = jax.nn.softmax(scores, axis=0)
    context = jnp.sum(aw * lstm_output, axis=0)         # (B, H)

    pooled = []
    for fi, fs in enumerate(filter_sizes):
        cw = params[f"conv_w_{fi}"]             # (fs, E, F)
        cb = params[f"conv_b_{fi}"][0]          # (F,)
        zs = []
        for p in range(S - fs + 1):
            z = cb + sum(text[:, p + k, :] @ cw[k] for k in range(fs))
            zs.append(jax.nn.relu(z))
        pooled.append(jnp.max(jnp.stack(zs, axis=0), axis=0))
    cat = jnp.concatenate(pooled + [context], axis=1)
    return cat @ params["fc_w"] + params["fc_b"][0]


# ----------------------------------------------------------------------------
# Deterministic parameter construction + run
# ----------------------------------------------------------------------------
def init_params(key, *, embedding_dim, num_filters, filter_sizes,
                hidden_size, output_dim):
    E, F, H, O = embedding_dim, num_filters, hidden_size, output_dim
    n_fs = len(filter_sizes)
    ks = jax.random.split(key, 7 + 2 * n_fs)
    s = 0.1
    u = lambda k, shape: jax.random.uniform(k, shape, jnp.float32, -s, s)
    params = {
        "w_ih":   u(ks[0], (4 * H, E)),
        "w_hh":   u(ks[1], (4 * H, H)),
        "b_lstm": u(ks[2], (1, 4 * H)),         # contract: b_ih + b_hh combined
        "attn_w": u(ks[3], (1, H)),
        "attn_b": u(ks[4], (1, 1)),
        "fc_w":   u(ks[5], (n_fs * F + H, O)),
        "fc_b":   u(ks[6], (1, O)),
    }
    for fi, fs in enumerate(filter_sizes):
        params[f"conv_w_{fi}"] = u(ks[7 + 2 * fi], (fs, E, F))
        params[f"conv_b_{fi}"] = u(ks[8 + 2 * fi], (1, F))
    return params


if __name__ == "__main__":
    # Small, forward-consistent config.
    B, S = 2, 8                  # batch, seq_len
    embedding_dim = 32
    num_filters = 8
    filter_sizes = (3, 4, 5)
    hidden_size = 16
    output_dim = 4

    key = jax.random.PRNGKey(0)
    k_x, k_p = jax.random.split(key)
    text = jax.random.normal(k_x, (B, S, embedding_dim), jnp.float32)
    params = init_params(k_p, embedding_dim=embedding_dim,
                         num_filters=num_filters, filter_sizes=filter_sizes,
                         hidden_size=hidden_size, output_dim=output_dim)

    out = textcnn_with_attention(text, params, filter_sizes=filter_sizes,
                                 num_filters=num_filters,
                                 hidden_size=hidden_size,
                                 output_dim=output_dim)
    out = jax.block_until_ready(out)

    ref = ref_forward(text, params, filter_sizes=filter_sizes,
                      num_filters=num_filters, hidden_size=hidden_size)
    assert out.shape == (B, output_dim)
    assert jnp.allclose(out, ref, rtol=1e-3, atol=1e-3), (out, ref)

    print("KERNEL_OK")
</pallas_src>

<mosaic_0001>
module attributes {stable_mosaic.version = 11 : i64} {
  func.func @_textcnn_attn_kernel(%arg0: memref<2x8x32xf32, #tpu.memory_space<vmem>>, %arg1: memref<32x512xf32, #tpu.memory_space<vmem>>, %arg2: memref<128x512xf32, #tpu.memory_space<vmem>>, %arg3: memref<1x512xf32, #tpu.memory_space<vmem>>, %arg4: memref<1x128xf32, #tpu.memory_space<vmem>>, %arg5: memref<1x1xf32, #tpu.memory_space<vmem>>, %arg6: memref<3x32x128xf32, #tpu.memory_space<vmem>>, %arg7: memref<1x128xf32, #tpu.memory_space<vmem>>, %arg8: memref<4x32x128xf32, #tpu.memory_space<vmem>>, %arg9: memref<1x128xf32, #tpu.memory_space<vmem>>, %arg10: memref<5x32x128xf32, #tpu.memory_space<vmem>>, %arg11: memref<1x128xf32, #tpu.memory_space<vmem>>, %arg12: memref<512x128xf32, #tpu.memory_space<vmem>>, %arg13: memref<1x128xf32, #tpu.memory_space<vmem>>, %arg14: memref<2x128xf32, #tpu.memory_space<vmem>>) attributes {dimension_semantics = [], scalar_prefetch = 0 : i64, scratch_operands = 0 : i64, tpu.core_type = #tpu.core_type<tc>} {
    %c0 = arith.constant 0 : index
    %c0_0 = arith.constant 0 : index
    %c0_1 = arith.constant 0 : index
    %0 = vector.load %arg0[%c0, %c0_0, %c0_1] : memref<2x8x32xf32, #tpu.memory_space<vmem>>, vector<2x8x32xf32>
    %1 = vector.shape_cast %0 : vector<2x8x32xf32> to vector<16x32xf32>
    %c0_2 = arith.constant 0 : index
    %c0_3 = arith.constant 0 : index
    %2 = vector.load %arg1[%c0_2, %c0_3] : memref<32x512xf32, #tpu.memory_space<vmem>>, vector<32x512xf32>
    %cst = arith.constant dense<0.000000e+00> : vector<16x512xf32>
    %3 = tpu.matmul %1, %2, %cst {dimension_numbers = #tpu.dot_dimension_numbers<[1], [0], [0], [1], [0, 0, 1, 1], [], []>} : vector<16x32xf32>, vector<32x512xf32>, vector<16x512xf32> -> vector<16x512xf32>
    %c0_4 = arith.constant 0 : index
    %c0_5 = arith.constant 0 : index
    %4 = vector.load %arg3[%c0_4, %c0_5] : memref<1x512xf32, #tpu.memory_space<vmem>>, vector<1x512xf32>
    %5 = vector.broadcast %4 : vector<1x512xf32> to vector<16x512xf32>
    %6 = arith.addf %3, %5 : vector<16x512xf32>
    %7 = vector.shape_cast %6 : vector<16x512xf32> to vector<2x8x512xf32>
    %c0_6 = arith.constant 0 : index
    %c0_7 = arith.constant 0 : index
    %8 = vector.load %arg2[%c0_6, %c0_7] : memref<128x512xf32, #tpu.memory_space<vmem>>, vector<128x512xf32>
    %cst_8 = arith.constant 0.000000e+00 : f32
    %9 = vector.broadcast %cst_8 : f32 to vector<8x128xf32>
    %cst_9 = arith.constant 0.000000e+00 : f32
    %10 = vector.broadcast %cst_9 : f32 to vector<8x128xf32>
    %11 = vector.extract_strided_slice %7 {offsets = [0, 0, 0], sizes = [1, 8, 512], strides = [1, 1, 1]} : vector<2x8x512xf32> to vector<1x8x512xf32>
    %12 = vector.shape_cast %11 : vector<1x8x512xf32> to vector<8x512xf32>
    %cst_10 = arith.constant dense<0.000000e+00> : vector<8x512xf32>
    %13 = tpu.matmul %9, %8, %cst_10 {dimension_numbers = #tpu.dot_dimension_numbers<[1], [0], [0], [1], [0, 0, 1, 1], [], []>} : vector<8x128xf32>, vector<128x512xf32>, vector<8x512xf32> -> vector<8x512xf32>
    %14 = arith.addf %12, %13 : vector<8x512xf32>
    %15 = vector.extract_strided_slice %14 {offsets = [0, 0], sizes = [8, 384], strides = [1, 1]} : vector<8x512xf32> to vector<8x384xf32>
    %16 = arith.negf %15 : vector<8x384xf32>
    %17 = math.exp %16 : vector<8x384xf32>
    %cst_11 = arith.constant 1.000000e+00 : f32
    %18 = vector.broadcast %cst_11 : f32 to vector<8x384xf32>
    %19 = arith.addf %18, %17 : vector<8x384xf32>
    %20 = arith.divf %18, %19 : vector<8x384xf32>
    %21 = vector.extract_strided_slice %14 {offsets = [0, 384], sizes = [8, 128], strides = [1, 1]} : vector<8x512xf32> to vector<8x128xf32>
    %22 = math.tanh %21 : vector<8x128xf32>
    %23 = vector.extract_strided_slice %20 {offsets = [0, 0], sizes = [8, 128], strides = [1, 1]} : vector<8x384xf32> to vector<8x128xf32>
    %24 = vector.extract_strided_slice %20 {offsets = [0, 128], sizes = [8, 128], strides = [1, 1]} : vector<8x384xf32> to vector<8x128xf32>
    %25 = vector.extract_strided_slice %20 {offsets = [0, 256], sizes = [8, 128], strides = [1, 1]} : vector<8x384xf32> to vector<8x128xf32>
    %26 = arith.mulf %24, %10 : vector<8x128xf32>
    %27 = arith.mulf %23, %22 : vector<8x128xf32>
    %28 = arith.addf %26, %27 : vector<8x128xf32>
    %29 = math.tanh %28 : vector<8x128xf32>
    %30 = arith.mulf %25, %29 : vector<8x128xf32>
    %31 = vector.extract_strided_slice %7 {offsets = [1, 0, 0], sizes = [1, 8, 512], strides = [1, 1, 1]} : vector<2x8x512xf32> to vector<1x8x512xf32>
    %32 = vector.shape_cast %31 : vector<1x8x512xf32> to vector<8x512xf32>
    %cst_12 = arith.constant dense<0.000000e+00> : vector<8x512xf32>
    %33 = tpu.matmul %30, %8, %cst_12 {dimension_numbers = #tpu.dot_dimension_numbers<[1], [0], [0], [1], [0, 0, 1, 1], [], []>} : vector<8x128xf32>, vector<128x512xf32>, vector<8x512xf32> -> vector<8x512xf32>
    %34 = arith.addf %32, %33 : vector<8x512xf32>
    %35 = vector.extract_strided_slice %34 {offsets = [0, 0], sizes = [8, 384], strides = [1, 1]} : vector<8x512xf32> to vector<8x384xf32>
    %36 = arith.negf %35 : vector<8x384xf32>
    %37 = math.exp %36 : vector<8x384xf32>
    %cst_13 = arith.constant 1.000000e+00 : f32
    %38 = vector.broadcast %cst_13 : f32 to vector<8x384xf32>
    %39 = arith.addf %38, %37 : vector<8x384xf32>
    %40 = arith.divf %38, %39 : vector<8x384xf32>
    %41 = vector.extract_strided_slice %34 {offsets = [0, 384], sizes = [8, 128], strides = [1, 1]} : vector<8x512xf32> to vector<8x128xf32>
    %42 = math.tanh %41 : vector<8x128xf32>
    %43 = vector.extract_strided_slice %40 {offsets = [0, 0], sizes = [8, 128], strides = [1, 1]} : vector<8x384xf32> to vector<8x128xf32>
    %44 = vector.extract_strided_slice %40 {offsets = [0, 128], sizes = [8, 128], strides = [1, 1]} : vector<8x384xf32> to vector<8x128xf32>
    %45 = vector.extract_strided_slice %40 {offsets = [0, 256], sizes = [8, 128], strides = [1, 1]} : vector<8x384xf32> to vector<8x128xf32>
    %46 = arith.mulf %44, %28 : vector<8x128xf32>
    %47 = arith.mulf %43, %42 : vector<8x128xf32>
    %48 = arith.addf %46, %47 : vector<8x128xf32>
    %49 = math.tanh %48 : vector<8x128xf32>
    %50 = arith.mulf %45, %49 : vector<8x128xf32>
    %51 = vector.shape_cast %30 : vector<8x128xf32> to vector<1x8x128xf32>
    %52 = vector.shape_cast %50 : vector<8x128xf32> to vector<1x8x128xf32>
    %53 = tpu.concatenate %51, %52 in 0 : vector<1x8x128xf32>, vector<1x8x128xf32> -> vector<2x8x128xf32>
    %c0_14 = arith.constant 0 : index
    %c0_15 = arith.constant 0 : index
    %54 = vector.load %arg4[%c0_14, %c0_15] : memref<1x128xf32, #tpu.memory_space<vmem>>, vector<1x128xf32>
    %55 = vector.shape_cast %54 : vector<1x128xf32> to vector<1x1x128xf32>
    %56 = vector.broadcast %55 : vector<1x1x128xf32> to vector<2x8x128xf32>
    %57 = arith.mulf %53, %56 : vector<2x8x128xf32>
    %cst_16 = arith.constant dense<0.000000e+00> : vector<2x8xf32>
    %58 = vector.multi_reduction <add>, %57, %cst_16 [2] : vector<2x8x128xf32> to vector<2x8xf32>
    %c0_17 = arith.constant 0 : index
    %c0_18 = arith.constant 0 : index
    %59 = vector.load %arg5[%c0_17, %c0_18] : memref<1x1xf32, #tpu.memory_space<vmem>>, vector<1x1xf32>
    %60 = vector.broadcast %59 : vector<1x1xf32> to vector<2x8xf32>
    %61 = arith.addf %58, %60 : vector<2x8xf32>
    %cst_19 = arith.constant dense<0xFF800000> : vector<2xf32>
    %62 = vector.multi_reduction <maximumf>, %61, %cst_19 [1] : vector<2x8xf32> to vector<2xf32>
    %63 = vector.shape_cast %62 : vector<2xf32> to vector<2x1xf32>
    %64 = vector.broadcast %63 : vector<2x1xf32> to vector<2x8xf32>
    %65 = arith.subf %61, %64 : vector<2x8xf32>
    %66 = math.exp %65 : vector<2x8xf32>
    %cst_20 = arith.constant dense<0.000000e+00> : vector<2xf32>
    %67 = vector.multi_reduction <add>, %66, %cst_20 [1] : vector<2x8xf32> to vector<2xf32>
    %68 = vector.shape_cast %67 : vector<2xf32> to vector<2x1xf32>
    %69 = tpu.reciprocal %68 {approx = true} : vector<2x1xf32> -> vector<2x1xf32>
    %70 = vector.broadcast %69 : vector<2x1xf32> to vector<2x8xf32>
    %71 = arith.mulf %66, %70 : vector<2x8xf32>
    %72 = vector.shape_cast %71 : vector<2x8xf32> to vector<2x8x1xf32>
    %73 = vector.broadcast %72 : vector<2x8x1xf32> to vector<2x8x128xf32>
    %74 = arith.mulf %73, %53 : vector<2x8x128xf32>
    %cst_21 = arith.constant dense<0.000000e+00> : vector<2x128xf32>
    %75 = vector.multi_reduction <add>, %74, %cst_21 [1] : vector<2x8x128xf32> to vector<2x128xf32>
    %c0_22 = arith.constant 0 : index
    %c0_23 = arith.constant 0 : index
    %76 = vector.load %arg7[%c0_22, %c0_23] : memref<1x128xf32, #tpu.memory_space<vmem>>, vector<1x128xf32>
    %77 = vector.extract_strided_slice %0 {offsets = [0, 0, 0], sizes = [2, 6, 32], strides = [1, 1, 1]} : vector<2x8x32xf32> to vector<2x6x32xf32>
    %78 = vector.shape_cast %77 : vector<2x6x32xf32> to vector<12x32xf32>
    %c0_24 = arith.constant 0 : index
    %c0_25 = arith.constant 0 : index
    %c0_26 = arith.constant 0 : index
    %79 = vector.load %arg6[%c0_24, %c0_25, %c0_26] : memref<3x32x128xf32, #tpu.memory_space<vmem>>, vector<1x32x128xf32>
    %80 = vector.shape_cast %79 : vector<1x32x128xf32> to vector<32x128xf32>
    %cst_27 = arith.constant dense<0.000000e+00> : vector<12x128xf32>
    %81 = tpu.matmul %78, %80, %cst_27 {dimension_numbers = #tpu.dot_dimension_numbers<[1], [0], [0], [1], [0, 0, 1, 1], [], []>} : vector<12x32xf32>, vector<32x128xf32>, vector<12x128xf32> -> vector<12x128xf32>
    %82 = vector.extract_strided_slice %0 {offsets = [0, 1, 0], sizes = [2, 6, 32], strides = [1, 1, 1]} : vector<2x8x32xf32> to vector<2x6x32xf32>
    %83 = vector.shape_cast %82 : vector<2x6x32xf32> to vector<12x32xf32>
    %c1 = arith.constant 1 : index
    %c0_28 = arith.constant 0 : index
    %c0_29 = arith.constant 0 : index
    %84 = vector.load %arg6[%c1, %c0_28, %c0_29] : memref<3x32x128xf32, #tpu.memory_space<vmem>>, vector<1x32x128xf32>
    %85 = vector.shape_cast %84 : vector<1x32x128xf32> to vector<32x128xf32>
    %cst_30 = arith.constant dense<0.000000e+00> : vector<12x128xf32>
    %86 = tpu.matmul %83, %85, %cst_30 {dimension_numbers = #tpu.dot_dimension_numbers<[1], [0], [0], [1], [0, 0, 1, 1], [], []>} : vector<12x32xf32>, vector<32x128xf32>, vector<12x128xf32> -> vector<12x128xf32>
    %87 = arith.addf %81, %86 : vector<12x128xf32>
    %88 = vector.extract_strided_slice %0 {offsets = [0, 2, 0], sizes = [2, 6, 32], strides = [1, 1, 1]} : vector<2x8x32xf32> to vector<2x6x32xf32>
    %89 = vector.shape_cast %88 : vector<2x6x32xf32> to vector<12x32xf32>
    %c2 = arith.constant 2 : index
    %c0_31 = arith.constant 0 : index
    %c0_32 = arith.constant 0 : index
    %90 = vector.load %arg6[%c2, %c0_31, %c0_32] : memref<3x32x128xf32, #tpu.memory_space<vmem>>, vector<1x32x128xf32>
    %91 = vector.shape_cast %90 : vector<1x32x128xf32> to vector<32x128xf32>
    %cst_33 = arith.constant dense<0.000000e+00> : vector<12x128xf32>
    %92 = tpu.matmul %89, %91, %cst_33 {dimension_numbers = #tpu.dot_dimension_numbers<[1], [0], [0], [1], [0, 0, 1, 1], [], []>} : vector<12x32xf32>, vector<32x128xf32>, vector<12x128xf32> -> vector<12x128xf32>
    %93 = arith.addf %87, %92 : vector<12x128xf32>
    %94 = vector.broadcast %76 : vector<1x128xf32> to vector<12x128xf32>
    %95 = arith.addf %93, %94 : vector<12x128xf32>
    %cst_34 = arith.constant 0.000000e+00 : f32
    %96 = vector.broadcast %cst_34 : f32 to vector<12x128xf32>
    %97 = arith.maximumf %95, %96 : vector<12x128xf32>
    %98 = vector.shape_cast %97 : vector<12x128xf32> to vector<2x6x128xf32>
    %cst_35 = arith.constant dense<0xFF800000> : vector<2x128xf32>
    %99 = vector.multi_reduction <maximumf>, %98, %cst_35 [1] : vector<2x6x128xf32> to vector<2x128xf32>
    %c0_36 = arith.constant 0 : index
    %c0_37 = arith.constant 0 : index
    %100 = vector.load %arg9[%c0_36, %c0_37] : memref<1x128xf32, #tpu.memory_space<vmem>>, vector<1x128xf32>
    %101 = vector.extract_strided_slice %0 {offsets = [0, 0, 0], sizes = [2, 5, 32], strides = [1, 1, 1]} : vector<2x8x32xf32> to vector<2x5x32xf32>
    %102 = vector.shape_cast %101 : vector<2x5x32xf32> to vector<10x32xf32>
    %c0_38 = arith.constant 0 : index
    %c0_39 = arith.constant 0 : index
    %c0_40 = arith.constant 0 : index
    %103 = vector.load %arg8[%c0_38, %c0_39, %c0_40] : memref<4x32x128xf32, #tpu.memory_space<vmem>>, vector<1x32x128xf32>
    %104 = vector.shape_cast %103 : vector<1x32x128xf32> to vector<32x128xf32>
    %cst_41 = arith.constant dense<0.000000e+00> : vector<10x128xf32>
    %105 = tpu.matmul %102, %104, %cst_41 {dimension_numbers = #tpu.dot_dimension_numbers<[1], [0], [0], [1], [0, 0, 1, 1], [], []>} : vector<10x32xf32>, vector<32x128xf32>, vector<10x128xf32> -> vector<10x128xf32>
    %106 = vector.extract_strided_slice %0 {offsets = [0, 1, 0], sizes = [2, 5, 32], strides = [1, 1, 1]} : vector<2x8x32xf32> to vector<2x5x32xf32>
    %107 = vector.shape_cast %106 : vector<2x5x32xf32> to vector<10x32xf32>
    %c1_42 = arith.constant 1 : index
    %c0_43 = arith.constant 0 : index
    %c0_44 = arith.constant 0 : index
    %108 = vector.load %arg8[%c1_42, %c0_43, %c0_44] : memref<4x32x128xf32, #tpu.memory_space<vmem>>, vector<1x32x128xf32>
    %109 = vector.shape_cast %108 : vector<1x32x128xf32> to vector<32x128xf32>
    %cst_45 = arith.constant dense<0.000000e+00> : vector<10x128xf32>
    %110 = tpu.matmul %107, %109, %cst_45 {dimension_numbers = #tpu.dot_dimension_numbers<[1], [0], [0], [1], [0, 0, 1, 1], [], []>} : vector<10x32xf32>, vector<32x128xf32>, vector<10x128xf32> -> vector<10x128xf32>
    %111 = arith.addf %105, %110 : vector<10x128xf32>
    %112 = vector.extract_strided_slice %0 {offsets = [0, 2, 0], sizes = [2, 5, 32], strides = [1, 1, 1]} : vector<2x8x32xf32> to vector<2x5x32xf32>
    %113 = vector.shape_cast %112 : vector<2x5x32xf32> to vector<10x32xf32>
    %c2_46 = arith.constant 2 : index
    %c0_47 = arith.constant 0 : index
    %c0_48 = arith.constant 0 : index
    %114 = vector.load %arg8[%c2_46, %c0_47, %c0_48] : memref<4x32x128xf32, #tpu.memory_space<vmem>>, vector<1x32x128xf32>
    %115 = vector.shape_cast %114 : vector<1x32x128xf32> to vector<32x128xf32>
    %cst_49 = arith.constant dense<0.000000e+00> : vector<10x128xf32>
    %116 = tpu.matmul %113, %115, %cst_49 {dimension_numbers = #tpu.dot_dimension_numbers<[1], [0], [0], [1], [0, 0, 1, 1], [], []>} : vector<10x32xf32>, vector<32x128xf32>, vector<10x128xf32> -> vector<10x128xf32>
    %117 = arith.addf %111, %116 : vector<10x128xf32>
    %118 = vector.extract_strided_slice %0 {offsets = [0, 3, 0], sizes = [2, 5, 32], strides = [1, 1, 1]} : vector<2x8x32xf32> to vector<2x5x32xf32>
    %119 = vector.shape_cast %118 : vector<2x5x32xf32> to vector<10x32xf32>
    %c3 = arith.constant 3 : index
    %c0_50 = arith.constant 0 : index
    %c0_51 = arith.constant 0 : index
    %120 = vector.load %arg8[%c3, %c0_50, %c0_51] : memref<4x32x128xf32, #tpu.memory_space<vmem>>, vector<1x32x128xf32>
    %121 = vector.shape_cast %120 : vector<1x32x128xf32> to vector<32x128xf32>
    %cst_52 = arith.constant dense<0.000000e+00> : vector<10x128xf32>
    %122 = tpu.matmul %119, %121, %cst_52 {dimension_numbers = #tpu.dot_dimension_numbers<[1], [0], [0], [1], [0, 0, 1, 1], [], []>} : vector<10x32xf32>, vector<32x128xf32>, vector<10x128xf32> -> vector<10x128xf32>
    %123 = arith.addf %117, %122 : vector<10x128xf32>
    %124 = vector.broadcast %100 : vector<1x128xf32> to vector<10x128xf32>
    %125 = arith.addf %123, %124 : vector<10x128xf32>
    %cst_53 = arith.constant 0.000000e+00 : f32
    %126 = vector.broadcast %cst_53 : f32 to vector<10x128xf32>
    %127 = arith.maximumf %125, %126 : vector<10x128xf32>
    %128 = vector.shape_cast %127 : vector<10x128xf32> to vector<2x5x128xf32>
    %cst_54 = arith.constant dense<0xFF800000> : vector<2x128xf32>
    %129 = vector.multi_reduction <maximumf>, %128, %cst_54 [1] : vector<2x5x128xf32> to vector<2x128xf32>
    %c0_55 = arith.constant 0 : index
    %c0_56 = arith.constant 0 : index
    %130 = vector.load %arg11[%c0_55, %c0_56] : memref<1x128xf32, #tpu.memory_space<vmem>>, vector<1x128xf32>
    %131 = vector.extract_strided_slice %0 {offsets = [0, 0, 0], sizes = [2, 4, 32], strides = [1, 1, 1]} : vector<2x8x32xf32> to vector<2x4x32xf32>
    %132 = vector.shape_cast %131 : vector<2x4x32xf32> to vector<8x32xf32>
    %c0_57 = arith.constant 0 : index
    %c0_58 = arith.constant 0 : index
    %c0_59 = arith.constant 0 : index
    %133 = vector.load %arg10[%c0_57, %c0_58, %c0_59] : memref<5x32x128xf32, #tpu.memory_space<vmem>>, vector<1x32x128xf32>
    %134 = vector.shape_cast %133 : vector<1x32x128xf32> to vector<32x128xf32>
    %cst_60 = arith.constant dense<0.000000e+00> : vector<8x128xf32>
    %135 = tpu.matmul %132, %134, %cst_60 {dimension_numbers = #tpu.dot_dimension_numbers<[1], [0], [0], [1], [0, 0, 1, 1], [], []>} : vector<8x32xf32>, vector<32x128xf32>, vector<8x128xf32> -> vector<8x128xf32>
    %136 = vector.extract_strided_slice %0 {offsets = [0, 1, 0], sizes = [2, 4, 32], strides = [1, 1, 1]} : vector<2x8x32xf32> to vector<2x4x32xf32>
    %137 = vector.shape_cast %136 : vector<2x4x32xf32> to vector<8x32xf32>
    %c1_61 = arith.constant 1 : index
    %c0_62 = arith.constant 0 : index
    %c0_63 = arith.constant 0 : index
    %138 = vector.load %arg10[%c1_61, %c0_62, %c0_63] : memref<5x32x128xf32, #tpu.memory_space<vmem>>, vector<1x32x128xf32>
    %139 = vector.shape_cast %138 : vector<1x32x128xf32> to vector<32x128xf32>
    %cst_64 = arith.constant dense<0.000000e+00> : vector<8x128xf32>
    %140 = tpu.matmul %137, %139, %cst_64 {dimension_numbers = #tpu.dot_dimension_numbers<[1], [0], [0], [1], [0, 0, 1, 1], [], []>} : vector<8x32xf32>, vector<32x128xf32>, vector<8x128xf32> -> vector<8x128xf32>
    %141 = arith.addf %135, %140 : vector<8x128xf32>
    %142 = vector.extract_strided_slice %0 {offsets = [0, 2, 0], sizes = [2, 4, 32], strides = [1, 1, 1]} : vector<2x8x32xf32> to vector<2x4x32xf32>
    %143 = vector.shape_cast %142 : vector<2x4x32xf32> to vector<8x32xf32>
    %c2_65 = arith.constant 2 : index
    %c0_66 = arith.constant 0 : index
    %c0_67 = arith.constant 0 : index
    %144 = vector.load %arg10[%c2_65, %c0_66, %c0_67] : memref<5x32x128xf32, #tpu.memory_space<vmem>>, vector<1x32x128xf32>
    %145 = vector.shape_cast %144 : vector<1x32x128xf32> to vector<32x128xf32>
    %cst_68 = arith.constant dense<0.000000e+00> : vector<8x128xf32>
    %146 = tpu.matmul %143, %145, %cst_68 {dimension_numbers = #tpu.dot_dimension_numbers<[1], [0], [0], [1], [0, 0, 1, 1], [], []>} : vector<8x32xf32>, vector<32x128xf32>, vector<8x128xf32> -> vector<8x128xf32>
    %147 = arith.addf %141, %146 : vector<8x128xf32>
    %148 = vector.extract_strided_slice %0 {offsets = [0, 3, 0], sizes = [2, 4, 32], strides = [1, 1, 1]} : vector<2x8x32xf32> to vector<2x4x32xf32>
    %149 = vector.shape_cast %148 : vector<2x4x32xf32> to vector<8x32xf32>
    %c3_69 = arith.constant 3 : index
    %c0_70 = arith.constant 0 : index
    %c0_71 = arith.constant 0 : index
    %150 = vector.load %arg10[%c3_69, %c0_70, %c0_71] : memref<5x32x128xf32, #tpu.memory_space<vmem>>, vector<1x32x128xf32>
    %151 = vector.shape_cast %150 : vector<1x32x128xf32> to vector<32x128xf32>
    %cst_72 = arith.constant dense<0.000000e+00> : vector<8x128xf32>
    %152 = tpu.matmul %149, %151, %cst_72 {dimension_numbers = #tpu.dot_dimension_numbers<[1], [0], [0], [1], [0, 0, 1, 1], [], []>} : vector<8x32xf32>, vector<32x128xf32>, vector<8x128xf32> -> vector<8x128xf32>
    %153 = arith.addf %147, %152 : vector<8x128xf32>
    %154 = vector.extract_strided_slice %0 {offsets = [0, 4, 0], sizes = [2, 4, 32], strides = [1, 1, 1]} : vector<2x8x32xf32> to vector<2x4x32xf32>
    %155 = vector.shape_cast %154 : vector<2x4x32xf32> to vector<8x32xf32>
    %c4 = arith.constant 4 : index
    %c0_73 = arith.constant 0 : index
    %c0_74 = arith.constant 0 : index
    %156 = vector.load %arg10[%c4, %c0_73, %c0_74] : memref<5x32x128xf32, #tpu.memory_space<vmem>>, vector<1x32x128xf32>
    %157 = vector.shape_cast %156 : vector<1x32x128xf32> to vector<32x128xf32>
    %cst_75 = arith.constant dense<0.000000e+00> : vector<8x128xf32>
    %158 = tpu.matmul %155, %157, %cst_75 {dimension_numbers = #tpu.dot_dimension_numbers<[1], [0], [0], [1], [0, 0, 1, 1], [], []>} : vector<8x32xf32>, vector<32x128xf32>, vector<8x128xf32> -> vector<8x128xf32>
    %159 = arith.addf %153, %158 : vector<8x128xf32>
    %160 = vector.broadcast %130 : vector<1x128xf32> to vector<8x128xf32>
    %161 = arith.addf %159, %160 : vector<8x128xf32>
    %cst_76 = arith.constant 0.000000e+00 : f32
    %162 = vector.broadcast %cst_76 : f32 to vector<8x128xf32>
    %163 = arith.maximumf %161, %162 : vector<8x128xf32>
    %164 = vector.shape_cast %163 : vector<8x128xf32> to vector<2x4x128xf32>
    %cst_77 = arith.constant dense<0xFF800000> : vector<2x128xf32>
    %165 = vector.multi_reduction <maximumf>, %164, %cst_77 [1] : vector<2x4x128xf32> to vector<2x128xf32>
    %166 = tpu.concatenate %99, %129, %165, %75 in 1 : vector<2x128xf32>, vector<2x128xf32>, vector<2x128xf32>, vector<2x128xf32> -> vector<2x512xf32>
    %c0_78 = arith.constant 0 : index
    %c0_79 = arith.constant 0 : index
    %167 = vector.load %arg12[%c0_78, %c0_79] : memref<512x128xf32, #tpu.memory_space<vmem>>, vector<512x128xf32>
    %cst_80 = arith.constant dense<0.000000e+00> : vector<2x128xf32>
    %168 = tpu.matmul %166, %167, %cst_80 {dimension_numbers = #tpu.dot_dimension_numbers<[1], [0], [0], [1], [0, 0, 1, 1], [], []>} : vector<2x512xf32>, vector<512x128xf32>, vector<2x128xf32> -> vector<2x128xf32>
    %c0_81 = arith.constant 0 : index
    %c0_82 = arith.constant 0 : index
    %169 = vector.load %arg13[%c0_81, %c0_82] : memref<1x128xf32, #tpu.memory_space<vmem>>, vector<1x128xf32>
    %170 = vector.broadcast %169 : vector<1x128xf32> to vector<2x128xf32>
    %171 = arith.addf %168, %170 : vector<2x128xf32>
    %c0_83 = arith.constant 0 : index
    %c0_84 = arith.constant 0 : index
    %172 = vector.load %arg14[%c0_83, %c0_84] : memref<2x128xf32, #tpu.memory_space<vmem>>, vector<2x128xf32>
    tpu.vector_store %arg14[%c0_83, %c0_84], %171 {strides = array<i32>} : memref<2x128xf32, #tpu.memory_space<vmem>>, vector<2x128xf32>,
    return
  }
}

</mosaic_0001>

<llo_original>
// kernel: tpu_custom_call.1
$region0: #{tpu_custom_call.1}
  #allocation0 [shape = 'u32[]', space=smem, size = 0x4, offset = 0x4, fixed_abs, tag = 'smem constant byte address 0x4 - core index']
  #allocation1 [shape = 'u32[144,128]{1,0:T(1,128)}', space=vmem, size = 0x12000, scoped, tag = 'internal scratch']
  #allocation2 [shape = 'f32[1,1]{1,0:T(1,128)S(1)}', space=vmem, size = 0x200, scoped, tag = 'scoped memory for tpu_custom_call.1']
  %s0 = inlined_call_operand.hbm [shape: f32[2,8,32], index: 0, kind: input, shape index: {}]
  %s1 = inlined_call_operand.hbm [shape: f32[32,512], index: 1, kind: input, shape index: {}]
  %s2 = inlined_call_operand.hbm [shape: f32[128,512], index: 2, kind: input, shape index: {}]
  %s3 = inlined_call_operand.vmem [shape: f32[1,512], index: 3, kind: input, shape index: {}]
  %s4 = inlined_call_operand.vmem [shape: f32[1,128], index: 4, kind: input, shape index: {}]
  %s5 = inlined_call_operand.<no memory space> [shape: f32[1,1], index: 5, kind: input, shape index: {}]
  %s6 = inlined_call_operand.hbm [shape: f32[3,32,128], index: 6, kind: input, shape index: {}]
  %s7 = inlined_call_operand.vmem [shape: f32[1,128], index: 7, kind: input, shape index: {}]
  %s8 = inlined_call_operand.hbm [shape: f32[4,32,128], index: 8, kind: input, shape index: {}]
  %s9 = inlined_call_operand.vmem [shape: f32[1,128], index: 9, kind: input, shape index: {}]
  %s10 = inlined_call_operand.hbm [shape: f32[5,32,128], index: 10, kind: input, shape index: {}]
  %s11 = inlined_call_operand.vmem [shape: f32[1,128], index: 11, kind: input, shape index: {}]
  %s12 = inlined_call_operand.hbm [shape: f32[512,128], index: 12, kind: input, shape index: {}]
  %s13 = inlined_call_operand.vmem [shape: f32[1,128], index: 13, kind: input, shape index: {}]
  %s14 = inlined_call_operand.hbm [shape: f32[2,128], index: 14, kind: output, shape index: {}]
  %s15 = sld [smem:[#allocation0]]
  $region94: #{tpu_custom_call.1} parent=0
    _
  %s17 = ssub.s32 1, %s15
  %s18 = scalar_select 0, %s17, %s15
  %v19 = vstv %s5
  %20 = vst [vmem:[#allocation2] sm:$0x1] %v19
  $region1: #{tpu_custom_call.1} parent=0
    #allocation3 [shape = 'u8[8192]{0}', space=vmem, size = 0x2000, scoped, tag = 'input window, operand 0, single buffered']
    #allocation4 [shape = 's32[1]{0}', space=sflag, size = 0x4, scoped, tag = 'scoped memory for tpu_custom_call.1']
    #allocation5 [shape = 's32[1]{0}', space=sflag, size = 0x4, scoped, tag = 'scoped memory for tpu_custom_call.1']
    #allocation6 [shape = 'u8[65536]{0}', space=vmem, size = 0x10000, scoped, tag = 'input window, operand 1, single buffered']
    #allocation7 [shape = 's32[1]{0}', space=sflag, size = 0x4, scoped, tag = 'scoped memory for tpu_custom_call.1']
    #allocation8 [shape = 'u8[262144]{0}', space=vmem, size = 0x40000, scoped, tag = 'input window, operand 2, single buffered']
    #allocation9 [shape = 'u8[49152]{0}', space=vmem, size = 0xc000, scoped, tag = 'input window, operand 6, single buffered']
    #allocation10 [shape = 's32[1]{0}', space=sflag, size = 0x4, scoped, tag = 'scoped memory for tpu_custom_call.1']
    #allocation11 [shape = 'u8[65536]{0}', space=vmem, size = 0x10000, scoped, tag = 'input window, operand 8, single buffered']
    #allocation12 [shape = 'u8[81920]{0}', space=vmem, size = 0x14000, scoped, tag = 'input window, operand 10, single buffered']
    #allocation13 [shape = 's32[1]{0}', space=sflag, size = 0x4, scoped, tag = 'scoped memory for tpu_custom_call.1']
    #allocation14 [shape = 'u8[262144]{0}', space=vmem, size = 0x40000, scoped, tag = 'input window, operand 12, single buffered']
    #allocation15 [shape = 'u8[1024]{0}', space=vmem, size = 0x400, scoped, tag = 'output window, operand 0, single buffered']
    %21 = vsyncpa [#allocation4], 0
    %22 = vsyncpa [#allocation7], 0
    %23 = vsyncpa [#allocation10], 0
    %24 = vsyncpa [#allocation13], 0
    %25 = vsyncpa [#allocation5], 0
    // Predicated region
    $region2: #{tpu_custom_call.1} parent=1 // pred_check
      _
    $region3: #{tpu_custom_call.1} parent=1 // pred_check_branch
      %27 = sbr.rel (0) target = $region5
    $region4: #{tpu_custom_call.1} parent=1 // pred_region
      %s29 = ssub.s32 256, 256
      %30 = vsyncadd [#allocation4], %s29
      %s31 = sshll.u32 [#allocation3], 4
      %s32 = int_to_ptr.vmem [resolvable:$true] %s31
      %37 = dma.hbm_to_vmem [thread:$0]  %s0, 256, %s32, [#allocation4], 128, 128, 8
    $region5: #{tpu_custom_call.1} parent=1 // pred_fallthru
      _
    // Predicated region
    $region6: #{tpu_custom_call.1} parent=1 // pred_check
      _
    $region7: #{tpu_custom_call.1} parent=1 // pred_check_branch
      %39 = sbr.rel (0) target = $region9
    $region8: #{tpu_custom_call.1} parent=1 // pred_region
      %s41 = ssub.s32 2048, 2048
      %42 = vsyncadd [#allocation7], %s41
      %s43 = sshll.u32 [#allocation6], 4
      %s44 = int_to_ptr.vmem [resolvable:$true] %s43
      %49 = dma.hbm_to_vmem [thread:$0]  %s1, 2048, %s44, [#allocation7], 512, 512, 32
    $region9: #{tpu_custom_call.1} parent=1 // pred_fallthru
      _
    // Predicated region
    $region10: #{tpu_custom_call.1} parent=1 // pred_check
      _
    $region11: #{tpu_custom_call.1} parent=1 // pred_check_branch
      %51 = sbr.rel (0) target = $region13
    $region12: #{tpu_custom_call.1} parent=1 // pred_region
      %s53 = ssub.s32 8192, 8192
      %54 = vsyncadd [#allocation7], %s53
      %s55 = sshll.u32 [#allocation8], 4
      %s56 = int_to_ptr.vmem [resolvable:$true] %s55
      %61 = dma.hbm_to_vmem [thread:$0]  %s2, 8192, %s56, [#allocation7], 512, 512, 32
    $region13: #{tpu_custom_call.1} parent=1 // pred_fallthru
      _
    // Predicated region
    $region14: #{tpu_custom_call.1} parent=1 // pred_check
      _
    $region15: #{tpu_custom_call.1} parent=1 // pred_check_branch
      %63 = sbr.rel (0) target = $region17
    $region16: #{tpu_custom_call.1} parent=1 // pred_region
      _
    $region17: #{tpu_custom_call.1} parent=1 // pred_fallthru
      _
    // Predicated region
    $region18: #{tpu_custom_call.1} parent=1 // pred_check
      _
    $region19: #{tpu_custom_call.1} parent=1 // pred_check_branch
      %65 = sbr.rel (0) target = $region21
    $region20: #{tpu_custom_call.1} parent=1 // pred_region
      _
    $region21: #{tpu_custom_call.1} parent=1 // pred_fallthru
      _
    // Predicated region
    $region22: #{tpu_custom_call.1} parent=1 // pred_check
      _
    $region23: #{tpu_custom_call.1} parent=1 // pred_check_branch
      %67 = sbr.rel (0) target = $region25
    $region24: #{tpu_custom_call.1} parent=1 // pred_region
      _
    $region25: #{tpu_custom_call.1} parent=1 // pred_fallthru
      _
    // Predicated region
    $region26: #{tpu_custom_call.1} parent=1 // pred_check
      _
    $region27: #{tpu_custom_call.1} parent=1 // pred_check_branch
      %69 = sbr.rel (0) target = $region29
    $region28: #{tpu_custom_call.1} parent=1 // pred_region
      %s71 = ssub.s32 1536, 1536
      %72 = vsyncadd [#allocation10], %s71
      %s73 = sshll.u32 [#allocation9], 4
      %s74 = int_to_ptr.vmem [resolvable:$true] %s73
      %79 = dma.hbm_to_vmem [thread:$0]  %s6, 1536, %s74, [#allocation10], 128, 128, 8
    $region29: #{tpu_custom_call.1} parent=1 // pred_fallthru
      _
    // Predicated region
    $region30: #{tpu_custom_call.1} parent=1 // pred_check
      _
    $region31: #{tpu_custom_call.1} parent=1 // pred_check_branch
      %81 = sbr.rel (0) target = $region33
    $region32: #{tpu_custom_call.1} parent=1 // pred_region
      _
    $region33: #{tpu_custom_call.1} parent=1 // pred_fallthru
      _
    // Predicated region
    $region34: #{tpu_custom_call.1} parent=1 // pred_check
      _
    $region35: #{tpu_custom_call.1} parent=1 // pred_check_branch
      %83 = sbr.rel (0) target = $region37
    $region36: #{tpu_custom_call.1} parent=1 // pred_region
      %s85 = ssub.s32 2048, 2048
      %86 = vsyncadd [#allocation10], %s85
      %s87 = sshll.u32 [#allocation11], 4
      %s88 = int_to_ptr.vmem [resolvable:$true] %s87
      %93 = dma.hbm_to_vmem [thread:$0]  %s8, 2048, %s88, [#allocation10], 128, 128, 8
    $region37: #{tpu_custom_call.1} parent=1 // pred_fallthru
      _
    // Predicated region
    $region38: #{tpu_custom_call.1} parent=1 // pred_check
      _
    $region39: #{tpu_custom_call.1} parent=1 // pred_check_branch
      %95 = sbr.rel (0) target = $region41
    $region40: #{tpu_custom_call.1} parent=1 // pred_region
      _
    $region41: #{tpu_custom_call.1} parent=1 // pred_fallthru
      _
    // Predicated region
    $region42: #{tpu_custom_call.1} parent=1 // pred_check
      _
    $region43: #{tpu_custom_call.1} parent=1 // pred_check_branch
      %97 = sbr.rel (0) target = $region45
    $region44: #{tpu_custom_call.1} parent=1 // pred_region
      %s99 = ssub.s32 2560, 2560
      %100 = vsyncadd [#allocation13], %s99
      %s101 = sshll.u32 [#allocation12], 4
      %s102 = int_to_ptr.vmem [resolvable:$true] %s101
      %107 = dma.hbm_to_vmem [thread:$0]  %s10, 2560, %s102, [#allocation13], 128, 128, 8
    $region45: #{tpu_custom_call.1} parent=1 // pred_fallthru
      _
    // Predicated region
    $region46: #{tpu_custom_call.1} parent=1 // pred_check
      _
    $region47: #{tpu_custom_call.1} parent=1 // pred_check_branch
      %109 = sbr.rel (0) target = $region49
    $region48: #{tpu_custom_call.1} parent=1 // pred_region
      _
    $region49: #{tpu_custom_call.1} parent=1 // pred_fallthru
      _
    // Predicated region
    $region50: #{tpu_custom_call.1} parent=1 // pred_check
      _
    $region51: #{tpu_custom_call.1} parent=1 // pred_check_branch
      %111 = sbr.rel (0) target = $region53
    $region52: #{tpu_custom_call.1} parent=1 // pred_region
      %s113 = ssub.s32 8192, 8192
      %114 = vsyncadd [#allocation13], %s113
      %s115 = sshll.u32 [#allocation14], 4
      %s116 = int_to_ptr.vmem [resolvable:$true] %s115
      %121 = dma.hbm_to_vmem [thread:$0]  %s12, 8192, %s116, [#allocation13], 128, 128, 8
    $region53: #{tpu_custom_call.1} parent=1 // pred_fallthru
      _
    // Predicated region
    $region54: #{tpu_custom_call.1} parent=1 // pred_check
      _
    $region55: #{tpu_custom_call.1} parent=1 // pred_check_branch
      %123 = sbr.rel (0) target = $region57
    $region56: #{tpu_custom_call.1} parent=1 // pred_region
      _
    $region57: #{tpu_custom_call.1} parent=1 // pred_fallthru
      _
    // Predicated region
    $region58: #{tpu_custom_call.1} parent=1 // pred_check
      _
    $region59: #{tpu_custom_call.1} parent=1 // pred_check_branch
      %125 = sbr.rel (0) target = $region61
    $region60: #{tpu_custom_call.1} parent=1 // pred_region
      %126 = dma.done [#allocation4], 256
    $region61: #{tpu_custom_call.1} parent=1 // pred_fallthru
      _
    // Predicated region
    $region62: #{tpu_custom_call.1} parent=1 // pred_check
      _
    $region63: #{tpu_custom_call.1} parent=1 // pred_check_branch
      %128 = sbr.rel (0) target = $region65
    $region64: #{tpu_custom_call.1} parent=1 // pred_region
      %129 = dma.done [#allocation7], 2048
    $region65: #{tpu_custom_call.1} parent=1 // pred_fallthru
      _
    // Predicated region
    $region66: #{tpu_custom_call.1} parent=1 // pred_check
      _
    $region67: #{tpu_custom_call.1} parent=1 // pred_check_branch
      %131 = sbr.rel (0) target = $region69
    $region68: #{tpu_custom_call.1} parent=1 // pred_region
      %132 = dma.done [#allocation7], 8192
    $region69: #{tpu_custom_call.1} parent=1 // pred_fallthru
      _
    // Predicated region
    $region70: #{tpu_custom_call.1} parent=1 // pred_check
      _
    $region71: #{tpu_custom_call.1} parent=1 // pred_check_branch
      %134 = sbr.rel (0) target = $region73
    $region72: #{tpu_custom_call.1} parent=1 // pred_region
      %135 = dma.done [#allocation10], 1536
    $region73: #{tpu_custom_call.1} parent=1 // pred_fallthru
      _
    // Predicated region
    $region74: #{tpu_custom_call.1} parent=1 // pred_check
      _
    $region75: #{tpu_custom_call.1} parent=1 // pred_check_branch
      %137 = sbr.rel (0) target = $region77
    $region76: #{tpu_custom_call.1} parent=1 // pred_region
      %138 = dma.done [#allocation10], 2048
    $region77: #{tpu_custom_call.1} parent=1 // pred_fallthru
      _
    // Predicated region
    $region78: #{tpu_custom_call.1} parent=1 // pred_check
      _
    $region79: #{tpu_custom_call.1} parent=1 // pred_check_branch
      %140 = sbr.rel (0) target = $region81
    $region80: #{tpu_custom_call.1} parent=1 // pred_region
      %141 = dma.done [#allocation13], 2560
    $region81: #{tpu_custom_call.1} parent=1 // pred_fallthru
      _
    // Predicated region
    $region82: #{tpu_custom_call.1} parent=1 // pred_check
      _
    $region83: #{tpu_custom_call.1} parent=1 // pred_check_branch
      %143 = sbr.rel (0) target = $region85
    $region84: #{tpu_custom_call.1} parent=1 // pred_region
      %144 = dma.done [#allocation13], 8192
    $region85: #{tpu_custom_call.1} parent=1 // pred_fallthru
      _
    %v145 = vld [vmem:[#allocation3] sm:$0xff]
    %v146 = vld [vmem:[#allocation3 + $0x8] sm:$0xff]
    %v147 = vld [vmem:[#allocation6] sm:$0xff]
    %v148 = vld [vmem:[#allocation6 + $0x8] sm:$0xff]
    %v149 = vld [vmem:[#allocation6 + $0x10] sm:$0xff]
    %v150 = vld [vmem:[#allocation6 + $0x18] sm:$0xff]
    %v151 = vld [vmem:[#allocation6 + $0x20] sm:$0xff]
    %v152 = vld [vmem:[#allocation6 + $0x28] sm:$0xff]
    %v153 = vld [vmem:[#allocation6 + $0x30] sm:$0xff]
    %v154 = vld [vmem:[#allocation6 + $0x38] sm:$0xff]
    %v155 = vld [vmem:[#allocation6 + $0x40] sm:$0xff]
    %v156 = vld [vmem:[#allocation6 + $0x48] sm:$0xff]
    %v157 = vld [vmem:[#allocation6 + $0x50] sm:$0xff]
    %v158 = vld [vmem:[#allocation6 + $0x58] sm:$0xff]
    %v159 = vld [vmem:[#allocation6 + $0x60] sm:$0xff]
    %v160 = vld [vmem:[#allocation6 + $0x68] sm:$0xff]
    %v161 = vld [vmem:[#allocation6 + $0x70] sm:$0xff]
    %v162 = vld [vmem:[#allocation6 + $0x78] sm:$0xff]
    %v163 = vld [vmem:[%s3] sm:$0xf]
    %v165 = vlaneseq
    %v166 = vshrl.u32 %v165, 7
    %v167 = vsub.s32 0, %v166
    %v168 = vrot.slane %v163, %v167
    %v169 = vlaneseq
    %v170 = vshrl.u32 %v169, 7
    %v171 = vsub.s32 1, %v170
    %v172 = vrot.slane %v163, %v171
    %v173 = vlaneseq
    %v174 = vshrl.u32 %v173, 7
    %v175 = vsub.s32 2, %v174
    %v176 = vrot.slane %v163, %v175
    %v177 = vlaneseq
    %v178 = vshrl.u32 %v177, 7
    %v179 = vsub.s32 3, %v178
    %v180 = vrot.slane %v163, %v179
    %vm185 = vcmask 261120
    %v187 = vsel %vm185, %v145, 0
    %v190 = vsel %vm185, %v146, 0
    %192 = vmatprep.subr.mxu0 0.0
    %193 = vmatpush1.msra.mxu0 0.0
    %194 = vmatprep.subr.mxu0 0.0
    %195 = vmatpush1.msra.mxu0 0.0
    %196 = vmatprep.subr.mxu0 0.0
    %197 = vmatpush1.msra.mxu0 0.0
    %198 = vmatprep.subr.mxu0 0.0
    %199 = vmatpush1.msra.mxu0 0.0
    %200 = vmatprep.subr.mxu0 0.0
    %201 = vmatpush1.msra.mxu0 0.0
    %202 = vmatprep.subr.mxu0 0.0
    %203 = vmatpush1.msra.mxu0 0.0
    %204 = vmatprep.subr.mxu0 0.0
    %205 = vmatpush1.msra.mxu0 0.0
    %206 = vmatprep.subr.mxu0 0.0
    %207 = vmatpush1.msra.mxu0 0.0
    %208 = vmatprep.subr.mxu0 0.0
    %209 = vmatpush1.msra.mxu0 0.0
    %210 = vmatprep.subr.mxu0 0.0
    %211 = vmatpush1.msra.mxu0 0.0
    %212 = vmatprep.subr.mxu0 0.0
    %213 = vmatpush1.msra.mxu0 0.0
    %214 = vmatprep.subr.mxu0 0.0
    %215 = vmatpush1.msra.mxu0 0.0
    %216 = vmatprep.subr.mxu0 %v160
    %217 = vmatpush1.msra.mxu0 %v159
    %218 = vmatprep.subr.mxu0 %v156
    %219 = vmatpush1.msra.mxu0 %v155
    %220 = vmatprep.subr.mxu0 %v152
    %221 = vmatpush1.msra.mxu0 %v151
    %222 = vmatprep.subr.mxu0 %v148
    %223 = vmatpush1.msra.mxu0 %v147
    %224 = vmatprep.subr.mxu0 0.0
    %225 = vmatpush2.msra.mxu0 0.0
    %226 = vmatprep.subr.mxu0 0.0
    %227 = vmatpush2.msra.mxu0 0.0
    %228 = vmatprep.subr.mxu0 0.0
    %229 = vmatpush2.msra.mxu0 0.0
    %230 = vmatprep.subr.mxu0 0.0
    %231 = vmatpush2.msra.mxu0 0.0
    %232 = vmatprep.subr.mxu0 0.0
    %233 = vmatpush2.msra.mxu0 0.0
    %234 = vmatprep.subr.mxu0 0.0
    %235 = vmatpush2.msra.mxu0 0.0
    %236 = vmatprep.subr.mxu0 0.0
    %237 = vmatpush2.msra.mxu0 0.0
    %238 = vmatprep.subr.mxu0 0.0
    %239 = vmatpush2.msra.mxu0 0.0
    %240 = vmatprep.subr.mxu0 0.0
    %241 = vmatpush2.msra.mxu0 0.0
    %242 = vmatprep.subr.mxu0 0.0
    %243 = vmatpush2.msra.mxu0 0.0
    %244 = vmatprep.subr.mxu0 0.0
    %245 = vmatpush2.msra.mxu0 0.0
    %246 = vmatprep.subr.mxu0 0.0
    %247 = vmatpush2.msra.mxu0 0.0
    %248 = vmatprep.subr.mxu0 0.0
    %249 = vmatpush2.msra.mxu0 0.0
    %250 = vmatprep.subr.mxu0 0.0
    %251 = vmatpush2.msra.mxu0 0.0
    %252 = vmatprep.subr.mxu0 0.0
    %253 = vmatpush2.msra.mxu0 0.0
    %254 = vmatprep.subr.mxu0 0.0
    %255 = vmatpush2.msra.mxu0 0.0
    %256 = vmatprep.mubr.f32.mxu0 0.0
    %257 = vmatmul.mubr.f32.gmra.mxu0 %v187
    %v258 = vpop.f32.mrf.mxu0
    %v259 = vadd.f32 %v168, %v258
    %v260 = vpop.f32.mrf.mxu0
    %v261 = vadd.f32 %v172, %v260
    %262 = vmatprep.mubr.f32.mxu0 0.0
    %263 = vmatmul.mubr.f32.gmra.mxu0 %v190
    %v264 = vpop.f32.mrf.mxu0
    %v265 = vadd.f32 %v168, %v264
    %v266 = vpop.f32.mrf.mxu0
    %v267 = vadd.f32 %v172, %v266
    %268 = vdwg.mxu0
    %269 = vmatprep.subr.mxu0 0.0
    %270 = vmatpush1.msra.mxu0 0.0
    %271 = vmatprep.subr.mxu0 0.0
    %272 = vmatpush1.msra.mxu0 0.0
    %273 = vmatprep.subr.mxu0 0.0
    %274 = vmatpush1.msra.mxu0 0.0
    %275 = vmatprep.subr.mxu0 0.0
    %276 = vmatpush1.msra.mxu0 0.0
    %277 = vmatprep.subr.mxu0 0.0
    %278 = vmatpush1.msra.mxu0 0.0
    %279 = vmatprep.subr.mxu0 0.0
    %280 = vmatpush1.msra.mxu0 0.0
    %281 = vmatprep.subr.mxu0 0.0
    %282 = vmatpush1.msra.mxu0 0.0
    %283 = vmatprep.subr.mxu0 0.0
    %284 = vmatpush1.msra.mxu0 0.0
    %285 = vmatprep.subr.mxu0 0.0
    %286 = vmatpush1.msra.mxu0 0.0
    %287 = vmatprep.subr.mxu0 0.0
    %288 = vmatpush1.msra.mxu0 0.0
    %289 = vmatprep.subr.mxu0 0.0
    %290 = vmatpush1.msra.mxu0 0.0
    %291 = vmatprep.subr.mxu0 0.0
    %292 = vmatpush1.msra.mxu0 0.0
    %293 = vmatprep.subr.mxu0 %v162
    %294 = vmatpush1.msra.mxu0 %v161
    %295 = vmatprep.subr.mxu0 %v158
    %296 = vmatpush1.msra.mxu0 %v157
    %297 = vmatprep.subr.mxu0 %v154
    %298 = vmatpush1.msra.mxu0 %v153
    %299 = vmatprep.subr.mxu0 %v150
    %300 = vmatpush1.msra.mxu0 %v149
    %301 = vmatprep.subr.mxu0 0.0
    %302 = vmatpush2.msra.mxu0 0.0
    %303 = vmatprep.subr.mxu0 0.0
    %304 = vmatpush2.msra.mxu0 0.0
    %305 = vmatprep.subr.mxu0 0.0
    %306 = vmatpush2.msra.mxu0 0.0
    %307 = vmatprep.subr.mxu0 0.0
    %308 = vmatpush2.msra.mxu0 0.0
    %309 = vmatprep.subr.mxu0 0.0
    %310 = vmatpush2.msra.mxu0 0.0
    %311 = vmatprep.subr.mxu0 0.0
    %312 = vmatpush2.msra.mxu0 0.0
    %313 = vmatprep.subr.mxu0 0.0
    %314 = vmatpush2.msra.mxu0 0.0
    %315 = vmatprep.subr.mxu0 0.0
    %316 = vmatpush2.msra.mxu0 0.0
    %317 = vmatprep.subr.mxu0 0.0
    %318 = vmatpush2.msra.mxu0 0.0
    %319 = vmatprep.subr.mxu0 0.0
    %320 = vmatpush2.msra.mxu0 0.0
    %321 = vmatprep.subr.mxu0 0.0
    %322 = vmatpush2.msra.mxu0 0.0
    %323 = vmatprep.subr.mxu0 0.0
    %324 = vmatpush2.msra.mxu0 0.0
    %325 = vmatprep.subr.mxu0 0.0
    %326 = vmatpush2.msra.mxu0 0.0
    %327 = vmatprep.subr.mxu0 0.0
    %328 = vmatpush2.msra.mxu0 0.0
    %329 = vmatprep.subr.mxu0 0.0
    %330 = vmatpush2.msra.mxu0 0.0
    %331 = vmatprep.subr.mxu0 0.0
    %332 = vmatpush2.msra.mxu0 0.0
    %333 = vmatprep.mubr.f32.mxu0 0.0
    %334 = vmatmul.mubr.f32.gmra.mxu0 %v187
    %v335 = vpop.f32.mrf.mxu0
    %v336 = vadd.f32 %v176, %v335
    %v337 = vpop.f32.mrf.mxu0
    %v338 = vadd.f32 %v180, %v337
    %339 = vmatprep.mubr.f32.mxu0 0.0
    %340 = vmatmul.mubr.f32.gmra.mxu0 %v190
    %v341 = vpop.f32.mrf.mxu0
    %v342 = vadd.f32 %v176, %v341
    %v343 = vpop.f32.mrf.mxu0
    %v344 = vadd.f32 %v180, %v343
    %345 = vdwg.mxu0
    %v346 = vld [vmem:[#allocation8] sm:$0xff]
    %v347 = vld [vmem:[#allocation8 + $0x8] sm:$0xff]
    %v348 = vld [vmem:[#allocation8 + $0x10] sm:$0xff]
    %v349 = vld [vmem:[#allocation8 + $0x18] sm:$0xff]
    %v350 = vld [vmem:[#allocation8 + $0x20] sm:$0xff]
    %v351 = vld [vmem:[#allocation8 + $0x28] sm:$0xff]
    %v352 = vld [vmem:[#allocation8 + $0x30] sm:$0xff]
    %v353 = vld [vmem:[#allocation8 + $0x38] sm:$0xff]
    %v354 = vld [vmem:[#allocation8 + $0x40] sm:$0xff]
    %v355 = vld [vmem:[#allocation8 + $0x48] sm:$0xff]
    %v356 = vld [vmem:[#allocation8 + $0x50] sm:$0xff]
    %v357 = vld [vmem:[#allocation8 + $0x58] sm:$0xff]
    %v358 = vld [vmem:[#allocation8 + $0x60] sm:$0xff]
    %v359 = vld [vmem:[#allocation8 + $0x68] sm:$0xff]
    %v360 = vld [vmem:[#allocation8 + $0x70] sm:$0xff]
    %v361 = vld [vmem:[#allocation8 + $0x78] sm:$0xff]
    %v362 = vld [vmem:[#allocation8 + $0x80] sm:$0xff]
    %v363 = vld [vmem:[#allocation8 + $0x88] sm:$0xff]
    %v364 = vld [vmem:[#allocation8 + $0x90] sm:$0xff]
    %v365 = vld [vmem:[#allocation8 + $0x98] sm:$0xff]
    %v366 = vld [vmem:[#allocation8 + $0xa0] sm:$0xff]
    %v367 = vld [vmem:[#allocation8 + $0xa8] sm:$0xff]
    %v368 = vld [vmem:[#allocation8 + $0xb0] sm:$0xff]
    %v369 = vld [vmem:[#allocation8 + $0xb8] sm:$0xff]
    %v370 = vld [vmem:[#allocation8 + $0xc0] sm:$0xff]
    %v371 = vld [vmem:[#allocation8 + $0xc8] sm:$0xff]
    %v372 = vld [vmem:[#allocation8 + $0xd0] sm:$0xff]
    %v373 = vld [vmem:[#allocation8 + $0xd8] sm:$0xff]
    %v374 = vld [vmem:[#allocation8 + $0xe0] sm:$0xff]
    %v375 = vld [vmem:[#allocation8 + $0xe8] sm:$0xff]
    %v376 = vld [vmem:[#allocation8 + $0xf0] sm:$0xff]
    %v377 = vld [vmem:[#allocation8 + $0xf8] sm:$0xff]
    %v378 = vld [vmem:[#allocation8 + $0x100] sm:$0xff]
    %v379 = vld [vmem:[#allocation8 + $0x108] sm:$0xff]
    %v380 = vld [vmem:[#allocation8 + $0x110] sm:$0xff]
    %v381 = vld [vmem:[#allocation8 + $0x118] sm:$0xff]
    %v382 = vld [vmem:[#allocation8 + $0x120] sm:$0xff]
    %v383 = vld [vmem:[#allocation8 + $0x128] sm:$0xff]
    %v384 = vld [vmem:[#allocation8 + $0x130] sm:$0xff]
    %v385 = vld [vmem:[#allocation8 + $0x138] sm:$0xff]
    %v386 = vld [vmem:[#allocation8 + $0x140] sm:$0xff]
    %v387 = vld [vmem:[#allocation8 + $0x148] sm:$0xff]
    %v388 = vld [vmem:[#allocation8 + $0x150] sm:$0xff]
    %v389 = vld [vmem:[#allocation8 + $0x158] sm:$0xff]
    %v390 = vld [vmem:[#allocation8 + $0x160] sm:$0xff]
    %v391 = vld [vmem:[#allocation8 + $0x168] sm:$0xff]
    %v392 = vld [vmem:[#allocation8 + $0x170] sm:$0xff]
    %v393 = vld [vmem:[#allocation8 + $0x178] sm:$0xff]
    %v394 = vld [vmem:[#allocation8 + $0x180] sm:$0xff]
    %v395 = vld [vmem:[#allocation8 + $0x188] sm:$0xff]
    %v396 = vld [vmem:[#allocation8 + $0x190] sm:$0xff]
    %v397 = vld [vmem:[#allocation8 + $0x198] sm:$0xff]
    %v398 = vld [vmem:[#allocation8 + $0x1a0] sm:$0xff]
    %v399 = vld [vmem:[#allocation8 + $0x1a8] sm:$0xff]
    %v400 = vld [vmem:[#allocation8 + $0x1b0] sm:$0xff]
    %v401 = vld [vmem:[#allocation8 + $0x1b8] sm:$0xff]
    %v402 = vld [vmem:[#allocation8 + $0x1c0] sm:$0xff]
    %v403 = vld [vmem:[#allocation8 + $0x1c8] sm:$0xff]
    %v404 = vld [vmem:[#allocation8 + $0x1d0] sm:$0xff]
    %v405 = vld [vmem:[#allocation8 + $0x1d8] sm:$0xff]
    %v406 = vld [vmem:[#allocation8 + $0x1e0] sm:$0xff]
    %v407 = vld [vmem:[#allocation8 + $0x1e8] sm:$0xff]
    %v408 = vld [vmem:[#allocation8 + $0x1f0] sm:$0xff]
    %v409 = vld [vmem:[#allocation8 + $0x1f8] sm:$0xff]
    %410 = vmatprep.subr.mxu0 %v407
    %411 = vmatpush1.msra.mxu0 %v406
    %412 = vmatprep.subr.mxu0 %v403
    %413 = vmatpush1.msra.mxu0 %v402
    %414 = vmatprep.subr.mxu0 %v399
    %415 = vmatpush1.msra.mxu0 %v398
    %416 = vmatprep.subr.mxu0 %v395
    %417 = vmatpush1.msra.mxu0 %v394
    %418 = vmatprep.subr.mxu0 %v391
    %419 = vmatpush1.msra.mxu0 %v390
    %420 = vmatprep.subr.mxu0 %v387
    %421 = vmatpush1.msra.mxu0 %v386
    %422 = vmatprep.subr.mxu0 %v383
    %423 = vmatpush1.msra.mxu0 %v382
    %424 = vmatprep.subr.mxu0 %v379
    %425 = vmatpush1.msra.mxu0 %v378
    %426 = vmatprep.subr.mxu0 %v375
    %427 = vmatpush1.msra.mxu0 %v374
    %428 = vmatprep.subr.mxu0 %v371
    %429 = vmatpush1.msra.mxu0 %v370
    %430 = vmatprep.subr.mxu0 %v367
    %431 = vmatpush1.msra.mxu0 %v366
    %432 = vmatprep.subr.mxu0 %v363
    %433 = vmatpush1.msra.mxu0 %v362
    %434 = vmatprep.subr.mxu0 %v359
    %435 = vmatpush1.msra.mxu0 %v358
    %436 = vmatprep.subr.mxu0 %v355
    %437 = vmatpush1.msra.mxu0 %v354
    %438 = vmatprep.subr.mxu0 %v351
    %439 = vmatpush1.msra.mxu0 %v350
    %440 = vmatprep.subr.mxu0 %v347
    %441 = vmatpush1.msra.mxu0 %v346
    %442 = vmatprep.subr.mxu0 0.0
    %443 = vmatpush2.msra.mxu0 0.0
    %444 = vmatprep.subr.mxu0 0.0
    %445 = vmatpush2.msra.mxu0 0.0
    %446 = vmatprep.subr.mxu0 0.0
    %447 = vmatpush2.msra.mxu0 0.0
    %448 = vmatprep.subr.mxu0 0.0
    %449 = vmatpush2.msra.mxu0 0.0
    %450 = vmatprep.subr.mxu0 0.0
    %451 = vmatpush2.msra.mxu0 0.0
    %452 = vmatprep.subr.mxu0 0.0
    %453 = vmatpush2.msra.mxu0 0.0
    %454 = vmatprep.subr.mxu0 0.0
    %455 = vmatpush2.msra.mxu0 0.0
    %456 = vmatprep.subr.mxu0 0.0
    %457 = vmatpush2.msra.mxu0 0.0
    %458 = vmatprep.subr.mxu0 0.0
    %459 = vmatpush2.msra.mxu0 0.0
    %460 = vmatprep.subr.mxu0 0.0
    %461 = vmatpush2.msra.mxu0 0.0
    %462 = vmatprep.subr.mxu0 0.0
    %463 = vmatpush2.msra.mxu0 0.0
    %464 = vmatprep.subr.mxu0 0.0
    %465 = vmatpush2.msra.mxu0 0.0
    %466 = vmatprep.subr.mxu0 0.0
    %467 = vmatpush2.msra.mxu0 0.0
    %468 = vmatprep.subr.mxu0 0.0
    %469 = vmatpush2.msra.mxu0 0.0
    %470 = vmatprep.subr.mxu0 0.0
    %471 = vmatpush2.msra.mxu0 0.0
    %472 = vmatprep.subr.mxu0 0.0
    %473 = vmatpush2.msra.mxu0 0.0
    %474 = vmatprep.mubr.f32.mxu0 0.0
    %475 = vmatmul.mubr.f32.gmra.mxu0 0.0
    %v476 = vpop.f32.mrf.mxu0
    %v477 = vadd.f32 0.0, %v476
    %v478 = vpop.f32.mrf.mxu0
    %v479 = vadd.f32 0.0, %v478
    %480 = vdwg.mxu0
    %481 = vmatprep.subr.mxu0 %v409
    %482 = vmatpush1.msra.mxu0 %v408
    %483 = vmatprep.subr.mxu0 %v405
    %484 = vmatpush1.msra.mxu0 %v404
    %485 = vmatprep.subr.mxu0 %v401
    %486 = vmatpush1.msra.mxu0 %v400
    %487 = vmatprep.subr.mxu0 %v397
    %488 = vmatpush1.msra.mxu0 %v396
    %489 = vmatprep.subr.mxu0 %v393
    %490 = vmatpush1.msra.mxu0 %v392
    %491 = vmatprep.subr.mxu0 %v389
    %492 = vmatpush1.msra.mxu0 %v388
    %493 = vmatprep.subr.mxu0 %v385
    %494 = vmatpush1.msra.mxu0 %v384
    %495 = vmatprep.subr.mxu0 %v381
    %496 = vmatpush1.msra.mxu0 %v380
    %497 = vmatprep.subr.mxu0 %v377
    %498 = vmatpush1.msra.mxu0 %v376
    %499 = vmatprep.subr.mxu0 %v373
    %500 = vmatpush1.msra.mxu0 %v372
    %501 = vmatprep.subr.mxu0 %v369
    %502 = vmatpush1.msra.mxu0 %v368
    %503 = vmatprep.subr.mxu0 %v365
    %504 = vmatpush1.msra.mxu0 %v364
    %505 = vmatprep.subr.mxu0 %v361
    %506 = vmatpush1.msra.mxu0 %v360
    %507 = vmatprep.subr.mxu0 %v357
    %508 = vmatpush1.msra.mxu0 %v356
    %509 = vmatprep.subr.mxu0 %v353
    %510 = vmatpush1.msra.mxu0 %v352
    %511 = vmatprep.subr.mxu0 %v349
    %512 = vmatpush1.msra.mxu0 %v348
    %513 = vmatprep.subr.mxu0 0.0
    %514 = vmatpush2.msra.mxu0 0.0
    %515 = vmatprep.subr.mxu0 0.0
    %516 = vmatpush2.msra.mxu0 0.0
    %517 = vmatprep.subr.mxu0 0.0
    %518 = vmatpush2.msra.mxu0 0.0
    %519 = vmatprep.subr.mxu0 0.0
    %520 = vmatpush2.msra.mxu0 0.0
    %521 = vmatprep.subr.mxu0 0.0
    %522 = vmatpush2.msra.mxu0 0.0
    %523 = vmatprep.subr.mxu0 0.0
    %524 = vmatpush2.msra.mxu0 0.0
    %525 = vmatprep.subr.mxu0 0.0
    %526 = vmatpush2.msra.mxu0 0.0
    %527 = vmatprep.subr.mxu0 0.0
    %528 = vmatpush2.msra.mxu0 0.0
    %529 = vmatprep.subr.mxu0 0.0
    %530 = vmatpush2.msra.mxu0 0.0
    %531 = vmatprep.subr.mxu0 0.0
    %532 = vmatpush2.msra.mxu0 0.0
    %533 = vmatprep.subr.mxu0 0.0
    %534 = vmatpush2.msra.mxu0 0.0
    %535 = vmatprep.subr.mxu0 0.0
    %536 = vmatpush2.msra.mxu0 0.0
    %537 = vmatprep.subr.mxu0 0.0
    %538 = vmatpush2.msra.mxu0 0.0
    %539 = vmatprep.subr.mxu0 0.0
    %540 = vmatpush2.msra.mxu0 0.0
    %541 = vmatprep.subr.mxu0 0.0
    %542 = vmatpush2.msra.mxu0 0.0
    %543 = vmatprep.subr.mxu0 0.0
    %544 = vmatpush2.msra.mxu0 0.0
    %545 = vmatprep.mubr.f32.mxu0 0.0
    %546 = vmatmul.mubr.f32.gmra.mxu0 0.0
    %v547 = vpop.f32.mrf.mxu0
    %v548 = vadd.f32 0.0, %v547
    %v549 = vpop.f32.mrf.mxu0
    %v550 = vadd.f32 0.0, %v549
    %551 = vdwg.mxu0
    %v552 = vadd.f32 %v259, %v477
    %v553 = vadd.f32 %v261, %v479
    %v554 = vadd.f32 %v336, %v548
    %v555 = vadd.f32 %v338, %v550
    %v556 = vxor.u32 %v552, 2147483648
    %v557 = vxor.u32 %v553, 2147483648
    %v558 = vxor.u32 %v554, 2147483648
    %v559 = vmul.f32 %v556, 1.442695
    %v560 = vpow.pop %v559
    %v561 = vmul.f32 %v557, 1.442695
    %v562 = vpow.pop %v561
    %v563 = vmul.f32 %v558, 1.442695
    %v564 = vpow.pop %v563
    %v565 = vadd.f32 %v560, 1.0
    %v566 = vadd.f32 %v562, 1.0
    %v567 = vadd.f32 %v564, 1.0
    %v568 = vrcp.pop %v565
    %v569 = vmul.f32 1.0, %v568
    %v570 = vrcp.pop %v566
    %v571 = vmul.f32 1.0, %v570
    %v572 = vrcp.pop %v567
    %v573 = vmul.f32 1.0, %v572
    %v574 = vtanh.pop %v555
    %v575 = vmul.f32 %v571, 0.0
    %v576 = vmul.f32 %v569, %v574
    %v577 = vadd.f32 %v575, %v576
    %v578 = vtanh.pop %v577
    %v579 = vmul.f32 %v573, %v578
    %580 = vmatprep.subr.mxu0 %v407
    %581 = vmatpush1.msra.mxu0 %v406
    %582 = vmatprep.subr.mxu0 %v403
    %583 = vmatpush1.msra.mxu0 %v402
    %584 = vmatprep.subr.mxu0 %v399
    %585 = vmatpush1.msra.mxu0 %v398
    %586 = vmatprep.subr.mxu0 %v395
    %587 = vmatpush1.msra.mxu0 %v394
    %588 = vmatprep.subr.mxu0 %v391
    %589 = vmatpush1.msra.mxu0 %v390
    %590 = vmatprep.subr.mxu0 %v387
    %591 = vmatpush1.msra.mxu0 %v386
    %592 = vmatprep.subr.mxu0 %v383
    %593 = vmatpush1.msra.mxu0 %v382
    %594 = vmatprep.subr.mxu0 %v379
    %595 = vmatpush1.msra.mxu0 %v378
    %596 = vmatprep.subr.mxu0 %v375
    %597 = vmatpush1.msra.mxu0 %v374
    %598 = vmatprep.subr.mxu0 %v371
    %599 = vmatpush1.msra.mxu0 %v370
    %600 = vmatprep.subr.mxu0 %v367
    %601 = vmatpush1.msra.mxu0 %v366
    %602 = vmatprep.subr.mxu0 %v363
    %603 = vmatpush1.msra.mxu0 %v362
    %604 = vmatprep.subr.mxu0 %v359
    %605 = vmatpush1.msra.mxu0 %v358
    %606 = vmatprep.subr.mxu0 %v355
    %607 = vmatpush1.msra.mxu0 %v354
    %608 = vmatprep.subr.mxu0 %v351
    %609 = vmatpush1.msra.mxu0 %v350
    %610 = vmatprep.subr.mxu0 %v347
    %611 = vmatpush1.msra.mxu0 %v346
    %612 = vmatprep.subr.mxu0 0.0
    %613 = vmatpush2.msra.mxu0 0.0
    %614 = vmatprep.subr.mxu0 0.0
    %615 = vmatpush2.msra.mxu0 0.0
    %616 = vmatprep.subr.mxu0 0.0
    %617 = vmatpush2.msra.mxu0 0.0
    %618 = vmatprep.subr.mxu0 0.0
    %619 = vmatpush2.msra.mxu0 0.0
    %620 = vmatprep.subr.mxu0 0.0
    %621 = vmatpush2.msra.mxu0 0.0
    %622 = vmatprep.subr.mxu0 0.0
    %623 = vmatpush2.msra.mxu0 0.0
    %624 = vmatprep.subr.mxu0 0.0
    %625 = vmatpush2.msra.mxu0 0.0
    %626 = vmatprep.subr.mxu0 0.0
    %627 = vmatpush2.msra.mxu0 0.0
    %628 = vmatprep.subr.mxu0 0.0
    %629 = vmatpush2.msra.mxu0 0.0
    %630 = vmatprep.subr.mxu0 0.0
    %631 = vmatpush2.msra.mxu0 0.0
    %632 = vmatprep.subr.mxu0 0.0
    %633 = vmatpush2.msra.mxu0 0.0
    %634 = vmatprep.subr.mxu0 0.0
    %635 = vmatpush2.msra.mxu0 0.0
    %636 = vmatprep.subr.mxu0 0.0
    %637 = vmatpush2.msra.mxu0 0.0
    %638 = vmatprep.subr.mxu0 0.0
    %639 = vmatpush2.msra.mxu0 0.0
    %640 = vmatprep.subr.mxu0 0.0
    %641 = vmatpush2.msra.mxu0 0.0
    %642 = vmatprep.subr.mxu0 0.0
    %643 = vmatpush2.msra.mxu0 0.0
    %644 = vmatprep.mubr.f32.mxu0 0.0
    %645 = vmatmul.mubr.f32.gmra.mxu0 %v579
    %v646 = vpop.f32.mrf.mxu0
    %v647 = vadd.f32 0.0, %v646
    %v648 = vpop.f32.mrf.mxu0
    %v649 = vadd.f32 0.0, %v648
    %650 = vdwg.mxu0
    %651 = vmatprep.subr.mxu0 %v409
    %652 = vmatpush1.msra.mxu0 %v408
    %653 = vmatprep.subr.mxu0 %v405
    %654 = vmatpush1.msra.mxu0 %v404
    %655 = vmatprep.subr.mxu0 %v401
    %656 = vmatpush1.msra.mxu0 %v400
    %657 = vmatprep.subr.mxu0 %v397
    %658 = vmatpush1.msra.mxu0 %v396
    %659 = vmatprep.subr.mxu0 %v393
    %660 = vmatpush1.msra.mxu0 %v392
    %661 = vmatprep.subr.mxu0 %v389
    %662 = vmatpush1.msra.mxu0 %v388
    %663 = vmatprep.subr.mxu0 %v385
    %664 = vmatpush1.msra.mxu0 %v384
    %665 = vmatprep.subr.mxu0 %v381
    %666 = vmatpush1.msra.mxu0 %v380
    %667 = vmatprep.subr.mxu0 %v377
    %668 = vmatpush1.msra.mxu0 %v376
    %669 = vmatprep.subr.mxu0 %v373
    %670 = vmatpush1.msra.mxu0 %v372
    %671 = vmatprep.subr.mxu0 %v369
    %672 = vmatpush1.msra.mxu0 %v368
    %673 = vmatprep.subr.mxu0 %v365
    %674 = vmatpush1.msra.mxu0 %v364
    %675 = vmatprep.subr.mxu0 %v361
    %676 = vmatpush1.msra.mxu0 %v360
    %677 = vmatprep.subr.mxu0 %v357
    %678 = vmatpush1.msra.mxu0 %v356
    %679 = vmatprep.subr.mxu0 %v353
    %680 = vmatpush1.msra.mxu0 %v352
    %681 = vmatprep.subr.mxu0 %v349
    %682 = vmatpush1.msra.mxu0 %v348
    %683 = vmatprep.subr.mxu0 0.0
    %684 = vmatpush2.msra.mxu0 0.0
    %685 = vmatprep.subr.mxu0 0.0
    %686 = vmatpush2.msra.mxu0 0.0
    %687 = vmatprep.subr.mxu0 0.0
    %688 = vmatpush2.msra.mxu0 0.0
    %689 = vmatprep.subr.mxu0 0.0
    %690 = vmatpush2.msra.mxu0 0.0
    %691 = vmatprep.subr.mxu0 0.0
    %692 = vmatpush2.msra.mxu0 0.0
    %693 = vmatprep.subr.mxu0 0.0
    %694 = vmatpush2.msra.mxu0 0.0
    %695 = vmatprep.subr.mxu0 0.0
    %696 = vmatpush2.msra.mxu0 0.0
    %697 = vmatprep.subr.mxu0 0.0
    %698 = vmatpush2.msra.mxu0 0.0
    %699 = vmatprep.subr.mxu0 0.0
    %700 = vmatpush2.msra.mxu0 0.0
    %701 = vmatprep.subr.mxu0 0.0
    %702 = vmatpush2.msra.mxu0 0.0
    %703 = vmatprep.subr.mxu0 0.0
    %704 = vmatpush2.msra.mxu0 0.0
    %705 = vmatprep.subr.mxu0 0.0
    %706 = vmatpush2.msra.mxu0 0.0
    %707 = vmatprep.subr.mxu0 0.0
    %708 = vmatpush2.msra.mxu0 0.0
    %709 = vmatprep.subr.mxu0 0.0
    %710 = vmatpush2.msra.mxu0 0.0
    %711 = vmatprep.subr.mxu0 0.0
    %712 = vmatpush2.msra.mxu0 0.0
    %713 = vmatprep.subr.mxu0 0.0
    %714 = vmatpush2.msra.mxu0 0.0
    %715 = vmatprep.mubr.f32.mxu0 0.0
    %716 = vmatmul.mubr.f32.gmra.mxu0 %v579
    %v717 = vpop.f32.mrf.mxu0
    %v718 = vadd.f32 0.0, %v717
    %v719 = vpop.f32.mrf.mxu0
    %v720 = vadd.f32 0.0, %v719
    %721 = vdwg.mxu0
    %v722 = vadd.f32 %v265, %v647
    %v723 = vadd.f32 %v267, %v649
    %v724 = vadd.f32 %v342, %v718
    %v725 = vadd.f32 %v344, %v720
    %v726 = vxor.u32 %v722, 2147483648
    %v727 = vxor.u32 %v723, 2147483648
    %v728 = vxor.u32 %v724, 2147483648
    %v729 = vmul.f32 %v726, 1.442695
    %v730 = vpow.pop %v729
    %v731 = vmul.f32 %v727, 1.442695
    %v732 = vpow.pop %v731
    %v733 = vmul.f32 %v728, 1.442695
    %v734 = vpow.pop %v733
    %v735 = vadd.f32 %v730, 1.0
    %v736 = vadd.f32 %v732, 1.0
    %v737 = vadd.f32 %v734, 1.0
    %v738 = vrcp.pop %v735
    %v739 = vmul.f32 1.0, %v738
    %v740 = vrcp.pop %v736
    %v741 = vmul.f32 1.0, %v740
    %v742 = vrcp.pop %v737
    %v743 = vmul.f32 1.0, %v742
    %v744 = vtanh.pop %v725
    %v745 = vmul.f32 %v741, %v577
    %v746 = vmul.f32 %v739, %v744
    %v747 = vadd.f32 %v745, %v746
    %v748 = vtanh.pop %v747
    %v749 = vmul.f32 %v743, %v748
    %v750 = vld [vmem:[%s4] sm:$0x1]
    %v752 = vlaneseq
    %v753 = vshrl.u32 %v752, 7
    %v754 = vsub.s32 0, %v753
    %v755 = vrot.slane %v750, %v754
    %v757 = vmul.f32 %v579, %v755
    %v758 = vmul.f32 %v749, %v755
    %759 = vadd.xlane.f32.xlu0 %v757
    %v760 = vpop.xlane.xlu0 %759
    %761 = vadd.xlane.f32.xlu0 %v758
    %v762 = vpop.xlane.xlu0 %761
    %v763 = vld [vmem:[#allocation2] sm:$0x1]
    %v765 = vlaneseq
    %v766 = vshrl.u32 %v765, 7
    %v767 = vsub.s32 0, %v766
    %v768 = vrot.slane %v763, %v767
    %769 = vset.pattern.permute.xlu0 0
    %770 = vperm.xlu0 %769, %v768
    %v771 = vpop.permute.xlu0 %770
    %v773 = vadd.f32 %v760, %v771
    %v774 = vadd.f32 %v762, %v771
    %v777 = vlaneseq
    %v778 = vand.u32 %v777, 127
    %v779 = vlaneseq
    %v780 = vshrl.u32 %v779, 7
    %v781 = vsub.s32 %v778, %v780
    %v782 = vrot.slane %v773, %v781
    %v783 = vlaneseq
    %v784 = vshrl.u32 %v783, 7
    %v785 = vsub.s32 %v778, %v784
    %v786 = vrot.slane %v774, %v785
    %vm787 = vcmask 1041409
    %v788 = vsel %vm787, %v786, %v782
    %vm790 = vcmask 58368
    %v791 = vsel %vm790, %v788, -inf
    %792 = vmax.xlane.f32.xlu0 %v791
    %v793 = vpop.xlane.xlu0 %792
    %v795 = vlaneseq
    %v796 = vshrl.u32 %v795, 7
    %v797 = vsub.s32 0, %v796
    %v798 = vrot.slane %v793, %v797
    %v799 = vlaneseq
    %v800 = vshrl.u32 %v799, 7
    %v801 = vsub.s32 1, %v800
    %v802 = vrot.slane %v793, %v801
    %v805 = vsub.f32 %v773, %v798
    %v806 = vsub.f32 %v774, %v802
    %v807 = vmul.f32 %v805, 1.442695
    %v808 = vpow.pop %v807
    %v809 = vmul.f32 %v806, 1.442695
    %v810 = vpow.pop %v809
    %813 = vset.pattern.permute.xlu0 0
    %814 = vperm.xlu0 %813, %v808
    %v815 = vpop.permute.xlu0 %814
    %816 = vset.pattern.permute.xlu0 0
    %817 = vperm.xlu0 %816, %v810
    %v818 = vpop.permute.xlu0 %817
    %v819 = vlaneseq
    %v820 = vshrl.u32 %v819, 7
    %v821 = vsub.s32 %v778, %v820
    %v822 = vrot.slane %v815, %v821
    %v823 = vlaneseq
    %v824 = vshrl.u32 %v823, 7
    %v825 = vsub.s32 %v778, %v824
    %v826 = vrot.slane %v818, %v825
    %v827 = vsel %vm787, %v826, %v822
    %v829 = vsel %vm790, %v827, 0.0
    %830 = vadd.xlane.f32.xlu0 %v829
    %v831 = vpop.xlane.xlu0 %830
    %v832 = vrcp.pop %v831
    %v834 = vlaneseq
    %v835 = vshrl.u32 %v834, 7
    %v836 = vsub.s32 0, %v835
    %v837 = vrot.slane %v832, %v836
    %v838 = vlaneseq
    %v839 = vshrl.u32 %v838, 7
    %v840 = vsub.s32 1, %v839
    %v841 = vrot.slane %v832, %v840
    %v844 = vmul.f32 %v808, %v837
    %v845 = vmul.f32 %v810, %v841
    %847 = vset.pattern.permute.xlu0 0
    %848 = vperm.xlu0 %847, %v844
    %v849 = vpop.permute.xlu0 %848
    %852 = vset.pattern.permute.xlu0 0
    %853 = vperm.xlu0 %852, %v845
    %v854 = vpop.permute.xlu0 %853
    %v856 = vmul.f32 %v849, %v579
    %v857 = vmul.f32 %v854, %v749
    %v858 = vrot.slane %v856, 4
    %v859 = vadd.f32 %v856, %v858
    %v860 = vrot.slane %v859, 2
    %v861 = vadd.f32 %v859, %v860
    %v862 = vrot.slane %v861, 1
    %v863 = vadd.f32 %v861, %v862
    %v864 = vrot.slane %v857, 4
    %v865 = vadd.f32 %v857, %v864
    %v866 = vrot.slane %v865, 2
    %v867 = vadd.f32 %v865, %v866
    %v868 = vrot.slane %v867, 1
    %v869 = vadd.f32 %v867, %v868
    %v870 = vld [vmem:[%s7] sm:$0x1]
    %v871 = vcombine.high %v145, %v145
    %v873 = vunpack.c.l.s4 1983009808
    %v874 = vunpack.c.0.s8 %v873
    %v875 = vlaneseq
    %v876 = vshrl.u32 %v875, 7
    %v877 = vsub.s32 %v874, %v876
    %v878 = vrot.slane %v145, %v877
    %v880 = vunpack.c.l.s4 1983009808
    %v881 = vunpack.c.0.s8 %v880
    %v882 = vlaneseq
    %v883 = vshrl.u32 %v882, 7
    %v884 = vsub.s32 %v881, %v883
    %v885 = vrot.slane %v871, %v884
    %v886 = vcombine.high %v878, %v878
    %v887 = vcombine.high %v146, %v146
    %v889 = vunpack.c.l.s4 1983009808
    %v890 = vunpack.c.0.s8 %v889
    %v891 = vlaneseq
    %v892 = vshrl.u32 %v891, 7
    %v893 = vsub.s32 %v890, %v892
    %v894 = vrot.slane %v146, %v893
    %v896 = vunpack.c.l.s4 1983009808
    %v897 = vunpack.c.0.s8 %v896
    %v898 = vlaneseq
    %v899 = vshrl.u32 %v898, 7
    %v900 = vsub.s32 %v897, %v899
    %v901 = vrot.slane %v887, %v900
    %v902 = vcombine.high %v894, %v894
    %v903 = vld [vmem:[#allocation9] sm:$0xff]
    %v904 = vld [vmem:[#allocation9 + $0x8] sm:$0xff]
    %v905 = vld [vmem:[#allocation9 + $0x10] sm:$0xff]
    %v906 = vld [vmem:[#allocation9 + $0x18] sm:$0xff]
    %v907 = vcombine.high %v885, %v885
    %v908 = vcombine.high %v901, %v901
    %vm909 = vcmask 1040384
    %vm910 = vcmask 1042434
    %vm911 = vmor %vm909, %vm910
    %vm912 = vcmask 1044484
    %vm913 = vmor %vm911, %vm912
    %vm914 = vcmask 1046534
    %vm915 = vmor %vm913, %vm914
    %v916 = vrot.slane %v878, 7
    %v917 = vrot.slane %v916, 2
    %v918 = vrot.slane %v886, 7
    %v919 = vsel %vm915, %v917, %v918
    %v920 = vrot.slane %v918, 2
    %v921 = vrot.slane %v885, 7
    %v922 = vsel %vm915, %v920, %v921
    %v923 = vrot.slane %v921, 2
    %v924 = vrot.slane %v907, 7
    %v925 = vsel %vm915, %v923, %v924
    %v926 = vrot.slane %v894, 7
    %v927 = vrot.slane %v926, 2
    %v928 = vrot.slane %v902, 7
    %v929 = vsel %vm915, %v927, %v928
    %v930 = vrot.slane %v928, 2
    %v931 = vrot.slane %v901, 7
    %v932 = vsel %vm915, %v930, %v931
    %v933 = vrot.slane %v931, 2
    %v934 = vrot.slane %v908, 7
    %v935 = vsel %vm915, %v933, %v934
    %s936 = scalar_lea.vmem [#allocation9], 32
    %v937 = vld [vmem:[%s936] sm:$0xff]
    %v938 = vld [vmem:[%s936 + $0x8] sm:$0xff]
    %v939 = vld [vmem:[%s936 + $0x10] sm:$0xff]
    %v940 = vld [vmem:[%s936 + $0x18] sm:$0xff]
    %v941 = vcombine.low %v919, %v922
    %v942 = vcombine.low %v925, %v929
    %v944 = vunpack.c.l.s4 1983009808
    %v945 = vunpack.c.0.s8 %v944
    %v946 = vlaneseq
    %v947 = vshrl.u32 %v946, 7
    %v948 = vsub.s32 %v945, %v947
    %v949 = vrot.slane %v941, %v948
    %v951 = vunpack.c.l.s4 1983009808
    %v952 = vunpack.c.0.s8 %v951
    %v953 = vlaneseq
    %v954 = vshrl.u32 %v953, 7
    %v955 = vsub.s32 %v952, %v954
    %v956 = vrot.slane %v942, %v955
    %v957 = vcombine.low %v949, %v956
    %v958 = vcombine.low %v932, %v935
    %v960 = vunpack.c.l.s4 1983009808
    %v961 = vunpack.c.0.s8 %v960
    %v962 = vlaneseq
    %v963 = vshrl.u32 %v962, 7
    %v964 = vsub.s32 %v961, %v963
    %v965 = vrot.slane %v958, %v964
    %v966 = vsel %vm185, %v957, 0
    %v968 = vsel %vm185, %v965, 0
    %970 = vmatprep.subr.mxu0 0.0
    %971 = vmatpush1.msra.mxu0 0.0
    %972 = vmatprep.subr.mxu0 0.0
    %973 = vmatpush1.msra.mxu0 0.0
    %974 = vmatprep.subr.mxu0 0.0
    %975 = vmatpush1.msra.mxu0 0.0
    %976 = vmatprep.subr.mxu0 0.0
    %977 = vmatpush1.msra.mxu0 0.0
    %978 = vmatprep.subr.mxu0 0.0
    %979 = vmatpush1.msra.mxu0 0.0
    %980 = vmatprep.subr.mxu0 0.0
    %981 = vmatpush1.msra.mxu0 0.0
    %982 = vmatprep.subr.mxu0 0.0
    %983 = vmatpush1.msra.mxu0 0.0
    %984 = vmatprep.subr.mxu0 0.0
    %985 = vmatpush1.msra.mxu0 0.0
    %986 = vmatprep.subr.mxu0 0.0
    %987 = vmatpush1.msra.mxu0 0.0
    %988 = vmatprep.subr.mxu0 0.0
    %989 = vmatpush1.msra.mxu0 0.0
    %990 = vmatprep.subr.mxu0 0.0
    %991 = vmatpush1.msra.mxu0 0.0
    %992 = vmatprep.subr.mxu0 0.0
    %993 = vmatpush1.msra.mxu0 0.0
    %994 = vmatprep.subr.mxu0 0.0
    %995 = vmatpush1.msra.mxu0 %v940
    %996 = vmatprep.subr.mxu0 0.0
    %997 = vmatpush1.msra.mxu0 %v939
    %998 = vmatprep.subr.mxu0 0.0
    %999 = vmatpush1.msra.mxu0 %v938
    %1000 = vmatprep.subr.mxu0 0.0
    %1001 = vmatpush1.msra.mxu0 %v937
    %1002 = vmatprep.subr.mxu0 0.0
    %1003 = vmatpush2.msra.mxu0 0.0
    %1004 = vmatprep.subr.mxu0 0.0
    %1005 = vmatpush2.msra.mxu0 0.0
    %1006 = vmatprep.subr.mxu0 0.0
    %1007 = vmatpush2.msra.mxu0 0.0
    %1008 = vmatprep.subr.mxu0 0.0
    %1009 = vmatpush2.msra.mxu0 0.0
    %1010 = vmatprep.subr.mxu0 0.0
    %1011 = vmatpush2.msra.mxu0 0.0
    %1012 = vmatprep.subr.mxu0 0.0
    %1013 = vmatpush2.msra.mxu0 0.0
    %1014 = vmatprep.subr.mxu0 0.0
    %1015 = vmatpush2.msra.mxu0 0.0
    %1016 = vmatprep.subr.mxu0 0.0
    %1017 = vmatpush2.msra.mxu0 0.0
    %1018 = vmatprep.subr.mxu0 0.0
    %1019 = vmatpush2.msra.mxu0 0.0
    %1020 = vmatprep.subr.mxu0 0.0
    %1021 = vmatpush2.msra.mxu0 0.0
    %1022 = vmatprep.subr.mxu0 0.0
    %1023 = vmatpush2.msra.mxu0 0.0
    %1024 = vmatprep.subr.mxu0 0.0
    %1025 = vmatpush2.msra.mxu0 0.0
    %1026 = vmatprep.subr.mxu0 0.0
    %1027 = vmatpush2.msra.mxu0 0.0
    %1028 = vmatprep.subr.mxu0 0.0
    %1029 = vmatpush2.msra.mxu0 0.0
    %1030 = vmatprep.subr.mxu0 0.0
    %1031 = vmatpush2.msra.mxu0 0.0
    %1032 = vmatprep.subr.mxu0 0.0
    %1033 = vmatpush2.msra.mxu0 0.0
    %1034 = vmatprep.mubr.f32.mxu0 0.0
    %1035 = vmatmul.mubr.f32.gmra.mxu0 %v966
    %v1036 = vpop.f32.mrf.mxu0
    %v1037 = vadd.f32 0.0, %v1036
    %v1038 = vpop.f32.mrf.mxu0
    %1039 = vmatprep.mubr.f32.mxu0 0.0
    %1040 = vmatmul.mubr.f32.gmra.mxu0 %v968
    %v1041 = vpop.f32.mrf.mxu0
    %v1042 = vadd.f32 0.0, %v1041
    %v1043 = vpop.f32.mrf.mxu0
    %1044 = vdwg.mxu0
    %v1045 = vcombine.low %v878, %v886
    %v1046 = vcombine.low %v885, %v894
    %v1048 = vunpack.c.l.s4 1983009808
    %v1049 = vunpack.c.0.s8 %v1048
    %v1050 = vlaneseq
    %v1051 = vshrl.u32 %v1050, 7
    %v1052 = vsub.s32 %v1049, %v1051
    %v1053 = vrot.slane %v1045, %v1052
    %v1055 = vunpack.c.l.s4 1983009808
    %v1056 = vunpack.c.0.s8 %v1055
    %v1057 = vlaneseq
    %v1058 = vshrl.u32 %v1057, 7
    %v1059 = vsub.s32 %v1056, %v1058
    %v1060 = vrot.slane %v1046, %v1059
    %v1061 = vcombine.low %v1053, %v1060
    %v1062 = vcombine.low %v902, %v901
    %v1064 = vunpack.c.l.s4 1983009808
    %v1065 = vunpack.c.0.s8 %v1064
    %v1066 = vlaneseq
    %v1067 = vshrl.u32 %v1066, 7
    %v1068 = vsub.s32 %v1065, %v1067
    %v1069 = vrot.slane %v1062, %v1068
    %v1070 = vsel %vm185, %v1061, 0
    %v1072 = vsel %vm185, %v1069, 0
    %1074 = vmatprep.subr.mxu0 0.0
    %1075 = vmatpush1.msra.mxu0 0.0
    %1076 = vmatprep.subr.mxu0 0.0
    %1077 = vmatpush1.msra.mxu0 0.0
    %1078 = vmatprep.subr.mxu0 0.0
    %1079 = vmatpush1.msra.mxu0 0.0
    %1080 = vmatprep.subr.mxu0 0.0
    %1081 = vmatpush1.msra.mxu0 0.0
    %1082 = vmatprep.subr.mxu0 0.0
    %1083 = vmatpush1.msra.mxu0 0.0
    %1084 = vmatprep.subr.mxu0 0.0
    %1085 = vmatpush1.msra.mxu0 0.0
    %1086 = vmatprep.subr.mxu0 0.0
    %1087 = vmatpush1.msra.mxu0 0.0
    %1088 = vmatprep.subr.mxu0 0.0
    %1089 = vmatpush1.msra.mxu0 0.0
    %1090 = vmatprep.subr.mxu0 0.0
    %1091 = vmatpush1.msra.mxu0 0.0
    %1092 = vmatprep.subr.mxu0 0.0
    %1093 = vmatpush1.msra.mxu0 0.0
    %1094 = vmatprep.subr.mxu0 0.0
    %1095 = vmatpush1.msra.mxu0 0.0
    %1096 = vmatprep.subr.mxu0 0.0
    %1097 = vmatpush1.msra.mxu0 0.0
    %1098 = vmatprep.subr.mxu0 0.0
    %1099 = vmatpush1.msra.mxu0 %v906
    %1100 = vmatprep.subr.mxu0 0.0
    %1101 = vmatpush1.msra.mxu0 %v905
    %1102 = vmatprep.subr.mxu0 0.0
    %1103 = vmatpush1.msra.mxu0 %v904
    %1104 = vmatprep.subr.mxu0 0.0
    %1105 = vmatpush1.msra.mxu0 %v903
    %1106 = vmatprep.subr.mxu0 0.0
    %1107 = vmatpush2.msra.mxu0 0.0
    %1108 = vmatprep.subr.mxu0 0.0
    %1109 = vmatpush2.msra.mxu0 0.0
    %1110 = vmatprep.subr.mxu0 0.0
    %1111 = vmatpush2.msra.mxu0 0.0
    %1112 = vmatprep.subr.mxu0 0.0
    %1113 = vmatpush2.msra.mxu0 0.0
    %1114 = vmatprep.subr.mxu0 0.0
    %1115 = vmatpush2.msra.mxu0 0.0
    %1116 = vmatprep.subr.mxu0 0.0
    %1117 = vmatpush2.msra.mxu0 0.0
    %1118 = vmatprep.subr.mxu0 0.0
    %1119 = vmatpush2.msra.mxu0 0.0
    %1120 = vmatprep.subr.mxu0 0.0
    %1121 = vmatpush2.msra.mxu0 0.0
    %1122 = vmatprep.subr.mxu0 0.0
    %1123 = vmatpush2.msra.mxu0 0.0
    %1124 = vmatprep.subr.mxu0 0.0
    %1125 = vmatpush2.msra.mxu0 0.0
    %1126 = vmatprep.subr.mxu0 0.0
    %1127 = vmatpush2.msra.mxu0 0.0
    %1128 = vmatprep.subr.mxu0 0.0
    %1129 = vmatpush2.msra.mxu0 0.0
    %1130 = vmatprep.subr.mxu0 0.0
    %1131 = vmatpush2.msra.mxu0 0.0
    %1132 = vmatprep.subr.mxu0 0.0
    %1133 = vmatpush2.msra.mxu0 0.0
    %1134 = vmatprep.subr.mxu0 0.0
    %1135 = vmatpush2.msra.mxu0 0.0
    %1136 = vmatprep.subr.mxu0 0.0
    %1137 = vmatpush2.msra.mxu0 0.0
    %1138 = vmatprep.mubr.f32.mxu0 0.0
    %1139 = vmatmul.mubr.f32.gmra.mxu0 %v1070
    %v1140 = vpop.f32.mrf.mxu0
    %v1141 = vadd.f32 %v1037, %v1140
    %v1142 = vpop.f32.mrf.mxu0
    %1143 = vmatprep.mubr.f32.mxu0 0.0
    %1144 = vmatmul.mubr.f32.gmra.mxu0 %v1072
    %v1145 = vpop.f32.mrf.mxu0
    %v1146 = vadd.f32 %v1042, %v1145
    %v1147 = vpop.f32.mrf.mxu0
    %1148 = vdwg.mxu0
    %s1149 = scalar_lea.vmem [#allocation9], 64
    %v1150 = vld [vmem:[%s1149] sm:$0xff]
    %v1151 = vld [vmem:[%s1149 + $0x8] sm:$0xff]
    %v1152 = vld [vmem:[%s1149 + $0x10] sm:$0xff]
    %v1153 = vld [vmem:[%s1149 + $0x18] sm:$0xff]
    %v1154 = vcombine.low %v886, %v885
    %v1155 = vcombine.low %v907, %v902
    %v1157 = vunpack.c.l.s4 1983009808
    %v1158 = vunpack.c.0.s8 %v1157
    %v1159 = vlaneseq
    %v1160 = vshrl.u32 %v1159, 7
    %v1161 = vsub.s32 %v1158, %v1160
    %v1162 = vrot.slane %v1154, %v1161
    %v1164 = vunpack.c.l.s4 1983009808
    %v1165 = vunpack.c.0.s8 %v1164
    %v1166 = vlaneseq
    %v1167 = vshrl.u32 %v1166, 7
    %v1168 = vsub.s32 %v1165, %v1167
    %v1169 = vrot.slane %v1155, %v1168
    %v1170 = vcombine.low %v1162, %v1169
    %v1171 = vcombine.low %v901, %v908
    %v1173 = vunpack.c.l.s4 1983009808
    %v1174 = vunpack.c.0.s8 %v1173
    %v1175 = vlaneseq
    %v1176 = vshrl.u32 %v1175, 7
    %v1177 = vsub.s32 %v1174, %v1176
    %v1178 = vrot.slane %v1171, %v1177
    %v1179 = vsel %vm185, %v1170, 0
    %v1181 = vsel %vm185, %v1178, 0
    %1183 = vmatprep.subr.mxu0 0.0
    %1184 = vmatpush1.msra.mxu0 0.0
    %1185 = vmatprep.subr.mxu0 0.0
    %1186 = vmatpush1.msra.mxu0 0.0
    %1187 = vmatprep.subr.mxu0 0.0
    %1188 = vmatpush1.msra.mxu0 0.0
    %1189 = vmatprep.subr.mxu0 0.0
    %1190 = vmatpush1.msra.mxu0 0.0
    %1191 = vmatprep.subr.mxu0 0.0
    %1192 = vmatpush1.msra.mxu0 0.0
    %1193 = vmatprep.subr.mxu0 0.0
    %1194 = vmatpush1.msra.mxu0 0.0
    %1195 = vmatprep.subr.mxu0 0.0
    %1196 = vmatpush1.msra.mxu0 0.0
    %1197 = vmatprep.subr.mxu0 0.0
    %1198 = vmatpush1.msra.mxu0 0.0
    %1199 = vmatprep.subr.mxu0 0.0
    %1200 = vmatpush1.msra.mxu0 0.0
    %1201 = vmatprep.subr.mxu0 0.0
    %1202 = vmatpush1.msra.mxu0 0.0
    %1203 = vmatprep.subr.mxu0 0.0
    %1204 = vmatpush1.msra.mxu0 0.0
    %1205 = vmatprep.subr.mxu0 0.0
    %1206 = vmatpush1.msra.mxu0 0.0
    %1207 = vmatprep.subr.mxu0 0.0
    %1208 = vmatpush1.msra.mxu0 %v1153
    %1209 = vmatprep.subr.mxu0 0.0
    %1210 = vmatpush1.msra.mxu0 %v1152
    %1211 = vmatprep.subr.mxu0 0.0
    %1212 = vmatpush1.msra.mxu0 %v1151
    %1213 = vmatprep.subr.mxu0 0.0
    %1214 = vmatpush1.msra.mxu0 %v1150
    %1215 = vmatprep.subr.mxu0 0.0
    %1216 = vmatpush2.msra.mxu0 0.0
    %1217 = vmatprep.subr.mxu0 0.0
    %1218 = vmatpush2.msra.mxu0 0.0
    %1219 = vmatprep.subr.mxu0 0.0
    %1220 = vmatpush2.msra.mxu0 0.0
    %1221 = vmatprep.subr.mxu0 0.0
    %1222 = vmatpush2.msra.mxu0 0.0
    %1223 = vmatprep.subr.mxu0 0.0
    %1224 = vmatpush2.msra.mxu0 0.0
    %1225 = vmatprep.subr.mxu0 0.0
    %1226 = vmatpush2.msra.mxu0 0.0
    %1227 = vmatprep.subr.mxu0 0.0
    %1228 = vmatpush2.msra.mxu0 0.0
    %1229 = vmatprep.subr.mxu0 0.0
    %1230 = vmatpush2.msra.mxu0 0.0
    %1231 = vmatprep.subr.mxu0 0.0
    %1232 = vmatpush2.msra.mxu0 0.0
    %1233 = vmatprep.subr.mxu0 0.0
    %1234 = vmatpush2.msra.mxu0 0.0
    %1235 = vmatprep.subr.mxu0 0.0
    %1236 = vmatpush2.msra.mxu0 0.0
    %1237 = vmatprep.subr.mxu0 0.0
    %1238 = vmatpush2.msra.mxu0 0.0
    %1239 = vmatprep.subr.mxu0 0.0
    %1240 = vmatpush2.msra.mxu0 0.0
    %1241 = vmatprep.subr.mxu0 0.0
    %1242 = vmatpush2.msra.mxu0 0.0
    %1243 = vmatprep.subr.mxu0 0.0
    %1244 = vmatpush2.msra.mxu0 0.0
    %1245 = vmatprep.subr.mxu0 0.0
    %1246 = vmatpush2.msra.mxu0 0.0
    %1247 = vmatprep.mubr.f32.mxu0 0.0
    %1248 = vmatmul.mubr.f32.gmra.mxu0 %v1179
    %v1249 = vpop.f32.mrf.mxu0
    %v1250 = vadd.f32 0.0, %v1249
    %v1251 = vpop.f32.mrf.mxu0
    %1252 = vmatprep.mubr.f32.mxu0 0.0
    %1253 = vmatmul.mubr.f32.gmra.mxu0 %v1181
    %v1254 = vpop.f32.mrf.mxu0
    %v1255 = vadd.f32 0.0, %v1254
    %v1256 = vpop.f32.mrf.mxu0
    %1257 = vdwg.mxu0
    %v1258 = vadd.f32 %v1141, %v1250
    %v1259 = vadd.f32 %v1146, %v1255
    %v1261 = vlaneseq
    %v1262 = vshrl.u32 %v1261, 7
    %v1263 = vsub.s32 0, %v1262
    %v1264 = vrot.slane %v870, %v1263
    %v1266 = vadd.f32 %v1258, %v1264
    %v1267 = vadd.f32 %v1259, %v1264
    %v1268 = vmax.f32 %v1266, 0.0
    %v1269 = vmax.f32 %v1267, 0.0
    %v1272 = vcombine.high %v1268, %v1268
    %v1274 = vunpack.c.l.s4 1983009808
    %v1275 = vunpack.c.0.s8 %v1274
    %v1276 = vlaneseq
    %v1277 = vshrl.u32 %v1276, 7
    %v1278 = vsub.s32 %v1275, %v1277
    %v1279 = vrot.slane %v1268, %v1278
    %v1281 = vunpack.c.l.s4 1983009808
    %v1282 = vunpack.c.0.s8 %v1281
    %v1283 = vlaneseq
    %v1284 = vshrl.u32 %v1283, 7
    %v1285 = vsub.s32 %v1282, %v1284
    %v1286 = vrot.slane %v1272, %v1285
    %v1287 = vcombine.high %v1279, %v1279
    %v1288 = vcombine.high %v1286, %v1286
    %v1290 = vunpack.c.l.s4 1983009808
    %v1291 = vunpack.c.0.s8 %v1290
    %v1292 = vlaneseq
    %v1293 = vshrl.u32 %v1292, 7
    %v1294 = vsub.s32 %v1291, %v1293
    %v1295 = vrot.slane %v1269, %v1294
    %v1296 = vcombine.high %v1295, %v1295
    %v1297 = vcombine.low %v1279, %v1287
    %v1299 = vunpack.c.l.s4 1983009808
    %v1300 = vunpack.c.0.s8 %v1299
    %v1301 = vlaneseq
    %v1302 = vshrl.u32 %v1301, 7
    %v1303 = vsub.s32 %v1300, %v1302
    %v1304 = vrot.slane %v1297, %v1303
    %v1306 = vunpack.c.l.s4 1983009808
    %v1307 = vunpack.c.0.s8 %v1306
    %v1308 = vlaneseq
    %v1309 = vshrl.u32 %v1308, 7
    %v1310 = vsub.s32 %v1307, %v1309
    %v1311 = vrot.slane %v1286, %v1310
    %v1312 = vcombine.low %v1304, %v1311
    %v1313 = vcombine.low %v1288, %v1295
    %v1315 = vunpack.c.l.s4 1983009808
    %v1316 = vunpack.c.0.s8 %v1315
    %v1317 = vlaneseq
    %v1318 = vshrl.u32 %v1317, 7
    %v1319 = vsub.s32 %v1316, %v1318
    %v1320 = vrot.slane %v1313, %v1319
    %v1322 = vunpack.c.l.s4 1983009808
    %v1323 = vunpack.c.0.s8 %v1322
    %v1324 = vlaneseq
    %v1325 = vshrl.u32 %v1324, 7
    %v1326 = vsub.s32 %v1323, %v1325
    %v1327 = vrot.slane %v1296, %v1326
    %v1328 = vcombine.low %v1320, %v1327
    %vm1331 = vcmask 1045504
    %v1332 = vsel %vm1331, %v1312, -inf
    %v1333 = vrot.slane %v1332, 4
    %v1334 = vmax.f32 %v1332, %v1333
    %v1335 = vrot.slane %v1334, 2
    %v1336 = vmax.f32 %v1334, %v1335
    %v1337 = vrot.slane %v1336, 1
    %v1338 = vmax.f32 %v1336, %v1337
    %v1339 = vsel %vm1331, %v1328, -inf
    %v1340 = vrot.slane %v1339, 4
    %v1341 = vmax.f32 %v1339, %v1340
    %v1342 = vrot.slane %v1341, 2
    %v1343 = vmax.f32 %v1341, %v1342
    %v1344 = vrot.slane %v1343, 1
    %v1345 = vmax.f32 %v1343, %v1344
    %v1346 = vld [vmem:[%s9] sm:$0x1]
    %v1348 = vunpack.c.l.s4 1966171168
    %v1349 = vunpack.c.0.s8 %v1348
    %v1350 = vlaneseq
    %v1351 = vshrl.u32 %v1350, 7
    %v1352 = vsub.s32 %v1349, %v1351
    %v1353 = vrot.slane %v145, %v1352
    %v1355 = vunpack.c.l.s4 1966171168
    %v1356 = vunpack.c.0.s8 %v1355
    %v1357 = vlaneseq
    %v1358 = vshrl.u32 %v1357, 7
    %v1359 = vsub.s32 %v1356, %v1358
    %v1360 = vrot.slane %v871, %v1359
    %v1361 = vcombine.high %v1353, %v1353
    %v1363 = vunpack.c.l.s4 1966171168
    %v1364 = vunpack.c.0.s8 %v1363
    %v1365 = vlaneseq
    %v1366 = vshrl.u32 %v1365, 7
    %v1367 = vsub.s32 %v1364, %v1366
    %v1368 = vrot.slane %v1353, %v1367
    %v1370 = vunpack.c.l.s4 1966171168
    %v1371 = vunpack.c.0.s8 %v1370
    %v1372 = vlaneseq
    %v1373 = vshrl.u32 %v1372, 7
    %v1374 = vsub.s32 %v1371, %v1373
    %v1375 = vrot.slane %v1360, %v1374
    %v1377 = vunpack.c.l.s4 1966171168
    %v1378 = vunpack.c.0.s8 %v1377
    %v1379 = vlaneseq
    %v1380 = vshrl.u32 %v1379, 7
    %v1381 = vsub.s32 %v1378, %v1380
    %v1382 = vrot.slane %v1361, %v1381
    %v1383 = vcombine.high %v1368, %v1368
    %v1384 = vcombine.high %v1382, %v1382
    %v1386 = vunpack.c.l.s4 1966171168
    %v1387 = vunpack.c.0.s8 %v1386
    %v1388 = vlaneseq
    %v1389 = vshrl.u32 %v1388, 7
    %v1390 = vsub.s32 %v1387, %v1389
    %v1391 = vrot.slane %v146, %v1390
    %v1393 = vunpack.c.l.s4 1966171168
    %v1394 = vunpack.c.0.s8 %v1393
    %v1395 = vlaneseq
    %v1396 = vshrl.u32 %v1395, 7
    %v1397 = vsub.s32 %v1394, %v1396
    %v1398 = vrot.slane %v887, %v1397
    %v1399 = vcombine.high %v1391, %v1391
    %v1401 = vunpack.c.l.s4 1966171168
    %v1402 = vunpack.c.0.s8 %v1401
    %v1403 = vlaneseq
    %v1404 = vshrl.u32 %v1403, 7
    %v1405 = vsub.s32 %v1402, %v1404
    %v1406 = vrot.slane %v1391, %v1405
    %v1408 = vunpack.c.l.s4 1966171168
    %v1409 = vunpack.c.0.s8 %v1408
    %v1410 = vlaneseq
    %v1411 = vshrl.u32 %v1410, 7
    %v1412 = vsub.s32 %v1409, %v1411
    %v1413 = vrot.slane %v1398, %v1412
    %v1415 = vunpack.c.l.s4 1966171168
    %v1416 = vunpack.c.0.s8 %v1415
    %v1417 = vlaneseq
    %v1418 = vshrl.u32 %v1417, 7
    %v1419 = vsub.s32 %v1416, %v1418
    %v1420 = vrot.slane %v1399, %v1419
    %v1421 = vcombine.high %v1406, %v1406
    %v1422 = vcombine.high %v1420, %v1420
    %v1423 = vld [vmem:[#allocation11] sm:$0xff]
    %v1424 = vld [vmem:[#allocation11 + $0x8] sm:$0xff]
    %v1425 = vld [vmem:[#allocation11 + $0x10] sm:$0xff]
    %v1426 = vld [vmem:[#allocation11 + $0x18] sm:$0xff]
    %v1427 = vcombine.high %v1360, %v1360
    %v1429 = vunpack.c.l.s4 1966171168
    %v1430 = vunpack.c.0.s8 %v1429
    %v1431 = vlaneseq
    %v1432 = vshrl.u32 %v1431, 7
    %v1433 = vsub.s32 %v1430, %v1432
    %v1434 = vrot.slane %v1427, %v1433
    %v1435 = vcombine.high %v1398, %v1398
    %v1437 = vunpack.c.l.s4 1966171168
    %v1438 = vunpack.c.0.s8 %v1437
    %v1439 = vlaneseq
    %v1440 = vshrl.u32 %v1439, 7
    %v1441 = vsub.s32 %v1438, %v1440
    %v1442 = vrot.slane %v1435, %v1441
    %s1443 = scalar_lea.vmem [#allocation11], 32
    %v1444 = vld [vmem:[%s1443] sm:$0xff]
    %v1445 = vld [vmem:[%s1443 + $0x8] sm:$0xff]
    %v1446 = vld [vmem:[%s1443 + $0x10] sm:$0xff]
    %v1447 = vld [vmem:[%s1443 + $0x18] sm:$0xff]
    %v1448 = vcombine.low %v1382, %v1383
    %v1449 = vcombine.low %v1384, %v1375
    %v1450 = vcombine.low %v1434, %v1420
    %v1451 = vcombine.low %v1421, %v1422
    %v1453 = vunpack.c.l.s4 1966171168
    %v1454 = vunpack.c.0.s8 %v1453
    %v1455 = vlaneseq
    %v1456 = vshrl.u32 %v1455, 7
    %v1457 = vsub.s32 %v1454, %v1456
    %v1458 = vrot.slane %v1448, %v1457
    %v1460 = vunpack.c.l.s4 1966171168
    %v1461 = vunpack.c.0.s8 %v1460
    %v1462 = vlaneseq
    %v1463 = vshrl.u32 %v1462, 7
    %v1464 = vsub.s32 %v1461, %v1463
    %v1465 = vrot.slane %v1449, %v1464
    %v1467 = vunpack.c.l.s4 1966171168
    %v1468 = vunpack.c.0.s8 %v1467
    %v1469 = vlaneseq
    %v1470 = vshrl.u32 %v1469, 7
    %v1471 = vsub.s32 %v1468, %v1470
    %v1472 = vrot.slane %v1450, %v1471
    %v1474 = vunpack.c.l.s4 1966171168
    %v1475 = vunpack.c.0.s8 %v1474
    %v1476 = vlaneseq
    %v1477 = vshrl.u32 %v1476, 7
    %v1478 = vsub.s32 %v1475, %v1477
    %v1479 = vrot.slane %v1451, %v1478
    %v1480 = vcombine.low %v1458, %v1465
    %v1481 = vcombine.low %v1472, %v1479
    %v1483 = vunpack.c.l.s4 1966171168
    %v1484 = vunpack.c.0.s8 %v1483
    %v1485 = vlaneseq
    %v1486 = vshrl.u32 %v1485, 7
    %v1487 = vsub.s32 %v1484, %v1486
    %v1488 = vrot.slane %v1480, %v1487
    %v1490 = vunpack.c.l.s4 1966171168
    %v1491 = vunpack.c.0.s8 %v1490
    %v1492 = vlaneseq
    %v1493 = vshrl.u32 %v1492, 7
    %v1494 = vsub.s32 %v1491, %v1493
    %v1495 = vrot.slane %v1481, %v1494
    %v1496 = vcombine.low %v1488, %v1495
    %v1497 = vcombine.low %v1413, %v1442
    %v1499 = vunpack.c.l.s4 1966171168
    %v1500 = vunpack.c.0.s8 %v1499
    %v1501 = vlaneseq
    %v1502 = vshrl.u32 %v1501, 7
    %v1503 = vsub.s32 %v1500, %v1502
    %v1504 = vrot.slane %v1497, %v1503
    %v1506 = vunpack.c.l.s4 1966171168
    %v1507 = vunpack.c.0.s8 %v1506
    %v1508 = vlaneseq
    %v1509 = vshrl.u32 %v1508, 7
    %v1510 = vsub.s32 %v1507, %v1509
    %v1511 = vrot.slane %v1504, %v1510
    %v1512 = vsel %vm185, %v1496, 0
    %v1514 = vsel %vm185, %v1511, 0
    %1516 = vmatprep.subr.mxu0 0.0
    %1517 = vmatpush1.msra.mxu0 0.0
    %1518 = vmatprep.subr.mxu0 0.0
    %1519 = vmatpush1.msra.mxu0 0.0
    %1520 = vmatprep.subr.mxu0 0.0
    %1521 = vmatpush1.msra.mxu0 0.0
    %1522 = vmatprep.subr.mxu0 0.0
    %1523 = vmatpush1.msra.mxu0 0.0
    %1524 = vmatprep.subr.mxu0 0.0
    %1525 = vmatpush1.msra.mxu0 0.0
    %1526 = vmatprep.subr.mxu0 0.0
    %1527 = vmatpush1.msra.mxu0 0.0
    %1528 = vmatprep.subr.mxu0 0.0
    %1529 = vmatpush1.msra.mxu0 0.0
    %1530 = vmatprep.subr.mxu0 0.0
    %1531 = vmatpush1.msra.mxu0 0.0
    %1532 = vmatprep.subr.mxu0 0.0
    %1533 = vmatpush1.msra.mxu0 0.0
    %1534 = vmatprep.subr.mxu0 0.0
    %1535 = vmatpush1.msra.mxu0 0.0
    %1536 = vmatprep.subr.mxu0 0.0
    %1537 = vmatpush1.msra.mxu0 0.0
    %1538 = vmatprep.subr.mxu0 0.0
    %1539 = vmatpush1.msra.mxu0 0.0
    %1540 = vmatprep.subr.mxu0 0.0
    %1541 = vmatpush1.msra.mxu0 %v1447
    %1542 = vmatprep.subr.mxu0 0.0
    %1543 = vmatpush1.msra.mxu0 %v1446
    %1544 = vmatprep.subr.mxu0 0.0
    %1545 = vmatpush1.msra.mxu0 %v1445
    %1546 = vmatprep.subr.mxu0 0.0
    %1547 = vmatpush1.msra.mxu0 %v1444
    %1548 = vmatprep.subr.mxu0 0.0
    %1549 = vmatpush2.msra.mxu0 0.0
    %1550 = vmatprep.subr.mxu0 0.0
    %1551 = vmatpush2.msra.mxu0 0.0
    %1552 = vmatprep.subr.mxu0 0.0
    %1553 = vmatpush2.msra.mxu0 0.0
    %1554 = vmatprep.subr.mxu0 0.0
    %1555 = vmatpush2.msra.mxu0 0.0
    %1556 = vmatprep.subr.mxu0 0.0
    %1557 = vmatpush2.msra.mxu0 0.0
    %1558 = vmatprep.subr.mxu0 0.0
    %1559 = vmatpush2.msra.mxu0 0.0
    %1560 = vmatprep.subr.mxu0 0.0
    %1561 = vmatpush2.msra.mxu0 0.0
    %1562 = vmatprep.subr.mxu0 0.0
    %1563 = vmatpush2.msra.mxu0 0.0
    %1564 = vmatprep.subr.mxu0 0.0
    %1565 = vmatpush2.msra.mxu0 0.0
    %1566 = vmatprep.subr.mxu0 0.0
    %1567 = vmatpush2.msra.mxu0 0.0
    %1568 = vmatprep.subr.mxu0 0.0
    %1569 = vmatpush2.msra.mxu0 0.0
    %1570 = vmatprep.subr.mxu0 0.0
    %1571 = vmatpush2.msra.mxu0 0.0
    %1572 = vmatprep.subr.mxu0 0.0
    %1573 = vmatpush2.msra.mxu0 0.0
    %1574 = vmatprep.subr.mxu0 0.0
    %1575 = vmatpush2.msra.mxu0 0.0
    %1576 = vmatprep.subr.mxu0 0.0
    %1577 = vmatpush2.msra.mxu0 0.0
    %1578 = vmatprep.subr.mxu0 0.0
    %1579 = vmatpush2.msra.mxu0 0.0
    %1580 = vmatprep.mubr.f32.mxu0 0.0
    %1581 = vmatmul.mubr.f32.gmra.mxu0 %v1512
    %v1582 = vpop.f32.mrf.mxu0
    %v1583 = vadd.f32 0.0, %v1582
    %v1584 = vpop.f32.mrf.mxu0
    %1585 = vmatprep.mubr.f32.mxu0 0.0
    %1586 = vmatmul.mubr.f32.gmra.mxu0 %v1514
    %v1587 = vpop.f32.mrf.mxu0
    %v1588 = vadd.f32 0.0, %v1587
    %v1589 = vpop.f32.mrf.mxu0
    %1590 = vdwg.mxu0
    %v1591 = vcombine.low %v1368, %v1382
    %v1592 = vcombine.low %v1383, %v1384
    %v1593 = vcombine.low %v1375, %v1406
    %v1594 = vcombine.low %v1420, %v1421
    %v1596 = vunpack.c.l.s4 1966171168
    %v1597 = vunpack.c.0.s8 %v1596
    %v1598 = vlaneseq
    %v1599 = vshrl.u32 %v1598, 7
    %v1600 = vsub.s32 %v1597, %v1599
    %v1601 = vrot.slane %v1591, %v1600
    %v1603 = vunpack.c.l.s4 1966171168
    %v1604 = vunpack.c.0.s8 %v1603
    %v1605 = vlaneseq
    %v1606 = vshrl.u32 %v1605, 7
    %v1607 = vsub.s32 %v1604, %v1606
    %v1608 = vrot.slane %v1592, %v1607
    %v1610 = vunpack.c.l.s4 1966171168
    %v1611 = vunpack.c.0.s8 %v1610
    %v1612 = vlaneseq
    %v1613 = vshrl.u32 %v1612, 7
    %v1614 = vsub.s32 %v1611, %v1613
    %v1615 = vrot.slane %v1593, %v1614
    %v1617 = vunpack.c.l.s4 1966171168
    %v1618 = vunpack.c.0.s8 %v1617
    %v1619 = vlaneseq
    %v1620 = vshrl.u32 %v1619, 7
    %v1621 = vsub.s32 %v1618, %v1620
    %v1622 = vrot.slane %v1594, %v1621
    %v1623 = vcombine.low %v1601, %v1608
    %v1624 = vcombine.low %v1615, %v1622
    %v1626 = vunpack.c.l.s4 1966171168
    %v1627 = vunpack.c.0.s8 %v1626
    %v1628 = vlaneseq
    %v1629 = vshrl.u32 %v1628, 7
    %v1630 = vsub.s32 %v1627, %v1629
    %v1631 = vrot.slane %v1623, %v1630
    %v1633 = vunpack.c.l.s4 1966171168
    %v1634 = vunpack.c.0.s8 %v1633
    %v1635 = vlaneseq
    %v1636 = vshrl.u32 %v1635, 7
    %v1637 = vsub.s32 %v1634, %v1636
    %v1638 = vrot.slane %v1624, %v1637
    %v1639 = vcombine.low %v1631, %v1638
    %v1640 = vcombine.low %v1422, %v1413
    %v1642 = vunpack.c.l.s4 1966171168
    %v1643 = vunpack.c.0.s8 %v1642
    %v1644 = vlaneseq
    %v1645 = vshrl.u32 %v1644, 7
    %v1646 = vsub.s32 %v1643, %v1645
    %v1647 = vrot.slane %v1640, %v1646
    %v1649 = vunpack.c.l.s4 1966171168
    %v1650 = vunpack.c.0.s8 %v1649
    %v1651 = vlaneseq
    %v1652 = vshrl.u32 %v1651, 7
    %v1653 = vsub.s32 %v1650, %v1652
    %v1654 = vrot.slane %v1647, %v1653
    %v1655 = vsel %vm185, %v1639, 0
    %v1657 = vsel %vm185, %v1654, 0
    %1659 = vmatprep.subr.mxu0 0.0
    %1660 = vmatpush1.msra.mxu0 0.0
    %1661 = vmatprep.subr.mxu0 0.0
    %1662 = vmatpush1.msra.mxu0 0.0
    %1663 = vmatprep.subr.mxu0 0.0
    %1664 = vmatpush1.msra.mxu0 0.0
    %1665 = vmatprep.subr.mxu0 0.0
    %1666 = vmatpush1.msra.mxu0 0.0
    %1667 = vmatprep.subr.mxu0 0.0
    %1668 = vmatpush1.msra.mxu0 0.0
    %1669 = vmatprep.subr.mxu0 0.0
    %1670 = vmatpush1.msra.mxu0 0.0
    %1671 = vmatprep.subr.mxu0 0.0
    %1672 = vmatpush1.msra.mxu0 0.0
    %1673 = vmatprep.subr.mxu0 0.0
    %1674 = vmatpush1.msra.mxu0 0.0
    %1675 = vmatprep.subr.mxu0 0.0
    %1676 = vmatpush1.msra.mxu0 0.0
    %1677 = vmatprep.subr.mxu0 0.0
    %1678 = vmatpush1.msra.mxu0 0.0
    %1679 = vmatprep.subr.mxu0 0.0
    %1680 = vmatpush1.msra.mxu0 0.0
    %1681 = vmatprep.subr.mxu0 0.0
    %1682 = vmatpush1.msra.mxu0 0.0
    %1683 = vmatprep.subr.mxu0 0.0
    %1684 = vmatpush1.msra.mxu0 %v1426
    %1685 = vmatprep.subr.mxu0 0.0
    %1686 = vmatpush1.msra.mxu0 %v1425
    %1687 = vmatprep.subr.mxu0 0.0
    %1688 = vmatpush1.msra.mxu0 %v1424
    %1689 = vmatprep.subr.mxu0 0.0
    %1690 = vmatpush1.msra.mxu0 %v1423
    %1691 = vmatprep.subr.mxu0 0.0
    %1692 = vmatpush2.msra.mxu0 0.0
    %1693 = vmatprep.subr.mxu0 0.0
    %1694 = vmatpush2.msra.mxu0 0.0
    %1695 = vmatprep.subr.mxu0 0.0
    %1696 = vmatpush2.msra.mxu0 0.0
    %1697 = vmatprep.subr.mxu0 0.0
    %1698 = vmatpush2.msra.mxu0 0.0
    %1699 = vmatprep.subr.mxu0 0.0
    %1700 = vmatpush2.msra.mxu0 0.0
    %1701 = vmatprep.subr.mxu0 0.0
    %1702 = vmatpush2.msra.mxu0 0.0
    %1703 = vmatprep.subr.mxu0 0.0
    %1704 = vmatpush2.msra.mxu0 0.0
    %1705 = vmatprep.subr.mxu0 0.0
    %1706 = vmatpush2.msra.mxu0 0.0
    %1707 = vmatprep.subr.mxu0 0.0
    %1708 = vmatpush2.msra.mxu0 0.0
    %1709 = vmatprep.subr.mxu0 0.0
    %1710 = vmatpush2.msra.mxu0 0.0
    %1711 = vmatprep.subr.mxu0 0.0
    %1712 = vmatpush2.msra.mxu0 0.0
    %1713 = vmatprep.subr.mxu0 0.0
    %1714 = vmatpush2.msra.mxu0 0.0
    %1715 = vmatprep.subr.mxu0 0.0
    %1716 = vmatpush2.msra.mxu0 0.0
    %1717 = vmatprep.subr.mxu0 0.0
    %1718 = vmatpush2.msra.mxu0 0.0
    %1719 = vmatprep.subr.mxu0 0.0
    %1720 = vmatpush2.msra.mxu0 0.0
    %1721 = vmatprep.subr.mxu0 0.0
    %1722 = vmatpush2.msra.mxu0 0.0
    %1723 = vmatprep.mubr.f32.mxu0 0.0
    %1724 = vmatmul.mubr.f32.gmra.mxu0 %v1655
    %v1725 = vpop.f32.mrf.mxu0
    %v1726 = vadd.f32 %v1583, %v1725
    %v1727 = vpop.f32.mrf.mxu0
    %1728 = vmatprep.mubr.f32.mxu0 0.0
    %1729 = vmatmul.mubr.f32.gmra.mxu0 %v1657
    %v1730 = vpop.f32.mrf.mxu0
    %v1731 = vadd.f32 %v1588, %v1730
    %v1732 = vpop.f32.mrf.mxu0
    %1733 = vdwg.mxu0
    %v1734 = vcombine.high %v1375, %v1375
    %v1735 = vcombine.high %v1413, %v1413
    %s1736 = scalar_lea.vmem [#allocation11], 64
    %v1737 = vld [vmem:[%s1736] sm:$0xff]
    %v1738 = vld [vmem:[%s1736 + $0x8] sm:$0xff]
    %v1739 = vld [vmem:[%s1736 + $0x10] sm:$0xff]
    %v1740 = vld [vmem:[%s1736 + $0x18] sm:$0xff]
    %v1741 = vcombine.low %v1375, %v1434
    %v1742 = vcombine.low %v1734, %v1421
    %v1744 = vunpack.c.l.s4 1966171168
    %v1745 = vunpack.c.0.s8 %v1744
    %v1746 = vlaneseq
    %v1747 = vshrl.u32 %v1746, 7
    %v1748 = vsub.s32 %v1745, %v1747
    %v1749 = vrot.slane %v1741, %v1748
    %v1751 = vunpack.c.l.s4 1966171168
    %v1752 = vunpack.c.0.s8 %v1751
    %v1753 = vlaneseq
    %v1754 = vshrl.u32 %v1753, 7
    %v1755 = vsub.s32 %v1752, %v1754
    %v1756 = vrot.slane %v1742, %v1755
    %v1757 = vcombine.low %v1608, %v1749
    %v1758 = vcombine.low %v1756, %v1647
    %v1760 = vunpack.c.l.s4 1966171168
    %v1761 = vunpack.c.0.s8 %v1760
    %v1762 = vlaneseq
    %v1763 = vshrl.u32 %v1762, 7
    %v1764 = vsub.s32 %v1761, %v1763
    %v1765 = vrot.slane %v1757, %v1764
    %v1767 = vunpack.c.l.s4 1966171168
    %v1768 = vunpack.c.0.s8 %v1767
    %v1769 = vlaneseq
    %v1770 = vshrl.u32 %v1769, 7
    %v1771 = vsub.s32 %v1768, %v1770
    %v1772 = vrot.slane %v1758, %v1771
    %v1773 = vcombine.low %v1765, %v1772
    %v1774 = vcombine.low %v1442, %v1735
    %v1776 = vunpack.c.l.s4 1966171168
    %v1777 = vunpack.c.0.s8 %v1776
    %v1778 = vlaneseq
    %v1779 = vshrl.u32 %v1778, 7
    %v1780 = vsub.s32 %v1777, %v1779
    %v1781 = vrot.slane %v1774, %v1780
    %v1783 = vunpack.c.l.s4 1966171168
    %v1784 = vunpack.c.0.s8 %v1783
    %v1785 = vlaneseq
    %v1786 = vshrl.u32 %v1785, 7
    %v1787 = vsub.s32 %v1784, %v1786
    %v1788 = vrot.slane %v1781, %v1787
    %v1789 = vsel %vm185, %v1773, 0
    %v1791 = vsel %vm185, %v1788, 0
    %1793 = vmatprep.subr.mxu0 0.0
    %1794 = vmatpush1.msra.mxu0 0.0
    %1795 = vmatprep.subr.mxu0 0.0
    %1796 = vmatpush1.msra.mxu0 0.0
    %1797 = vmatprep.subr.mxu0 0.0
    %1798 = vmatpush1.msra.mxu0 0.0
    %1799 = vmatprep.subr.mxu0 0.0
    %1800 = vmatpush1.msra.mxu0 0.0
    %1801 = vmatprep.subr.mxu0 0.0
    %1802 = vmatpush1.msra.mxu0 0.0
    %1803 = vmatprep.subr.mxu0 0.0
    %1804 = vmatpush1.msra.mxu0 0.0
    %1805 = vmatprep.subr.mxu0 0.0
    %1806 = vmatpush1.msra.mxu0 0.0
    %1807 = vmatprep.subr.mxu0 0.0
    %1808 = vmatpush1.msra.mxu0 0.0
    %1809 = vmatprep.subr.mxu0 0.0
    %1810 = vmatpush1.msra.mxu0 0.0
    %1811 = vmatprep.subr.mxu0 0.0
    %1812 = vmatpush1.msra.mxu0 0.0
    %1813 = vmatprep.subr.mxu0 0.0
    %1814 = vmatpush1.msra.mxu0 0.0
    %1815 = vmatprep.subr.mxu0 0.0
    %1816 = vmatpush1.msra.mxu0 0.0
    %1817 = vmatprep.subr.mxu0 0.0
    %1818 = vmatpush1.msra.mxu0 %v1740
    %1819 = vmatprep.subr.mxu0 0.0
    %1820 = vmatpush1.msra.mxu0 %v1739
    %1821 = vmatprep.subr.mxu0 0.0
    %1822 = vmatpush1.msra.mxu0 %v1738
    %1823 = vmatprep.subr.mxu0 0.0
    %1824 = vmatpush1.msra.mxu0 %v1737
    %1825 = vmatprep.subr.mxu0 0.0
    %1826 = vmatpush2.msra.mxu0 0.0
    %1827 = vmatprep.subr.mxu0 0.0
    %1828 = vmatpush2.msra.mxu0 0.0
    %1829 = vmatprep.subr.mxu0 0.0
    %1830 = vmatpush2.msra.mxu0 0.0
    %1831 = vmatprep.subr.mxu0 0.0
    %1832 = vmatpush2.msra.mxu0 0.0
    %1833 = vmatprep.subr.mxu0 0.0
    %1834 = vmatpush2.msra.mxu0 0.0
    %1835 = vmatprep.subr.mxu0 0.0
    %1836 = vmatpush2.msra.mxu0 0.0
    %1837 = vmatprep.subr.mxu0 0.0
    %1838 = vmatpush2.msra.mxu0 0.0
    %1839 = vmatprep.subr.mxu0 0.0
    %1840 = vmatpush2.msra.mxu0 0.0
    %1841 = vmatprep.subr.mxu0 0.0
    %1842 = vmatpush2.msra.mxu0 0.0
    %1843 = vmatprep.subr.mxu0 0.0
    %1844 = vmatpush2.msra.mxu0 0.0
    %1845 = vmatprep.subr.mxu0 0.0
    %1846 = vmatpush2.msra.mxu0 0.0
    %1847 = vmatprep.subr.mxu0 0.0
    %1848 = vmatpush2.msra.mxu0 0.0
    %1849 = vmatprep.subr.mxu0 0.0
    %1850 = vmatpush2.msra.mxu0 0.0
    %1851 = vmatprep.subr.mxu0 0.0
    %1852 = vmatpush2.msra.mxu0 0.0
    %1853 = vmatprep.subr.mxu0 0.0
    %1854 = vmatpush2.msra.mxu0 0.0
    %1855 = vmatprep.subr.mxu0 0.0
    %1856 = vmatpush2.msra.mxu0 0.0
    %1857 = vmatprep.mubr.f32.mxu0 0.0
    %1858 = vmatmul.mubr.f32.gmra.mxu0 %v1789
    %v1859 = vpop.f32.mrf.mxu0
    %v1860 = vadd.f32 0.0, %v1859
    %v1861 = vpop.f32.mrf.mxu0
    %1862 = vmatprep.mubr.f32.mxu0 0.0
    %1863 = vmatmul.mubr.f32.gmra.mxu0 %v1791
    %v1864 = vpop.f32.mrf.mxu0
    %v1865 = vadd.f32 0.0, %v1864
    %v1866 = vpop.f32.mrf.mxu0
    %1867 = vdwg.mxu0
    %v1868 = vadd.f32 %v1726, %v1860
    %v1869 = vadd.f32 %v1731, %v1865
    %v1870 = vcombine.high %v1434, %v1434
    %v1871 = vcombine.high %v1442, %v1442
    %s1872 = scalar_lea.vmem [#allocation11], 96
    %v1873 = vld [vmem:[%s1872] sm:$0xff]
    %v1874 = vld [vmem:[%s1872 + $0x8] sm:$0xff]
    %v1875 = vld [vmem:[%s1872 + $0x10] sm:$0xff]
    %v1876 = vld [vmem:[%s1872 + $0x18] sm:$0xff]
    %v1877 = vcombine.low %v1434, %v1734
    %v1878 = vcombine.low %v1870, %v1422
    %v1880 = vunpack.c.l.s4 1966171168
    %v1881 = vunpack.c.0.s8 %v1880
    %v1882 = vlaneseq
    %v1883 = vshrl.u32 %v1882, 7
    %v1884 = vsub.s32 %v1881, %v1883
    %v1885 = vrot.slane %v1877, %v1884
    %v1887 = vunpack.c.l.s4 1966171168
    %v1888 = vunpack.c.0.s8 %v1887
    %v1889 = vlaneseq
    %v1890 = vshrl.u32 %v1889, 7
    %v1891 = vsub.s32 %v1888, %v1890
    %v1892 = vrot.slane %v1878, %v1891
    %v1893 = vcombine.low %v1465, %v1885
    %v1894 = vcombine.low %v1892, %v1504
    %v1896 = vunpack.c.l.s4 1966171168
    %v1897 = vunpack.c.0.s8 %v1896
    %v1898 = vlaneseq
    %v1899 = vshrl.u32 %v1898, 7
    %v1900 = vsub.s32 %v1897, %v1899
    %v1901 = vrot.slane %v1893, %v1900
    %v1903 = vunpack.c.l.s4 1966171168
    %v1904 = vunpack.c.0.s8 %v1903
    %v1905 = vlaneseq
    %v1906 = vshrl.u32 %v1905, 7
    %v1907 = vsub.s32 %v1904, %v1906
    %v1908 = vrot.slane %v1894, %v1907
    %v1909 = vcombine.low %v1901, %v1908
    %v1910 = vcombine.low %v1735, %v1871
    %v1912 = vunpack.c.l.s4 1966171168
    %v1913 = vunpack.c.0.s8 %v1912
    %v1914 = vlaneseq
    %v1915 = vshrl.u32 %v1914, 7
    %v1916 = vsub.s32 %v1913, %v1915
    %v1917 = vrot.slane %v1910, %v1916
    %v1919 = vunpack.c.l.s4 1966171168
    %v1920 = vunpack.c.0.s8 %v1919
    %v1921 = vlaneseq
    %v1922 = vshrl.u32 %v1921, 7
    %v1923 = vsub.s32 %v1920, %v1922
    %v1924 = vrot.slane %v1917, %v1923
    %v1925 = vsel %vm185, %v1909, 0
    %v1927 = vsel %vm185, %v1924, 0
    %1929 = vmatprep.subr.mxu0 0.0
    %1930 = vmatpush1.msra.mxu0 0.0
    %1931 = vmatprep.subr.mxu0 0.0
    %1932 = vmatpush1.msra.mxu0 0.0
    %1933 = vmatprep.subr.mxu0 0.0
    %1934 = vmatpush1.msra.mxu0 0.0
    %1935 = vmatprep.subr.mxu0 0.0
    %1936 = vmatpush1.msra.mxu0 0.0
    %1937 = vmatprep.subr.mxu0 0.0
    %1938 = vmatpush1.msra.mxu0 0.0
    %1939 = vmatprep.subr.mxu0 0.0
    %1940 = vmatpush1.msra.mxu0 0.0
    %1941 = vmatprep.subr.mxu0 0.0
    %1942 = vmatpush1.msra.mxu0 0.0
    %1943 = vmatprep.subr.mxu0 0.0
    %1944 = vmatpush1.msra.mxu0 0.0
    %1945 = vmatprep.subr.mxu0 0.0
    %1946 = vmatpush1.msra.mxu0 0.0
    %1947 = vmatprep.subr.mxu0 0.0
    %1948 = vmatpush1.msra.mxu0 0.0
    %1949 = vmatprep.subr.mxu0 0.0
    %1950 = vmatpush1.msra.mxu0 0.0
    %1951 = vmatprep.subr.mxu0 0.0
    %1952 = vmatpush1.msra.mxu0 0.0
    %1953 = vmatprep.subr.mxu0 0.0
    %1954 = vmatpush1.msra.mxu0 %v1876
    %1955 = vmatprep.subr.mxu0 0.0
    %1956 = vmatpush1.msra.mxu0 %v1875
    %1957 = vmatprep.subr.mxu0 0.0
    %1958 = vmatpush1.msra.mxu0 %v1874
    %1959 = vmatprep.subr.mxu0 0.0
    %1960 = vmatpush1.msra.mxu0 %v1873
    %1961 = vmatprep.subr.mxu0 0.0
    %1962 = vmatpush2.msra.mxu0 0.0
    %1963 = vmatprep.subr.mxu0 0.0
    %1964 = vmatpush2.msra.mxu0 0.0
    %1965 = vmatprep.subr.mxu0 0.0
    %1966 = vmatpush2.msra.mxu0 0.0
    %1967 = vmatprep.subr.mxu0 0.0
    %1968 = vmatpush2.msra.mxu0 0.0
    %1969 = vmatprep.subr.mxu0 0.0
    %1970 = vmatpush2.msra.mxu0 0.0
    %1971 = vmatprep.subr.mxu0 0.0
    %1972 = vmatpush2.msra.mxu0 0.0
    %1973 = vmatprep.subr.mxu0 0.0
    %1974 = vmatpush2.msra.mxu0 0.0
    %1975 = vmatprep.subr.mxu0 0.0
    %1976 = vmatpush2.msra.mxu0 0.0
    %1977 = vmatprep.subr.mxu0 0.0
    %1978 = vmatpush2.msra.mxu0 0.0
    %1979 = vmatprep.subr.mxu0 0.0
    %1980 = vmatpush2.msra.mxu0 0.0
    %1981 = vmatprep.subr.mxu0 0.0
    %1982 = vmatpush2.msra.mxu0 0.0
    %1983 = vmatprep.subr.mxu0 0.0
    %1984 = vmatpush2.msra.mxu0 0.0
    %1985 = vmatprep.subr.mxu0 0.0
    %1986 = vmatpush2.msra.mxu0 0.0
    %1987 = vmatprep.subr.mxu0 0.0
    %1988 = vmatpush2.msra.mxu0 0.0
    %1989 = vmatprep.subr.mxu0 0.0
    %1990 = vmatpush2.msra.mxu0 0.0
    %1991 = vmatprep.subr.mxu0 0.0
    %1992 = vmatpush2.msra.mxu0 0.0
    %1993 = vmatprep.mubr.f32.mxu0 0.0
    %1994 = vmatmul.mubr.f32.gmra.mxu0 %v1925
    %v1995 = vpop.f32.mrf.mxu0
    %v1996 = vadd.f32 0.0, %v1995
    %v1997 = vpop.f32.mrf.mxu0
    %1998 = vmatprep.mubr.f32.mxu0 0.0
    %1999 = vmatmul.mubr.f32.gmra.mxu0 %v1927
    %v2000 = vpop.f32.mrf.mxu0
    %v2001 = vadd.f32 0.0, %v2000
    %v2002 = vpop.f32.mrf.mxu0
    %2003 = vdwg.mxu0
    %v2004 = vadd.f32 %v1868, %v1996
    %v2005 = vadd.f32 %v1869, %v2001
    %v2007 = vlaneseq
    %v2008 = vshrl.u32 %v2007, 7
    %v2009 = vsub.s32 0, %v2008
    %v2010 = vrot.slane %v1346, %v2009
    %v2012 = vadd.f32 %v2004, %v2010
    %v2013 = vadd.f32 %v2005, %v2010
    %v2014 = vmax.f32 %v2012, 0.0
    %v2015 = vmax.f32 %v2013, 0.0
    %v2018 = vcombine.high %v2014, %v2014
    %v2020 = vunpack.c.l.s4 1966171168
    %v2021 = vunpack.c.0.s8 %v2020
    %v2022 = vlaneseq
    %v2023 = vshrl.u32 %v2022, 7
    %v2024 = vsub.s32 %v2021, %v2023
    %v2025 = vrot.slane %v2014, %v2024
    %v2027 = vunpack.c.l.s4 1966171168
    %v2028 = vunpack.c.0.s8 %v2027
    %v2029 = vlaneseq
    %v2030 = vshrl.u32 %v2029, 7
    %v2031 = vsub.s32 %v2028, %v2030
    %v2032 = vrot.slane %v2018, %v2031
    %v2033 = vcombine.high %v2025, %v2025
    %v2034 = vcombine.high %v2032, %v2032
    %v2036 = vunpack.c.l.s4 1966171168
    %v2037 = vunpack.c.0.s8 %v2036
    %v2038 = vlaneseq
    %v2039 = vshrl.u32 %v2038, 7
    %v2040 = vsub.s32 %v2037, %v2039
    %v2041 = vrot.slane %v2025, %v2040
    %v2043 = vunpack.c.l.s4 1966171168
    %v2044 = vunpack.c.0.s8 %v2043
    %v2045 = vlaneseq
    %v2046 = vshrl.u32 %v2045, 7
    %v2047 = vsub.s32 %v2044, %v2046
    %v2048 = vrot.slane %v2032, %v2047
    %v2050 = vunpack.c.l.s4 1966171168
    %v2051 = vunpack.c.0.s8 %v2050
    %v2052 = vlaneseq
    %v2053 = vshrl.u32 %v2052, 7
    %v2054 = vsub.s32 %v2051, %v2053
    %v2055 = vrot.slane %v2033, %v2054
    %v2057 = vunpack.c.l.s4 1966171168
    %v2058 = vunpack.c.0.s8 %v2057
    %v2059 = vlaneseq
    %v2060 = vshrl.u32 %v2059, 7
    %v2061 = vsub.s32 %v2058, %v2060
    %v2062 = vrot.slane %v2034, %v2061
    %v2063 = vcombine.high %v2041, %v2041
    %v2064 = vcombine.high %v2048, %v2048
    %v2065 = vcombine.high %v2055, %v2055
    %v2066 = vcombine.high %v2062, %v2062
    %v2068 = vunpack.c.l.s4 1966171168
    %v2069 = vunpack.c.0.s8 %v2068
    %v2070 = vlaneseq
    %v2071 = vshrl.u32 %v2070, 7
    %v2072 = vsub.s32 %v2069, %v2071
    %v2073 = vrot.slane %v2015, %v2072
    %v2074 = vcombine.high %v2073, %v2073
    %v2076 = vunpack.c.l.s4 1966171168
    %v2077 = vunpack.c.0.s8 %v2076
    %v2078 = vlaneseq
    %v2079 = vshrl.u32 %v2078, 7
    %v2080 = vsub.s32 %v2077, %v2079
    %v2081 = vrot.slane %v2073, %v2080
    %v2083 = vunpack.c.l.s4 1966171168
    %v2084 = vunpack.c.0.s8 %v2083
    %v2085 = vlaneseq
    %v2086 = vshrl.u32 %v2085, 7
    %v2087 = vsub.s32 %v2084, %v2086
    %v2088 = vrot.slane %v2074, %v2087
    %v2089 = vcombine.low %v2041, %v2055
    %v2090 = vcombine.low %v2063, %v2065
    %v2092 = vunpack.c.l.s4 1966171168
    %v2093 = vunpack.c.0.s8 %v2092
    %v2094 = vlaneseq
    %v2095 = vshrl.u32 %v2094, 7
    %v2096 = vsub.s32 %v2093, %v2095
    %v2097 = vrot.slane %v2089, %v2096
    %v2099 = vunpack.c.l.s4 1966171168
    %v2100 = vunpack.c.0.s8 %v2099
    %v2101 = vlaneseq
    %v2102 = vshrl.u32 %v2101, 7
    %v2103 = vsub.s32 %v2100, %v2102
    %v2104 = vrot.slane %v2090, %v2103
    %v2106 = vunpack.c.l.s4 1966171168
    %v2107 = vunpack.c.0.s8 %v2106
    %v2108 = vlaneseq
    %v2109 = vshrl.u32 %v2108, 7
    %v2110 = vsub.s32 %v2107, %v2109
    %v2111 = vrot.slane %v2048, %v2110
    %v2112 = vcombine.low %v2097, %v2104
    %v2114 = vunpack.c.l.s4 1966171168
    %v2115 = vunpack.c.0.s8 %v2114
    %v2116 = vlaneseq
    %v2117 = vshrl.u32 %v2116, 7
    %v2118 = vsub.s32 %v2115, %v2117
    %v2119 = vrot.slane %v2112, %v2118
    %v2121 = vunpack.c.l.s4 1966171168
    %v2122 = vunpack.c.0.s8 %v2121
    %v2123 = vlaneseq
    %v2124 = vshrl.u32 %v2123, 7
    %v2125 = vsub.s32 %v2122, %v2124
    %v2126 = vrot.slane %v2111, %v2125
    %v2127 = vcombine.low %v2119, %v2126
    %v2128 = vcombine.low %v2062, %v2064
    %v2129 = vcombine.low %v2066, %v2081
    %v2131 = vunpack.c.l.s4 1966171168
    %v2132 = vunpack.c.0.s8 %v2131
    %v2133 = vlaneseq
    %v2134 = vshrl.u32 %v2133, 7
    %v2135 = vsub.s32 %v2132, %v2134
    %v2136 = vrot.slane %v2128, %v2135
    %v2138 = vunpack.c.l.s4 1966171168
    %v2139 = vunpack.c.0.s8 %v2138
    %v2140 = vlaneseq
    %v2141 = vshrl.u32 %v2140, 7
    %v2142 = vsub.s32 %v2139, %v2141
    %v2143 = vrot.slane %v2129, %v2142
    %v2145 = vunpack.c.l.s4 1966171168
    %v2146 = vunpack.c.0.s8 %v2145
    %v2147 = vlaneseq
    %v2148 = vshrl.u32 %v2147, 7
    %v2149 = vsub.s32 %v2146, %v2148
    %v2150 = vrot.slane %v2088, %v2149
    %v2151 = vcombine.low %v2136, %v2143
    %v2153 = vunpack.c.l.s4 1966171168
    %v2154 = vunpack.c.0.s8 %v2153
    %v2155 = vlaneseq
    %v2156 = vshrl.u32 %v2155, 7
    %v2157 = vsub.s32 %v2154, %v2156
    %v2158 = vrot.slane %v2151, %v2157
    %v2160 = vunpack.c.l.s4 1966171168
    %v2161 = vunpack.c.0.s8 %v2160
    %v2162 = vlaneseq
    %v2163 = vshrl.u32 %v2162, 7
    %v2164 = vsub.s32 %v2161, %v2163
    %v2165 = vrot.slane %v2150, %v2164
    %v2166 = vcombine.low %v2158, %v2165
    %vm2169 = vcmask 1044480
    %v2170 = vsel %vm2169, %v2127, -inf
    %v2171 = vrot.slane %v2170, 4
    %v2172 = vmax.f32 %v2170, %v2171
    %v2173 = vrot.slane %v2172, 2
    %v2174 = vmax.f32 %v2172, %v2173
    %v2175 = vrot.slane %v2174, 1
    %v2176 = vmax.f32 %v2174, %v2175
    %v2177 = vsel %vm2169, %v2166, -inf
    %v2178 = vrot.slane %v2177, 4
    %v2179 = vmax.f32 %v2177, %v2178
    %v2180 = vrot.slane %v2179, 2
    %v2181 = vmax.f32 %v2179, %v2180
    %v2182 = vrot.slane %v2181, 1
    %v2183 = vmax.f32 %v2181, %v2182
    %v2184 = vld [vmem:[%s11] sm:$0x1]
    %v2185 = vld [vmem:[#allocation12] sm:$0xff]
    %v2186 = vld [vmem:[#allocation12 + $0x8] sm:$0xff]
    %v2187 = vld [vmem:[#allocation12 + $0x10] sm:$0xff]
    %v2188 = vld [vmem:[#allocation12 + $0x18] sm:$0xff]
    %vm2189 = vcmask 1042432
    %vm2190 = vcmask 1046532
    %vm2191 = vmor %vm2189, %vm2190
    %v2192 = vrot.slane %v145, 5
    %v2193 = vrot.slane %v2192, 4
    %v2194 = vrot.slane %v871, 5
    %v2195 = vsel %vm2191, %v2193, %v2194
    %v2196 = vrot.slane %v146, 5
    %v2197 = vrot.slane %v2196, 4
    %v2198 = vrot.slane %v887, 5
    %v2199 = vsel %vm2191, %v2197, %v2198
    %s2200 = scalar_lea.vmem [#allocation12], 32
    %v2201 = vld [vmem:[%s2200] sm:$0xff]
    %v2202 = vld [vmem:[%s2200 + $0x8] sm:$0xff]
    %v2203 = vld [vmem:[%s2200 + $0x10] sm:$0xff]
    %v2204 = vld [vmem:[%s2200 + $0x18] sm:$0xff]
    %v2205 = vcombine.low %v2195, %v2199
    %v2206 = vsel %vm185, %v2205, 0
    %2208 = vmatprep.subr.mxu0 0.0
    %2209 = vmatpush1.msra.mxu0 0.0
    %2210 = vmatprep.subr.mxu0 0.0
    %2211 = vmatpush1.msra.mxu0 0.0
    %2212 = vmatprep.subr.mxu0 0.0
    %2213 = vmatpush1.msra.mxu0 0.0
    %2214 = vmatprep.subr.mxu0 0.0
    %2215 = vmatpush1.msra.mxu0 0.0
    %2216 = vmatprep.subr.mxu0 0.0
    %2217 = vmatpush1.msra.mxu0 0.0
    %2218 = vmatprep.subr.mxu0 0.0
    %2219 = vmatpush1.msra.mxu0 0.0
    %2220 = vmatprep.subr.mxu0 0.0
    %2221 = vmatpush1.msra.mxu0 0.0
    %2222 = vmatprep.subr.mxu0 0.0
    %2223 = vmatpush1.msra.mxu0 0.0
    %2224 = vmatprep.subr.mxu0 0.0
    %2225 = vmatpush1.msra.mxu0 0.0
    %2226 = vmatprep.subr.mxu0 0.0
    %2227 = vmatpush1.msra.mxu0 0.0
    %2228 = vmatprep.subr.mxu0 0.0
    %2229 = vmatpush1.msra.mxu0 0.0
    %2230 = vmatprep.subr.mxu0 0.0
    %2231 = vmatpush1.msra.mxu0 0.0
    %2232 = vmatprep.subr.mxu0 0.0
    %2233 = vmatpush1.msra.mxu0 %v2204
    %2234 = vmatprep.subr.mxu0 0.0
    %2235 = vmatpush1.msra.mxu0 %v2203
    %2236 = vmatprep.subr.mxu0 0.0
    %2237 = vmatpush1.msra.mxu0 %v2202
    %2238 = vmatprep.subr.mxu0 0.0
    %2239 = vmatpush1.msra.mxu0 %v2201
    %2240 = vmatprep.subr.mxu0 0.0
    %2241 = vmatpush2.msra.mxu0 0.0
    %2242 = vmatprep.subr.mxu0 0.0
    %2243 = vmatpush2.msra.mxu0 0.0
    %2244 = vmatprep.subr.mxu0 0.0
    %2245 = vmatpush2.msra.mxu0 0.0
    %2246 = vmatprep.subr.mxu0 0.0
    %2247 = vmatpush2.msra.mxu0 0.0
    %2248 = vmatprep.subr.mxu0 0.0
    %2249 = vmatpush2.msra.mxu0 0.0
    %2250 = vmatprep.subr.mxu0 0.0
    %2251 = vmatpush2.msra.mxu0 0.0
    %2252 = vmatprep.subr.mxu0 0.0
    %2253 = vmatpush2.msra.mxu0 0.0
    %2254 = vmatprep.subr.mxu0 0.0
    %2255 = vmatpush2.msra.mxu0 0.0
    %2256 = vmatprep.subr.mxu0 0.0
    %2257 = vmatpush2.msra.mxu0 0.0
    %2258 = vmatprep.subr.mxu0 0.0
    %2259 = vmatpush2.msra.mxu0 0.0
    %2260 = vmatprep.subr.mxu0 0.0
    %2261 = vmatpush2.msra.mxu0 0.0
    %2262 = vmatprep.subr.mxu0 0.0
    %2263 = vmatpush2.msra.mxu0 0.0
    %2264 = vmatprep.subr.mxu0 0.0
    %2265 = vmatpush2.msra.mxu0 0.0
    %2266 = vmatprep.subr.mxu0 0.0
    %2267 = vmatpush2.msra.mxu0 0.0
    %2268 = vmatprep.subr.mxu0 0.0
    %2269 = vmatpush2.msra.mxu0 0.0
    %2270 = vmatprep.subr.mxu0 0.0
    %2271 = vmatpush2.msra.mxu0 0.0
    %2272 = vmatprep.mubr.f32.mxu0 0.0
    %2273 = vmatmul.mubr.f32.gmra.mxu0 %v2206
    %v2274 = vpop.f32.mrf.mxu0
    %v2275 = vadd.f32 0.0, %v2274
    %v2276 = vpop.f32.mrf.mxu0
    %2277 = vdwg.mxu0
    %v2278 = vcombine.low %v145, %v146
    %v2279 = vsel %vm185, %v2278, 0
    %2281 = vmatprep.subr.mxu0 0.0
    %2282 = vmatpush1.msra.mxu0 0.0
    %2283 = vmatprep.subr.mxu0 0.0
    %2284 = vmatpush1.msra.mxu0 0.0
    %2285 = vmatprep.subr.mxu0 0.0
    %2286 = vmatpush1.msra.mxu0 0.0
    %2287 = vmatprep.subr.mxu0 0.0
    %2288 = vmatpush1.msra.mxu0 0.0
    %2289 = vmatprep.subr.mxu0 0.0
    %2290 = vmatpush1.msra.mxu0 0.0
    %2291 = vmatprep.subr.mxu0 0.0
    %2292 = vmatpush1.msra.mxu0 0.0
    %2293 = vmatprep.subr.mxu0 0.0
    %2294 = vmatpush1.msra.mxu0 0.0
    %2295 = vmatprep.subr.mxu0 0.0
    %2296 = vmatpush1.msra.mxu0 0.0
    %2297 = vmatprep.subr.mxu0 0.0
    %2298 = vmatpush1.msra.mxu0 0.0
    %2299 = vmatprep.subr.mxu0 0.0
    %2300 = vmatpush1.msra.mxu0 0.0
    %2301 = vmatprep.subr.mxu0 0.0
    %2302 = vmatpush1.msra.mxu0 0.0
    %2303 = vmatprep.subr.mxu0 0.0
    %2304 = vmatpush1.msra.mxu0 0.0
    %2305 = vmatprep.subr.mxu0 0.0
    %2306 = vmatpush1.msra.mxu0 %v2188
    %2307 = vmatprep.subr.mxu0 0.0
    %2308 = vmatpush1.msra.mxu0 %v2187
    %2309 = vmatprep.subr.mxu0 0.0
    %2310 = vmatpush1.msra.mxu0 %v2186
    %2311 = vmatprep.subr.mxu0 0.0
    %2312 = vmatpush1.msra.mxu0 %v2185
    %2313 = vmatprep.subr.mxu0 0.0
    %2314 = vmatpush2.msra.mxu0 0.0
    %2315 = vmatprep.subr.mxu0 0.0
    %2316 = vmatpush2.msra.mxu0 0.0
    %2317 = vmatprep.subr.mxu0 0.0
    %2318 = vmatpush2.msra.mxu0 0.0
    %2319 = vmatprep.subr.mxu0 0.0
    %2320 = vmatpush2.msra.mxu0 0.0
    %2321 = vmatprep.subr.mxu0 0.0
    %2322 = vmatpush2.msra.mxu0 0.0
    %2323 = vmatprep.subr.mxu0 0.0
    %2324 = vmatpush2.msra.mxu0 0.0
    %2325 = vmatprep.subr.mxu0 0.0
    %2326 = vmatpush2.msra.mxu0 0.0
    %2327 = vmatprep.subr.mxu0 0.0
    %2328 = vmatpush2.msra.mxu0 0.0
    %2329 = vmatprep.subr.mxu0 0.0
    %2330 = vmatpush2.msra.mxu0 0.0
    %2331 = vmatprep.subr.mxu0 0.0
    %2332 = vmatpush2.msra.mxu0 0.0
    %2333 = vmatprep.subr.mxu0 0.0
    %2334 = vmatpush2.msra.mxu0 0.0
    %2335 = vmatprep.subr.mxu0 0.0
    %2336 = vmatpush2.msra.mxu0 0.0
    %2337 = vmatprep.subr.mxu0 0.0
    %2338 = vmatpush2.msra.mxu0 0.0
    %2339 = vmatprep.subr.mxu0 0.0
    %2340 = vmatpush2.msra.mxu0 0.0
    %2341 = vmatprep.subr.mxu0 0.0
    %2342 = vmatpush2.msra.mxu0 0.0
    %2343 = vmatprep.subr.mxu0 0.0
    %2344 = vmatpush2.msra.mxu0 0.0
    %2345 = vmatprep.mubr.f32.mxu0 0.0
    %2346 = vmatmul.mubr.f32.gmra.mxu0 %v2279
    %v2347 = vpop.f32.mrf.mxu0
    %v2348 = vadd.f32 %v2275, %v2347
    %v2349 = vpop.f32.mrf.mxu0
    %2350 = vdwg.mxu0
    %vm2351 = vcmask 1041408
    %vm2352 = vcmask 1045508
    %vm2353 = vmor %vm2351, %vm2352
    %v2354 = vrot.slane %v145, 6
    %v2355 = vrot.slane %v2354, 4
    %v2356 = vrot.slane %v871, 6
    %v2357 = vsel %vm2353, %v2355, %v2356
    %v2358 = vrot.slane %v146, 6
    %v2359 = vrot.slane %v2358, 4
    %v2360 = vrot.slane %v887, 6
    %v2361 = vsel %vm2353, %v2359, %v2360
    %s2362 = scalar_lea.vmem [#allocation12], 64
    %v2363 = vld [vmem:[%s2362] sm:$0xff]
    %v2364 = vld [vmem:[%s2362 + $0x8] sm:$0xff]
    %v2365 = vld [vmem:[%s2362 + $0x10] sm:$0xff]
    %v2366 = vld [vmem:[%s2362 + $0x18] sm:$0xff]
    %v2367 = vcombine.low %v2357, %v2361
    %v2368 = vsel %vm185, %v2367, 0
    %2370 = vmatprep.subr.mxu0 0.0
    %2371 = vmatpush1.msra.mxu0 0.0
    %2372 = vmatprep.subr.mxu0 0.0
    %2373 = vmatpush1.msra.mxu0 0.0
    %2374 = vmatprep.subr.mxu0 0.0
    %2375 = vmatpush1.msra.mxu0 0.0
    %2376 = vmatprep.subr.mxu0 0.0
    %2377 = vmatpush1.msra.mxu0 0.0
    %2378 = vmatprep.subr.mxu0 0.0
    %2379 = vmatpush1.msra.mxu0 0.0
    %2380 = vmatprep.subr.mxu0 0.0
    %2381 = vmatpush1.msra.mxu0 0.0
    %2382 = vmatprep.subr.mxu0 0.0
    %2383 = vmatpush1.msra.mxu0 0.0
    %2384 = vmatprep.subr.mxu0 0.0
    %2385 = vmatpush1.msra.mxu0 0.0
    %2386 = vmatprep.subr.mxu0 0.0
    %2387 = vmatpush1.msra.mxu0 0.0
    %2388 = vmatprep.subr.mxu0 0.0
    %2389 = vmatpush1.msra.mxu0 0.0
    %2390 = vmatprep.subr.mxu0 0.0
    %2391 = vmatpush1.msra.mxu0 0.0
    %2392 = vmatprep.subr.mxu0 0.0
    %2393 = vmatpush1.msra.mxu0 0.0
    %2394 = vmatprep.subr.mxu0 0.0
    %2395 = vmatpush1.msra.mxu0 %v2366
    %2396 = vmatprep.subr.mxu0 0.0
    %2397 = vmatpush1.msra.mxu0 %v2365
    %2398 = vmatprep.subr.mxu0 0.0
    %2399 = vmatpush1.msra.mxu0 %v2364
    %2400 = vmatprep.subr.mxu0 0.0
    %2401 = vmatpush1.msra.mxu0 %v2363
    %2402 = vmatprep.subr.mxu0 0.0
    %2403 = vmatpush2.msra.mxu0 0.0
    %2404 = vmatprep.subr.mxu0 0.0
    %2405 = vmatpush2.msra.mxu0 0.0
    %2406 = vmatprep.subr.mxu0 0.0
    %2407 = vmatpush2.msra.mxu0 0.0
    %2408 = vmatprep.subr.mxu0 0.0
    %2409 = vmatpush2.msra.mxu0 0.0
    %2410 = vmatprep.subr.mxu0 0.0
    %2411 = vmatpush2.msra.mxu0 0.0
    %2412 = vmatprep.subr.mxu0 0.0
    %2413 = vmatpush2.msra.mxu0 0.0
    %2414 = vmatprep.subr.mxu0 0.0
    %2415 = vmatpush2.msra.mxu0 0.0
    %2416 = vmatprep.subr.mxu0 0.0
    %2417 = vmatpush2.msra.mxu0 0.0
    %2418 = vmatprep.subr.mxu0 0.0
    %2419 = vmatpush2.msra.mxu0 0.0
    %2420 = vmatprep.subr.mxu0 0.0
    %2421 = vmatpush2.msra.mxu0 0.0
    %2422 = vmatprep.subr.mxu0 0.0
    %2423 = vmatpush2.msra.mxu0 0.0
    %2424 = vmatprep.subr.mxu0 0.0
    %2425 = vmatpush2.msra.mxu0 0.0
    %2426 = vmatprep.subr.mxu0 0.0
    %2427 = vmatpush2.msra.mxu0 0.0
    %2428 = vmatprep.subr.mxu0 0.0
    %2429 = vmatpush2.msra.mxu0 0.0
    %2430 = vmatprep.subr.mxu0 0.0
    %2431 = vmatpush2.msra.mxu0 0.0
    %2432 = vmatprep.subr.mxu0 0.0
    %2433 = vmatpush2.msra.mxu0 0.0
    %2434 = vmatprep.mubr.f32.mxu0 0.0
    %2435 = vmatmul.mubr.f32.gmra.mxu0 %v2368
    %v2436 = vpop.f32.mrf.mxu0
    %v2437 = vadd.f32 0.0, %v2436
    %v2438 = vpop.f32.mrf.mxu0
    %2439 = vdwg.mxu0
    %v2440 = vadd.f32 %v2348, %v2437
    %vm2441 = vmor %vm909, %vm912
    %v2442 = vrot.slane %v145, 7
    %v2443 = vrot.slane %v2442, 4
    %v2444 = vrot.slane %v871, 7
    %v2445 = vsel %vm2441, %v2443, %v2444
    %v2446 = vrot.slane %v146, 7
    %v2447 = vrot.slane %v2446, 4
    %v2448 = vrot.slane %v887, 7
    %v2449 = vsel %vm2441, %v2447, %v2448
    %s2450 = scalar_lea.vmem [#allocation12], 96
    %v2451 = vld [vmem:[%s2450] sm:$0xff]
    %v2452 = vld [vmem:[%s2450 + $0x8] sm:$0xff]
    %v2453 = vld [vmem:[%s2450 + $0x10] sm:$0xff]
    %v2454 = vld [vmem:[%s2450 + $0x18] sm:$0xff]
    %v2455 = vcombine.low %v2445, %v2449
    %v2456 = vsel %vm185, %v2455, 0
    %2458 = vmatprep.subr.mxu0 0.0
    %2459 = vmatpush1.msra.mxu0 0.0
    %2460 = vmatprep.subr.mxu0 0.0
    %2461 = vmatpush1.msra.mxu0 0.0
    %2462 = vmatprep.subr.mxu0 0.0
    %2463 = vmatpush1.msra.mxu0 0.0
    %2464 = vmatprep.subr.mxu0 0.0
    %2465 = vmatpush1.msra.mxu0 0.0
    %2466 = vmatprep.subr.mxu0 0.0
    %2467 = vmatpush1.msra.mxu0 0.0
    %2468 = vmatprep.subr.mxu0 0.0
    %2469 = vmatpush1.msra.mxu0 0.0
    %2470 = vmatprep.subr.mxu0 0.0
    %2471 = vmatpush1.msra.mxu0 0.0
    %2472 = vmatprep.subr.mxu0 0.0
    %2473 = vmatpush1.msra.mxu0 0.0
    %2474 = vmatprep.subr.mxu0 0.0
    %2475 = vmatpush1.msra.mxu0 0.0
    %2476 = vmatprep.subr.mxu0 0.0
    %2477 = vmatpush1.msra.mxu0 0.0
    %2478 = vmatprep.subr.mxu0 0.0
    %2479 = vmatpush1.msra.mxu0 0.0
    %2480 = vmatprep.subr.mxu0 0.0
    %2481 = vmatpush1.msra.mxu0 0.0
    %2482 = vmatprep.subr.mxu0 0.0
    %2483 = vmatpush1.msra.mxu0 %v2454
    %2484 = vmatprep.subr.mxu0 0.0
    %2485 = vmatpush1.msra.mxu0 %v2453
    %2486 = vmatprep.subr.mxu0 0.0
    %2487 = vmatpush1.msra.mxu0 %v2452
    %2488 = vmatprep.subr.mxu0 0.0
    %2489 = vmatpush1.msra.mxu0 %v2451
    %2490 = vmatprep.subr.mxu0 0.0
    %2491 = vmatpush2.msra.mxu0 0.0
    %2492 = vmatprep.subr.mxu0 0.0
    %2493 = vmatpush2.msra.mxu0 0.0
    %2494 = vmatprep.subr.mxu0 0.0
    %2495 = vmatpush2.msra.mxu0 0.0
    %2496 = vmatprep.subr.mxu0 0.0
    %2497 = vmatpush2.msra.mxu0 0.0
    %2498 = vmatprep.subr.mxu0 0.0
    %2499 = vmatpush2.msra.mxu0 0.0
    %2500 = vmatprep.subr.mxu0 0.0
    %2501 = vmatpush2.msra.mxu0 0.0
    %2502 = vmatprep.subr.mxu0 0.0
    %2503 = vmatpush2.msra.mxu0 0.0
    %2504 = vmatprep.subr.mxu0 0.0
    %2505 = vmatpush2.msra.mxu0 0.0
    %2506 = vmatprep.subr.mxu0 0.0
    %2507 = vmatpush2.msra.mxu0 0.0
    %2508 = vmatprep.subr.mxu0 0.0
    %2509 = vmatpush2.msra.mxu0 0.0
    %2510 = vmatprep.subr.mxu0 0.0
    %2511 = vmatpush2.msra.mxu0 0.0
    %2512 = vmatprep.subr.mxu0 0.0
    %2513 = vmatpush2.msra.mxu0 0.0
    %2514 = vmatprep.subr.mxu0 0.0
    %2515 = vmatpush2.msra.mxu0 0.0
    %2516 = vmatprep.subr.mxu0 0.0
    %2517 = vmatpush2.msra.mxu0 0.0
    %2518 = vmatprep.subr.mxu0 0.0
    %2519 = vmatpush2.msra.mxu0 0.0
    %2520 = vmatprep.subr.mxu0 0.0
    %2521 = vmatpush2.msra.mxu0 0.0
    %2522 = vmatprep.mubr.f32.mxu0 0.0
    %2523 = vmatmul.mubr.f32.gmra.mxu0 %v2456
    %v2524 = vpop.f32.mrf.mxu0
    %v2525 = vadd.f32 0.0, %v2524
    %v2526 = vpop.f32.mrf.mxu0
    %2527 = vdwg.mxu0
    %v2528 = vadd.f32 %v2440, %v2525
    %s2529 = scalar_lea.vmem [#allocation12], 128
    %v2530 = vld [vmem:[%s2529] sm:$0xff]
    %v2531 = vld [vmem:[%s2529 + $0x8] sm:$0xff]
    %v2532 = vld [vmem:[%s2529 + $0x10] sm:$0xff]
    %v2533 = vld [vmem:[%s2529 + $0x18] sm:$0xff]
    %v2534 = vcombine.low %v871, %v887
    %v2535 = vsel %vm185, %v2534, 0
    %2537 = vmatprep.subr.mxu0 0.0
    %2538 = vmatpush1.msra.mxu0 0.0
    %2539 = vmatprep.subr.mxu0 0.0
    %2540 = vmatpush1.msra.mxu0 0.0
    %2541 = vmatprep.subr.mxu0 0.0
    %2542 = vmatpush1.msra.mxu0 0.0
    %2543 = vmatprep.subr.mxu0 0.0
    %2544 = vmatpush1.msra.mxu0 0.0
    %2545 = vmatprep.subr.mxu0 0.0
    %2546 = vmatpush1.msra.mxu0 0.0
    %2547 = vmatprep.subr.mxu0 0.0
    %2548 = vmatpush1.msra.mxu0 0.0
    %2549 = vmatprep.subr.mxu0 0.0
    %2550 = vmatpush1.msra.mxu0 0.0
    %2551 = vmatprep.subr.mxu0 0.0
    %2552 = vmatpush1.msra.mxu0 0.0
    %2553 = vmatprep.subr.mxu0 0.0
    %2554 = vmatpush1.msra.mxu0 0.0
    %2555 = vmatprep.subr.mxu0 0.0
    %2556 = vmatpush1.msra.mxu0 0.0
    %2557 = vmatprep.subr.mxu0 0.0
    %2558 = vmatpush1.msra.mxu0 0.0
    %2559 = vmatprep.subr.mxu0 0.0
    %2560 = vmatpush1.msra.mxu0 0.0
    %2561 = vmatprep.subr.mxu0 0.0
    %2562 = vmatpush1.msra.mxu0 %v2533
    %2563 = vmatprep.subr.mxu0 0.0
    %2564 = vmatpush1.msra.mxu0 %v2532
    %2565 = vmatprep.subr.mxu0 0.0
    %2566 = vmatpush1.msra.mxu0 %v2531
    %2567 = vmatprep.subr.mxu0 0.0
    %2568 = vmatpush1.msra.mxu0 %v2530
    %2569 = vmatprep.subr.mxu0 0.0
    %2570 = vmatpush2.msra.mxu0 0.0
    %2571 = vmatprep.subr.mxu0 0.0
    %2572 = vmatpush2.msra.mxu0 0.0
    %2573 = vmatprep.subr.mxu0 0.0
    %2574 = vmatpush2.msra.mxu0 0.0
    %2575 = vmatprep.subr.mxu0 0.0
    %2576 = vmatpush2.msra.mxu0 0.0
    %2577 = vmatprep.subr.mxu0 0.0
    %2578 = vmatpush2.msra.mxu0 0.0
    %2579 = vmatprep.subr.mxu0 0.0
    %2580 = vmatpush2.msra.mxu0 0.0
    %2581 = vmatprep.subr.mxu0 0.0
    %2582 = vmatpush2.msra.mxu0 0.0
    %2583 = vmatprep.subr.mxu0 0.0
    %2584 = vmatpush2.msra.mxu0 0.0
    %2585 = vmatprep.subr.mxu0 0.0
    %2586 = vmatpush2.msra.mxu0 0.0
    %2587 = vmatprep.subr.mxu0 0.0
    %2588 = vmatpush2.msra.mxu0 0.0
    %2589 = vmatprep.subr.mxu0 0.0
    %2590 = vmatpush2.msra.mxu0 0.0
    %2591 = vmatprep.subr.mxu0 0.0
    %2592 = vmatpush2.msra.mxu0 0.0
    %2593 = vmatprep.subr.mxu0 0.0
    %2594 = vmatpush2.msra.mxu0 0.0
    %2595 = vmatprep.subr.mxu0 0.0
    %2596 = vmatpush2.msra.mxu0 0.0
    %2597 = vmatprep.subr.mxu0 0.0
    %2598 = vmatpush2.msra.mxu0 0.0
    %2599 = vmatprep.subr.mxu0 0.0
    %2600 = vmatpush2.msra.mxu0 0.0
    %2601 = vmatprep.mubr.f32.mxu0 0.0
    %2602 = vmatmul.mubr.f32.gmra.mxu0 %v2535
    %v2603 = vpop.f32.mrf.mxu0
    %v2604 = vadd.f32 0.0, %v2603
    %v2605 = vpop.f32.mrf.mxu0
    %2606 = vdwg.mxu0
    %v2607 = vadd.f32 %v2528, %v2604
    %v2609 = vlaneseq
    %v2610 = vshrl.u32 %v2609, 7
    %v2611 = vsub.s32 0, %v2610
    %v2612 = vrot.slane %v2184, %v2611
    %v2614 = vadd.f32 %v2607, %v2612
    %v2615 = vmax.f32 %v2614, 0.0
    %v2617 = vcombine.high %v2615, %v2615
    %vm2619 = vcmask 1043456
    %v2620 = vsel %vm2619, %v2615, -inf
    %v2621 = vrot.slane %v2620, 4
    %v2622 = vmax.f32 %v2620, %v2621
    %v2623 = vrot.slane %v2622, 2
    %v2624 = vmax.f32 %v2622, %v2623
    %v2625 = vrot.slane %v2624, 1
    %v2626 = vmax.f32 %v2624, %v2625
    %v2627 = vsel %vm2619, %v2617, -inf
    %v2628 = vrot.slane %v2627, 4
    %v2629 = vmax.f32 %v2627, %v2628
    %v2630 = vrot.slane %v2629, 2
    %v2631 = vmax.f32 %v2629, %v2630
    %v2632 = vrot.slane %v2631, 1
    %v2633 = vmax.f32 %v2631, %v2632
    %v2636 = vsel %vm787, %v1345, %v1338
    %v2640 = vsel %vm787, %v2183, %v2176
    %v2644 = vsel %vm787, %v2633, %v2626
    %v2648 = vsel %vm787, %v869, %v863
    %v2650 = vld [vmem:[#allocation14] sm:$0xff]
    %v2651 = vld [vmem:[#allocation14 + $0x8] sm:$0xff]
    %v2652 = vld [vmem:[#allocation14 + $0x10] sm:$0xff]
    %v2653 = vld [vmem:[#allocation14 + $0x18] sm:$0xff]
    %v2654 = vld [vmem:[#allocation14 + $0x20] sm:$0xff]
    %v2655 = vld [vmem:[#allocation14 + $0x28] sm:$0xff]
    %v2656 = vld [vmem:[#allocation14 + $0x30] sm:$0xff]
    %v2657 = vld [vmem:[#allocation14 + $0x38] sm:$0xff]
    %v2658 = vld [vmem:[#allocation14 + $0x40] sm:$0xff]
    %v2659 = vld [vmem:[#allocation14 + $0x48] sm:$0xff]
    %v2660 = vld [vmem:[#allocation14 + $0x50] sm:$0xff]
    %v2661 = vld [vmem:[#allocation14 + $0x58] sm:$0xff]
    %v2662 = vld [vmem:[#allocation14 + $0x60] sm:$0xff]
    %v2663 = vld [vmem:[#allocation14 + $0x68] sm:$0xff]
    %v2664 = vld [vmem:[#allocation14 + $0x70] sm:$0xff]
    %v2665 = vld [vmem:[#allocation14 + $0x78] sm:$0xff]
    %v2666 = vld [vmem:[#allocation14 + $0x80] sm:$0xff]
    %v2667 = vld [vmem:[#allocation14 + $0x88] sm:$0xff]
    %v2668 = vld [vmem:[#allocation14 + $0x90] sm:$0xff]
    %v2669 = vld [vmem:[#allocation14 + $0x98] sm:$0xff]
    %v2670 = vld [vmem:[#allocation14 + $0xa0] sm:$0xff]
    %v2671 = vld [vmem:[#allocation14 + $0xa8] sm:$0xff]
    %v2672 = vld [vmem:[#allocation14 + $0xb0] sm:$0xff]
    %v2673 = vld [vmem:[#allocation14 + $0xb8] sm:$0xff]
    %v2674 = vld [vmem:[#allocation14 + $0xc0] sm:$0xff]
    %v2675 = vld [vmem:[#allocation14 + $0xc8] sm:$0xff]
    %v2676 = vld [vmem:[#allocation14 + $0xd0] sm:$0xff]
    %v2677 = vld [vmem:[#allocation14 + $0xd8] sm:$0xff]
    %v2678 = vld [vmem:[#allocation14 + $0xe0] sm:$0xff]
    %v2679 = vld [vmem:[#allocation14 + $0xe8] sm:$0xff]
    %v2680 = vld [vmem:[#allocation14 + $0xf0] sm:$0xff]
    %v2681 = vld [vmem:[#allocation14 + $0xf8] sm:$0xff]
    %v2682 = vld [vmem:[#allocation14 + $0x100] sm:$0xff]
    %v2683 = vld [vmem:[#allocation14 + $0x108] sm:$0xff]
    %v2684 = vld [vmem:[#allocation14 + $0x110] sm:$0xff]
    %v2685 = vld [vmem:[#allocation14 + $0x118] sm:$0xff]
    %v2686 = vld [vmem:[#allocation14 + $0x120] sm:$0xff]
    %v2687 = vld [vmem:[#allocation14 + $0x128] sm:$0xff]
    %v2688 = vld [vmem:[#allocation14 + $0x130] sm:$0xff]
    %v2689 = vld [vmem:[#allocation14 + $0x138] sm:$0xff]
    %v2690 = vld [vmem:[#allocation14 + $0x140] sm:$0xff]
    %v2691 = vld [vmem:[#allocation14 + $0x148] sm:$0xff]
    %v2692 = vld [vmem:[#allocation14 + $0x150] sm:$0xff]
    %v2693 = vld [vmem:[#allocation14 + $0x158] sm:$0xff]
    %v2694 = vld [vmem:[#allocation14 + $0x160] sm:$0xff]
    %v2695 = vld [vmem:[#allocation14 + $0x168] sm:$0xff]
    %v2696 = vld [vmem:[#allocation14 + $0x170] sm:$0xff]
    %v2697 = vld [vmem:[#allocation14 + $0x178] sm:$0xff]
    %v2698 = vld [vmem:[#allocation14 + $0x180] sm:$0xff]
    %v2699 = vld [vmem:[#allocation14 + $0x188] sm:$0xff]
    %v2700 = vld [vmem:[#allocation14 + $0x190] sm:$0xff]
    %v2701 = vld [vmem:[#allocation14 + $0x198] sm:$0xff]
    %v2702 = vld [vmem:[#allocation14 + $0x1a0] sm:$0xff]
    %v2703 = vld [vmem:[#allocation14 + $0x1a8] sm:$0xff]
    %v2704 = vld [vmem:[#allocation14 + $0x1b0] sm:$0xff]
    %v2705 = vld [vmem:[#allocation14 + $0x1b8] sm:$0xff]
    %v2706 = vld [vmem:[#allocation14 + $0x1c0] sm:$0xff]
    %v2707 = vld [vmem:[#allocation14 + $0x1c8] sm:$0xff]
    %v2708 = vld [vmem:[#allocation14 + $0x1d0] sm:$0xff]
    %v2709 = vld [vmem:[#allocation14 + $0x1d8] sm:$0xff]
    %v2710 = vld [vmem:[#allocation14 + $0x1e0] sm:$0xff]
    %v2711 = vld [vmem:[#allocation14 + $0x1e8] sm:$0xff]
    %v2712 = vld [vmem:[#allocation14 + $0x1f0] sm:$0xff]
    %v2713 = vld [vmem:[#allocation14 + $0x1f8] sm:$0xff]
    %v2714 = vld [vmem:[%s13] sm:$0x1]
    %v2716 = vlaneseq
    %v2717 = vshrl.u32 %v2716, 7
    %v2718 = vsub.s32 0, %v2717
    %v2719 = vrot.slane %v2714, %v2718
    %2721 = vmatprep.subr.mxu0 0.0
    %2722 = vmatpush1.msra.mxu0 %v2665
    %2723 = vmatprep.subr.mxu0 0.0
    %2724 = vmatpush1.msra.mxu0 %v2664
    %2725 = vmatprep.subr.mxu0 0.0
    %2726 = vmatpush1.msra.mxu0 %v2663
    %2727 = vmatprep.subr.mxu0 0.0
    %2728 = vmatpush1.msra.mxu0 %v2662
    %2729 = vmatprep.subr.mxu0 0.0
    %2730 = vmatpush1.msra.mxu0 %v2661
    %2731 = vmatprep.subr.mxu0 0.0
    %2732 = vmatpush1.msra.mxu0 %v2660
    %2733 = vmatprep.subr.mxu0 0.0
    %2734 = vmatpush1.msra.mxu0 %v2659
    %2735 = vmatprep.subr.mxu0 0.0
    %2736 = vmatpush1.msra.mxu0 %v2658
    %2737 = vmatprep.subr.mxu0 0.0
    %2738 = vmatpush1.msra.mxu0 %v2657
    %2739 = vmatprep.subr.mxu0 0.0
    %2740 = vmatpush1.msra.mxu0 %v2656
    %2741 = vmatprep.subr.mxu0 0.0
    %2742 = vmatpush1.msra.mxu0 %v2655
    %2743 = vmatprep.subr.mxu0 0.0
    %2744 = vmatpush1.msra.mxu0 %v2654
    %2745 = vmatprep.subr.mxu0 0.0
    %2746 = vmatpush1.msra.mxu0 %v2653
    %2747 = vmatprep.subr.mxu0 0.0
    %2748 = vmatpush1.msra.mxu0 %v2652
    %2749 = vmatprep.subr.mxu0 0.0
    %2750 = vmatpush1.msra.mxu0 %v2651
    %2751 = vmatprep.subr.mxu0 0.0
    %2752 = vmatpush1.msra.mxu0 %v2650
    %2753 = vmatprep.subr.mxu0 0.0
    %2754 = vmatpush2.msra.mxu0 %v2681
    %2755 = vmatprep.subr.mxu0 0.0
    %2756 = vmatpush2.msra.mxu0 %v2680
    %2757 = vmatprep.subr.mxu0 0.0
    %2758 = vmatpush2.msra.mxu0 %v2679
    %2759 = vmatprep.subr.mxu0 0.0
    %2760 = vmatpush2.msra.mxu0 %v2678
    %2761 = vmatprep.subr.mxu0 0.0
    %2762 = vmatpush2.msra.mxu0 %v2677
    %2763 = vmatprep.subr.mxu0 0.0
    %2764 = vmatpush2.msra.mxu0 %v2676
    %2765 = vmatprep.subr.mxu0 0.0
    %2766 = vmatpush2.msra.mxu0 %v2675
    %2767 = vmatprep.subr.mxu0 0.0
    %2768 = vmatpush2.msra.mxu0 %v2674
    %2769 = vmatprep.subr.mxu0 0.0
    %2770 = vmatpush2.msra.mxu0 %v2673
    %2771 = vmatprep.subr.mxu0 0.0
    %2772 = vmatpush2.msra.mxu0 %v2672
    %2773 = vmatprep.subr.mxu0 0.0
    %2774 = vmatpush2.msra.mxu0 %v2671
    %2775 = vmatprep.subr.mxu0 0.0
    %2776 = vmatpush2.msra.mxu0 %v2670
    %2777 = vmatprep.subr.mxu0 0.0
    %2778 = vmatpush2.msra.mxu0 %v2669
    %2779 = vmatprep.subr.mxu0 0.0
    %2780 = vmatpush2.msra.mxu0 %v2668
    %2781 = vmatprep.subr.mxu0 0.0
    %2782 = vmatpush2.msra.mxu0 %v2667
    %2783 = vmatprep.subr.mxu0 0.0
    %2784 = vmatpush2.msra.mxu0 %v2666
    %2785 = vmatprep.mubr.f32.mxu0 %v2640
    %2786 = vmatmul.mubr.f32.gmra.mxu0 %v2636
    %v2787 = vpop.f32.mrf.mxu0
    %v2788 = vadd.f32 %v2719, %v2787
    %v2789 = vpop.f32.mrf.mxu0
    %2790 = vdwg.mxu0
    %2791 = vmatprep.subr.mxu0 0.0
    %2792 = vmatpush1.msra.mxu0 %v2697
    %2793 = vmatprep.subr.mxu0 0.0
    %2794 = vmatpush1.msra.mxu0 %v2696
    %2795 = vmatprep.subr.mxu0 0.0
    %2796 = vmatpush1.msra.mxu0 %v2695
    %2797 = vmatprep.subr.mxu0 0.0
    %2798 = vmatpush1.msra.mxu0 %v2694
    %2799 = vmatprep.subr.mxu0 0.0
    %2800 = vmatpush1.msra.mxu0 %v2693
    %2801 = vmatprep.subr.mxu0 0.0
    %2802 = vmatpush1.msra.mxu0 %v2692
    %2803 = vmatprep.subr.mxu0 0.0
    %2804 = vmatpush1.msra.mxu0 %v2691
    %2805 = vmatprep.subr.mxu0 0.0
    %2806 = vmatpush1.msra.mxu0 %v2690
    %2807 = vmatprep.subr.mxu0 0.0
    %2808 = vmatpush1.msra.mxu0 %v2689
    %2809 = vmatprep.subr.mxu0 0.0
    %2810 = vmatpush1.msra.mxu0 %v2688
    %2811 = vmatprep.subr.mxu0 0.0
    %2812 = vmatpush1.msra.mxu0 %v2687
    %2813 = vmatprep.subr.mxu0 0.0
    %2814 = vmatpush1.msra.mxu0 %v2686
    %2815 = vmatprep.subr.mxu0 0.0
    %2816 = vmatpush1.msra.mxu0 %v2685
    %2817 = vmatprep.subr.mxu0 0.0
    %2818 = vmatpush1.msra.mxu0 %v2684
    %2819 = vmatprep.subr.mxu0 0.0
    %2820 = vmatpush1.msra.mxu0 %v2683
    %2821 = vmatprep.subr.mxu0 0.0
    %2822 = vmatpush1.msra.mxu0 %v2682
    %2823 = vmatprep.subr.mxu0 0.0
    %2824 = vmatpush2.msra.mxu0 %v2713
    %2825 = vmatprep.subr.mxu0 0.0
    %2826 = vmatpush2.msra.mxu0 %v2712
    %2827 = vmatprep.subr.mxu0 0.0
    %2828 = vmatpush2.msra.mxu0 %v2711
    %2829 = vmatprep.subr.mxu0 0.0
    %2830 = vmatpush2.msra.mxu0 %v2710
    %2831 = vmatprep.subr.mxu0 0.0
    %2832 = vmatpush2.msra.mxu0 %v2709
    %2833 = vmatprep.subr.mxu0 0.0
    %2834 = vmatpush2.msra.mxu0 %v2708
    %2835 = vmatprep.subr.mxu0 0.0
    %2836 = vmatpush2.msra.mxu0 %v2707
    %2837 = vmatprep.subr.mxu0 0.0
    %2838 = vmatpush2.msra.mxu0 %v2706
    %2839 = vmatprep.subr.mxu0 0.0
    %2840 = vmatpush2.msra.mxu0 %v2705
    %2841 = vmatprep.subr.mxu0 0.0
    %2842 = vmatpush2.msra.mxu0 %v2704
    %2843 = vmatprep.subr.mxu0 0.0
    %2844 = vmatpush2.msra.mxu0 %v2703
    %2845 = vmatprep.subr.mxu0 0.0
    %2846 = vmatpush2.msra.mxu0 %v2702
    %2847 = vmatprep.subr.mxu0 0.0
    %2848 = vmatpush2.msra.mxu0 %v2701
    %2849 = vmatprep.subr.mxu0 0.0
    %2850 = vmatpush2.msra.mxu0 %v2700
    %2851 = vmatprep.subr.mxu0 0.0
    %2852 = vmatpush2.msra.mxu0 %v2699
    %2853 = vmatprep.subr.mxu0 0.0
    %2854 = vmatpush2.msra.mxu0 %v2698
    %2855 = vmatprep.mubr.f32.mxu0 %v2648
    %2856 = vmatmul.mubr.f32.gmra.mxu0 %v2644
    %v2857 = vpop.f32.mrf.mxu0
    %v2858 = vadd.f32 %v2788, %v2857
    %v2859 = vpop.f32.mrf.mxu0
    %2860 = vdwg.mxu0
    %2861 = vst [vmem:[#allocation15] sm:$0x3] %v2858
    // Predicated region
    $region86: #{tpu_custom_call.1} parent=1 // pred_check
      _
    $region87: #{tpu_custom_call.1} parent=1 // pred_check_branch
      %2863 = sbr.rel (0) target = $region89
    $region88: #{tpu_custom_call.1} parent=1 // pred_region
      %s2865 = ssub.s32 32, 32
      %2866 = vsyncadd [#allocation5], %s2865
      %s2868 = sshll.u32 [#allocation15], 4
      %s2869 = int_to_ptr.vmem [resolvable:$true] %s2868
      %2871 = dma.vmem_to_hbm [thread:$0]  %s2869, 32, %s14, [#allocation5]
    $region89: #{tpu_custom_call.1} parent=1 // pred_fallthru
      _
    // Predicated region
    $region90: #{tpu_custom_call.1} parent=1 // pred_check
      _
    $region91: #{tpu_custom_call.1} parent=1 // pred_check_branch
      %2873 = sbr.rel (0) target = $region93
    $region92: #{tpu_custom_call.1} parent=1 // pred_region
      %2874 = dma.done [#allocation5], 32
    $region93: #{tpu_custom_call.1} parent=1 // pred_fallthru
      _
    %2875 = vsyncpa [#allocation4], 1
    %2876 = vsyncpa [#allocation7], 1
    %2877 = vsyncpa [#allocation10], 1
    %2878 = vsyncpa [#allocation13], 1
    %2879 = vsyncpa [#allocation5], 1

</llo_original>
